<compile_context>
chip_gen: v5e
topology: v5e:2x2
jax: 0.10.0
libtpu: 0.0.40
codegen_flags: <defaults>
</compile_context>

<pallas_src>
import numpy as np
import jax
import jax.numpy as jnp
from jax.experimental import pallas as pl
from jax.experimental.pallas import tpu as pltpu

EPS = 1e-5
NUM_CLASSES = 10
NPAD = 128          # logits padded to one full 128-lane register


# ------------------------------ Pallas kernel -------------------------------

def _cae_kernel(x_ref,
                t1_ref, s1_ref, b1_ref, pc1a_ref, pc1b_ref, pr1a_ref, pr1b_ref,
                t2_ref, s2_ref, b2_ref, pc2a_ref, pc2b_ref, pr2a_ref, pr2b_ref,
                wfc_ref, bfc_ref,
                out_ref):
    f32 = jnp.float32
    x = x_ref[0]                                    # (32, 28) H-padded image

    # ---- layer1: conv(k5,p2) as 5 row-tap Toeplitz matmuls + BN + ReLU -----
    acc1 = jnp.dot(x[0:28, :], t1_ref[0], preferred_element_type=f32)
    for dh in range(1, 5):
        acc1 = acc1 + jnp.dot(x[dh:dh + 28, :], t1_ref[dh],
                              preferred_element_type=f32)
    y1 = jnp.maximum(acc1 * s1_ref[...] + b1_ref[...], 0.0)     # (28, 448)

    # ---- maxpool1 (2x2): pairwise max + exact 0/1 selection matmuls --------
    cm1 = jnp.maximum(jnp.dot(y1, pc1a_ref[...], preferred_element_type=f32),
                      jnp.dot(y1, pc1b_ref[...], preferred_element_type=f32))
    # row selection also inserts conv2's two zero-padding rows (top/bottom)
    p1 = jnp.maximum(jnp.dot(pr1a_ref[...], cm1, preferred_element_type=f32),
                     jnp.dot(pr1b_ref[...], cm1, preferred_element_type=f32))
    # p1: (18, 224) = H-padded pool1 output, columns = w*16 + c_in

    # ---- layer2: conv + BN + ReLU -------------------------------------------
    acc2 = jnp.dot(p1[0:14, :], t2_ref[0], preferred_element_type=f32)
    for dh in range(1, 5):
        acc2 = acc2 + jnp.dot(p1[dh:dh + 14, :], t2_ref[dh],
                              preferred_element_type=f32)
    y2 = jnp.maximum(acc2 * s2_ref[...] + b2_ref[...], 0.0)     # (14, 448)

    # ---- maxpool2 -----------------------------------------------------------
    cm2 = jnp.maximum(jnp.dot(y2, pc2a_ref[...], preferred_element_type=f32),
                      jnp.dot(y2, pc2b_ref[...], preferred_element_type=f32))
    p2 = jnp.maximum(jnp.dot(pr2a_ref[...], cm2, preferred_element_type=f32),
                     jnp.dot(pr2b_ref[...], cm2, preferred_element_type=f32))
    # p2: (7, 224), columns = w*32 + c_out

    # ---- fc (weights pre-permuted to this layout, N padded to 128 lanes) ---
    logits = bfc_ref[...]                                        # (1, 128)
    for h in range(7):
        logits = logits + jnp.dot(p2[h:h + 1, :], wfc_ref[h],
                                  preferred_element_type=f32)
    out_ref[0] = logits


# ----------------------------- parameter setup ------------------------------

def init_params(num_classes=NUM_CLASSES):
    key = jax.random.PRNGKey(42)
    k1, k2, k3, kb1, kb2, kb3 = jax.random.split(key, 6)
    w1 = np.asarray(jax.random.normal(k1, (5, 5, 1, 16), jnp.float32)) * 0.1
    b1 = np.asarray(jax.random.normal(kb1, (16,), jnp.float32)) * 0.1
    w2 = np.asarray(jax.random.normal(k2, (5, 5, 16, 32), jnp.float32)) * 0.05
    b2 = np.asarray(jax.random.normal(kb2, (32,), jnp.float32)) * 0.05
    wfc = np.asarray(jax.random.normal(
        k3, (7 * 7 * 32, num_classes), jnp.float32)) * 0.02
    bfc = np.asarray(jax.random.normal(kb3, (num_classes,), jnp.float32)) * 0.02

    # eval-mode BatchNorm (gamma=1, beta=0, mean=0, var=1) folded w/ conv bias
    scale1 = np.full((16,), 1.0 / np.sqrt(1.0 + EPS), np.float32)
    scale2 = np.full((32,), 1.0 / np.sqrt(1.0 + EPS), np.float32)
    shift1 = (b1 * scale1).astype(np.float32)
    shift2 = (b2 * scale2).astype(np.float32)

    # conv1 Toeplitz slabs (W pad=2 folded in):
    #   out1[h, w*16+c] = sum_dh  x_padH[h+dh, :] @ t1[dh, :, w*16+c]
    t1 = np.zeros((5, 28, 28 * 16), np.float32)
    for dh in range(5):
        for w in range(28):
            for dw in range(5):
                jp = w + dw - 2
                if 0 <= jp < 28:
                    t1[dh, jp, w * 16:(w + 1) * 16] = w1[dh, dw, 0, :]

    # conv2 Toeplitz slabs over the (w*16+ci) column layout of pool1's output
    t2 = np.zeros((5, 14 * 16, 14 * 32), np.float32)
    for dh in range(5):
        for w in range(14):
            for dw in range(5):
                jp = w + dw - 2
                if 0 <= jp < 14:
                    t2[dh, jp * 16:(jp + 1) * 16,
                       w * 32:(w + 1) * 32] = w2[dh, dw, :, :]

    # maxpool selection matrices (exact 0/1 -> exact via matmul)
    pc1a = np.zeros((28 * 16, 14 * 16), np.float32)
    pc1b = np.zeros_like(pc1a)
    for j in range(14):
        for c in range(16):
            pc1a[(2 * j) * 16 + c, j * 16 + c] = 1.0
            pc1b[(2 * j + 1) * 16 + c, j * 16 + c] = 1.0
    pr1a = np.zeros((18, 28), np.float32)     # rows 0,1,16,17 stay zero
    pr1b = np.zeros_like(pr1a)                # -> conv2 H zero-padding
    for i in range(14):
        pr1a[i + 2, 2 * i] = 1.0
        pr1b[i + 2, 2 * i + 1] = 1.0
    pc2a = np.zeros((14 * 32, 7 * 32), np.float32)
    pc2b = np.zeros_like(pc2a)
    for j in range(7):
        for c in range(32):
            pc2a[(2 * j) * 32 + c, j * 32 + c] = 1.0
            pc2b[(2 * j + 1) * 32 + c, j * 32 + c] = 1.0
    pr2a = np.zeros((7, 14), np.float32)
    pr2b = np.zeros_like(pr2a)
    for i in range(7):
        pr2a[i, 2 * i] = 1.0
        pr2b[i, 2 * i + 1] = 1.0

    # FC weights: permute rows from PyTorch NCHW flatten order (c*49+h*7+w)
    # to the kernel's (h, w*32+c) layout and zero-pad classes to 128 lanes.
    wfc3 = np.zeros((7, 7 * 32, NPAD), np.float32)
    for h in range(7):
        for w in range(7):
            for c in range(32):
                wfc3[h, w * 32 + c, :num_classes] = wfc[c * 49 + h * 7 + w, :]
    bfc_p = np.zeros((1, NPAD), np.float32)
    bfc_p[0, :num_classes] = bfc

    s1_t = np.tile(scale1, 28)[None, :]       # (1, 448): per-channel, per w
    sh1_t = np.tile(shift1, 28)[None, :]
    s2_t = np.tile(scale2, 14)[None, :]
    sh2_t = np.tile(shift2, 14)[None, :]

    params = dict(
        t1=t1, s1=s1_t, b1=sh1_t, pc1a=pc1a, pc1b=pc1b, pr1a=pr1a, pr1b=pr1b,
        t2=t2, s2=s2_t, b2=sh2_t, pc2a=pc2a, pc2b=pc2b, pr2a=pr2a, pr2b=pr2b,
        wfc3=wfc3, bfc=bfc_p,
    )
    params = {k: jnp.asarray(v) for k, v in params.items()}
    raw = dict(w1=w1, b1=b1, w2=w2, b2=b2, wfc=wfc, bfc=bfc)
    return params, raw


# ------------------------------ forward pass --------------------------------

_CONST_ORDER = ("t1", "s1", "b1", "pc1a", "pc1b", "pr1a", "pr1b",
                "t2", "s2", "b2", "pc2a", "pc2b", "pr2a", "pr2b",
                "wfc3", "bfc")


def _rep_spec(arr):
    """Full-array block, resident (same block index) across the batch grid."""
    if arr.ndim == 2:
        return pl.BlockSpec(arr.shape, lambda b: (0, 0))
    return pl.BlockSpec(arr.shape, lambda b: (0, 0, 0))


def cae_forward(params, x_nchw):
    """x_nchw: (B, 1, 28, 28) float32, NCHW like the PyTorch module."""
    B = x_nchw.shape[0]
    x = x_nchw.astype(jnp.float32).reshape(B, 28, 28)
    # zero-pad H by 2; W padding is folded into the Toeplitz weight slabs.
    xp = jnp.pad(x, ((0, 0), (2, 2), (0, 0)))                    # (B, 32, 28)

    consts = [params[k] for k in _CONST_ORDER]

    out = pl.pallas_call(
        _cae_kernel,
        out_shape=jax.ShapeDtypeStruct((B, 1, NPAD), jnp.float32),
        grid_spec=pltpu.PrefetchScalarGridSpec(
            num_scalar_prefetch=0,
            grid=(B,),
            in_specs=[pl.BlockSpec((1, 32, 28), lambda b: (b, 0, 0))]
                     + [_rep_spec(a) for a in consts],
            out_specs=pl.BlockSpec((1, 1, NPAD), lambda b: (b, 0, 0)),
        ),
        compiler_params=pltpu.CompilerParams(
            dimension_semantics=("parallel",),      # batch across TCs
            vmem_limit_bytes=48 * 1024 * 1024,      # ~13 MB used; v7x-safe
        ),
    )(xp, *consts)
    return out[:, 0, :NUM_CLASSES]


# ------------------------- pure-JAX reference (check) -----------------------

def reference_forward(raw, x_nchw):
    x = jnp.asarray(x_nchw, jnp.float32)
    w1, b1 = jnp.asarray(raw["w1"]), jnp.asarray(raw["b1"])
    w2, b2 = jnp.asarray(raw["w2"]), jnp.asarray(raw["b2"])
    wfc, bfc = jnp.asarray(raw["wfc"]), jnp.asarray(raw["bfc"])
    dn = ("NCHW", "HWIO", "NCHW")
    inv = 1.0 / jnp.sqrt(1.0 + EPS)

    y = jax.lax.conv_general_dilated(x, w1, (1, 1), ((2, 2), (2, 2)),
                                     dimension_numbers=dn)
    y = jnp.maximum((y + b1[None, :, None, None]) * inv, 0.0)
    y = jax.lax.reduce_window(y, -jnp.inf, jax.lax.max,
                              (1, 1, 2, 2), (1, 1, 2, 2), "VALID")
    y = jax.lax.conv_general_dilated(y, w2, (1, 1), ((2, 2), (2, 2)),
                                     dimension_numbers=dn)
    y = jnp.maximum((y + b2[None, :, None, None]) * inv, 0.0)
    y = jax.lax.reduce_window(y, -jnp.inf, jax.lax.max,
                              (1, 1, 2, 2), (1, 1, 2, 2), "VALID")
    flat = y.reshape(y.shape[0], -1)          # NCHW flatten, matches PyTorch
    return flat @ wfc + bfc[None, :]


if __name__ == "__main__":
    params, raw = init_params(NUM_CLASSES)

    # Input implied by fc(7*7*32): MNIST-like (B, 1, 28, 28); batch = 2.
    x = jax.random.normal(jax.random.PRNGKey(0), (2, 1, 28, 28), jnp.float32)

    fwd = jax.jit(cae_forward)
    out = jax.block_until_ready(fwd(params, x))

    assert out.shape == (2, NUM_CLASSES), out.shape
    assert bool(jnp.all(jnp.isfinite(out)))

    # cross-check against a plain-JAX/XLA reference of the same module
    ref = jax.block_until_ready(reference_forward(raw, x))
    np.testing.assert_allclose(np.asarray(out), np.asarray(ref),
                               rtol=5e-2, atol=2e-2)

    print("KERNEL_OK")
</pallas_src>

<mosaic_0001>
module attributes {stable_mosaic.version = 11 : i64} {
  func.func @_cae_kernel(%arg0: i32, %arg1: memref<1x32x28xf32, #tpu.memory_space<vmem>>, %arg2: memref<5x28x448xf32, #tpu.memory_space<vmem>>, %arg3: memref<1x448xf32, #tpu.memory_space<vmem>>, %arg4: memref<1x448xf32, #tpu.memory_space<vmem>>, %arg5: memref<448x224xf32, #tpu.memory_space<vmem>>, %arg6: memref<448x224xf32, #tpu.memory_space<vmem>>, %arg7: memref<18x28xf32, #tpu.memory_space<vmem>>, %arg8: memref<18x28xf32, #tpu.memory_space<vmem>>, %arg9: memref<5x224x448xf32, #tpu.memory_space<vmem>>, %arg10: memref<1x448xf32, #tpu.memory_space<vmem>>, %arg11: memref<1x448xf32, #tpu.memory_space<vmem>>, %arg12: memref<448x224xf32, #tpu.memory_space<vmem>>, %arg13: memref<448x224xf32, #tpu.memory_space<vmem>>, %arg14: memref<7x14xf32, #tpu.memory_space<vmem>>, %arg15: memref<7x14xf32, #tpu.memory_space<vmem>>, %arg16: memref<7x224x128xf32, #tpu.memory_space<vmem>>, %arg17: memref<1x128xf32, #tpu.memory_space<vmem>>, %arg18: memref<1x1x128xf32, #tpu.memory_space<vmem>>) attributes {dimension_semantics = [#tpu.dimension_semantics<parallel>], iteration_bounds = array<i64: 2>, scalar_prefetch = 0 : i64, scratch_operands = 0 : i64, tpu.core_type = #tpu.core_type<tc>, window_params = [{transform_indices = @transform_0, window_bounds = array<i64: 1, 32, 28>}, {pipeline_mode = #tpu.pipeline_mode<synchronous>, transform_indices = @transform_1, window_bounds = array<i64: 5, 28, 448>}, {pipeline_mode = #tpu.pipeline_mode<synchronous>, transform_indices = @transform_2, window_bounds = array<i64: 1, 448>}, {pipeline_mode = #tpu.pipeline_mode<synchronous>, transform_indices = @transform_3, window_bounds = array<i64: 1, 448>}, {pipeline_mode = #tpu.pipeline_mode<synchronous>, transform_indices = @transform_4, window_bounds = array<i64: 448, 224>}, {pipeline_mode = #tpu.pipeline_mode<synchronous>, transform_indices = @transform_5, window_bounds = array<i64: 448, 224>}, {pipeline_mode = #tpu.pipeline_mode<synchronous>, transform_indices = @transform_6, window_bounds = array<i64: 18, 28>}, {pipeline_mode = #tpu.pipeline_mode<synchronous>, transform_indices = @transform_7, window_bounds = array<i64: 18, 28>}, {pipeline_mode = #tpu.pipeline_mode<synchronous>, transform_indices = @transform_8, window_bounds = array<i64: 5, 224, 448>}, {pipeline_mode = #tpu.pipeline_mode<synchronous>, transform_indices = @transform_9, window_bounds = array<i64: 1, 448>}, {pipeline_mode = #tpu.pipeline_mode<synchronous>, transform_indices = @transform_10, window_bounds = array<i64: 1, 448>}, {pipeline_mode = #tpu.pipeline_mode<synchronous>, transform_indices = @transform_11, window_bounds = array<i64: 448, 224>}, {pipeline_mode = #tpu.pipeline_mode<synchronous>, transform_indices = @transform_12, window_bounds = array<i64: 448, 224>}, {pipeline_mode = #tpu.pipeline_mode<synchronous>, transform_indices = @transform_13, window_bounds = array<i64: 7, 14>}, {pipeline_mode = #tpu.pipeline_mode<synchronous>, transform_indices = @transform_14, window_bounds = array<i64: 7, 14>}, {pipeline_mode = #tpu.pipeline_mode<synchronous>, transform_indices = @transform_15, window_bounds = array<i64: 7, 224, 128>}, {pipeline_mode = #tpu.pipeline_mode<synchronous>, transform_indices = @transform_16, window_bounds = array<i64: 1, 128>}, {transform_indices = @transform_17, window_bounds = array<i64: 1, 1, 128>}]} {
    %c0 = arith.constant 0 : index
    %c0_0 = arith.constant 0 : index
    %c0_1 = arith.constant 0 : index
    %0 = vector.load %arg1[%c0, %c0_0, %c0_1] : memref<1x32x28xf32, #tpu.memory_space<vmem>>, vector<1x32x28xf32>
    %1 = vector.shape_cast %0 : vector<1x32x28xf32> to vector<32x28xf32>
    %2 = vector.extract_strided_slice %1 {offsets = [0, 0], sizes = [28, 28], strides = [1, 1]} : vector<32x28xf32> to vector<28x28xf32>
    %c0_2 = arith.constant 0 : index
    %c0_3 = arith.constant 0 : index
    %c0_4 = arith.constant 0 : index
    %3 = vector.load %arg2[%c0_2, %c0_3, %c0_4] : memref<5x28x448xf32, #tpu.memory_space<vmem>>, vector<1x28x448xf32>
    %4 = vector.shape_cast %3 : vector<1x28x448xf32> to vector<28x448xf32>
    %cst = arith.constant dense<0.000000e+00> : vector<28x448xf32>
    %5 = tpu.matmul %2, %4, %cst {dimension_numbers = #tpu.dot_dimension_numbers<[1], [0], [0], [1], [0, 0, 1, 1], [], []>} : vector<28x28xf32>, vector<28x448xf32>, vector<28x448xf32> -> vector<28x448xf32>
    %6 = vector.extract_strided_slice %1 {offsets = [1, 0], sizes = [28, 28], strides = [1, 1]} : vector<32x28xf32> to vector<28x28xf32>
    %c1 = arith.constant 1 : index
    %c0_5 = arith.constant 0 : index
    %c0_6 = arith.constant 0 : index
    %7 = vector.load %arg2[%c1, %c0_5, %c0_6] : memref<5x28x448xf32, #tpu.memory_space<vmem>>, vector<1x28x448xf32>
    %8 = vector.shape_cast %7 : vector<1x28x448xf32> to vector<28x448xf32>
    %cst_7 = arith.constant dense<0.000000e+00> : vector<28x448xf32>
    %9 = tpu.matmul %6, %8, %cst_7 {dimension_numbers = #tpu.dot_dimension_numbers<[1], [0], [0], [1], [0, 0, 1, 1], [], []>} : vector<28x28xf32>, vector<28x448xf32>, vector<28x448xf32> -> vector<28x448xf32>
    %10 = arith.addf %5, %9 : vector<28x448xf32>
    %11 = vector.extract_strided_slice %1 {offsets = [2, 0], sizes = [28, 28], strides = [1, 1]} : vector<32x28xf32> to vector<28x28xf32>
    %c2 = arith.constant 2 : index
    %c0_8 = arith.constant 0 : index
    %c0_9 = arith.constant 0 : index
    %12 = vector.load %arg2[%c2, %c0_8, %c0_9] : memref<5x28x448xf32, #tpu.memory_space<vmem>>, vector<1x28x448xf32>
    %13 = vector.shape_cast %12 : vector<1x28x448xf32> to vector<28x448xf32>
    %cst_10 = arith.constant dense<0.000000e+00> : vector<28x448xf32>
    %14 = tpu.matmul %11, %13, %cst_10 {dimension_numbers = #tpu.dot_dimension_numbers<[1], [0], [0], [1], [0, 0, 1, 1], [], []>} : vector<28x28xf32>, vector<28x448xf32>, vector<28x448xf32> -> vector<28x448xf32>
    %15 = arith.addf %10, %14 : vector<28x448xf32>
    %16 = vector.extract_strided_slice %1 {offsets = [3, 0], sizes = [28, 28], strides = [1, 1]} : vector<32x28xf32> to vector<28x28xf32>
    %c3 = arith.constant 3 : index
    %c0_11 = arith.constant 0 : index
    %c0_12 = arith.constant 0 : index
    %17 = vector.load %arg2[%c3, %c0_11, %c0_12] : memref<5x28x448xf32, #tpu.memory_space<vmem>>, vector<1x28x448xf32>
    %18 = vector.shape_cast %17 : vector<1x28x448xf32> to vector<28x448xf32>
    %cst_13 = arith.constant dense<0.000000e+00> : vector<28x448xf32>
    %19 = tpu.matmul %16, %18, %cst_13 {dimension_numbers = #tpu.dot_dimension_numbers<[1], [0], [0], [1], [0, 0, 1, 1], [], []>} : vector<28x28xf32>, vector<28x448xf32>, vector<28x448xf32> -> vector<28x448xf32>
    %20 = arith.addf %15, %19 : vector<28x448xf32>
    %21 = vector.extract_strided_slice %1 {offsets = [4, 0], sizes = [28, 28], strides = [1, 1]} : vector<32x28xf32> to vector<28x28xf32>
    %c4 = arith.constant 4 : index
    %c0_14 = arith.constant 0 : index
    %c0_15 = arith.constant 0 : index
    %22 = vector.load %arg2[%c4, %c0_14, %c0_15] : memref<5x28x448xf32, #tpu.memory_space<vmem>>, vector<1x28x448xf32>
    %23 = vector.shape_cast %22 : vector<1x28x448xf32> to vector<28x448xf32>
    %cst_16 = arith.constant dense<0.000000e+00> : vector<28x448xf32>
    %24 = tpu.matmul %21, %23, %cst_16 {dimension_numbers = #tpu.dot_dimension_numbers<[1], [0], [0], [1], [0, 0, 1, 1], [], []>} : vector<28x28xf32>, vector<28x448xf32>, vector<28x448xf32> -> vector<28x448xf32>
    %25 = arith.addf %20, %24 : vector<28x448xf32>
    %c0_17 = arith.constant 0 : index
    %c0_18 = arith.constant 0 : index
    %26 = vector.load %arg3[%c0_17, %c0_18] : memref<1x448xf32, #tpu.memory_space<vmem>>, vector<1x448xf32>
    %27 = vector.broadcast %26 : vector<1x448xf32> to vector<28x448xf32>
    %28 = arith.mulf %25, %27 : vector<28x448xf32>
    %c0_19 = arith.constant 0 : index
    %c0_20 = arith.constant 0 : index
    %29 = vector.load %arg4[%c0_19, %c0_20] : memref<1x448xf32, #tpu.memory_space<vmem>>, vector<1x448xf32>
    %30 = vector.broadcast %29 : vector<1x448xf32> to vector<28x448xf32>
    %31 = arith.addf %28, %30 : vector<28x448xf32>
    %cst_21 = arith.constant 0.000000e+00 : f32
    %32 = vector.broadcast %cst_21 : f32 to vector<28x448xf32>
    %33 = arith.maximumf %31, %32 : vector<28x448xf32>
    %c0_22 = arith.constant 0 : index
    %c0_23 = arith.constant 0 : index
    %34 = vector.load %arg5[%c0_22, %c0_23] : memref<448x224xf32, #tpu.memory_space<vmem>>, vector<448x224xf32>
    %cst_24 = arith.constant dense<0.000000e+00> : vector<28x224xf32>
    %35 = tpu.matmul %33, %34, %cst_24 {dimension_numbers = #tpu.dot_dimension_numbers<[1], [0], [0], [1], [0, 0, 1, 1], [], []>} : vector<28x448xf32>, vector<448x224xf32>, vector<28x224xf32> -> vector<28x224xf32>
    %c0_25 = arith.constant 0 : index
    %c0_26 = arith.constant 0 : index
    %36 = vector.load %arg6[%c0_25, %c0_26] : memref<448x224xf32, #tpu.memory_space<vmem>>, vector<448x224xf32>
    %cst_27 = arith.constant dense<0.000000e+00> : vector<28x224xf32>
    %37 = tpu.matmul %33, %36, %cst_27 {dimension_numbers = #tpu.dot_dimension_numbers<[1], [0], [0], [1], [0, 0, 1, 1], [], []>} : vector<28x448xf32>, vector<448x224xf32>, vector<28x224xf32> -> vector<28x224xf32>
    %38 = arith.maximumf %35, %37 : vector<28x224xf32>
    %c0_28 = arith.constant 0 : index
    %c0_29 = arith.constant 0 : index
    %39 = vector.load %arg7[%c0_28, %c0_29] : memref<18x28xf32, #tpu.memory_space<vmem>>, vector<18x28xf32>
    %cst_30 = arith.constant dense<0.000000e+00> : vector<18x224xf32>
    %40 = tpu.matmul %39, %38, %cst_30 {dimension_numbers = #tpu.dot_dimension_numbers<[1], [0], [0], [1], [0, 0, 1, 1], [], []>} : vector<18x28xf32>, vector<28x224xf32>, vector<18x224xf32> -> vector<18x224xf32>
    %c0_31 = arith.constant 0 : index
    %c0_32 = arith.constant 0 : index
    %41 = vector.load %arg8[%c0_31, %c0_32] : memref<18x28xf32, #tpu.memory_space<vmem>>, vector<18x28xf32>
    %cst_33 = arith.constant dense<0.000000e+00> : vector<18x224xf32>
    %42 = tpu.matmul %41, %38, %cst_33 {dimension_numbers = #tpu.dot_dimension_numbers<[1], [0], [0], [1], [0, 0, 1, 1], [], []>} : vector<18x28xf32>, vector<28x224xf32>, vector<18x224xf32> -> vector<18x224xf32>
    %43 = arith.maximumf %40, %42 : vector<18x224xf32>
    %44 = vector.extract_strided_slice %43 {offsets = [0, 0], sizes = [14, 224], strides = [1, 1]} : vector<18x224xf32> to vector<14x224xf32>
    %c0_34 = arith.constant 0 : index
    %c0_35 = arith.constant 0 : index
    %c0_36 = arith.constant 0 : index
    %45 = vector.load %arg9[%c0_34, %c0_35, %c0_36] : memref<5x224x448xf32, #tpu.memory_space<vmem>>, vector<1x224x448xf32>
    %46 = vector.shape_cast %45 : vector<1x224x448xf32> to vector<224x448xf32>
    %cst_37 = arith.constant dense<0.000000e+00> : vector<14x448xf32>
    %47 = tpu.matmul %44, %46, %cst_37 {dimension_numbers = #tpu.dot_dimension_numbers<[1], [0], [0], [1], [0, 0, 1, 1], [], []>} : vector<14x224xf32>, vector<224x448xf32>, vector<14x448xf32> -> vector<14x448xf32>
    %48 = vector.extract_strided_slice %43 {offsets = [1, 0], sizes = [14, 224], strides = [1, 1]} : vector<18x224xf32> to vector<14x224xf32>
    %c1_38 = arith.constant 1 : index
    %c0_39 = arith.constant 0 : index
    %c0_40 = arith.constant 0 : index
    %49 = vector.load %arg9[%c1_38, %c0_39, %c0_40] : memref<5x224x448xf32, #tpu.memory_space<vmem>>, vector<1x224x448xf32>
    %50 = vector.shape_cast %49 : vector<1x224x448xf32> to vector<224x448xf32>
    %cst_41 = arith.constant dense<0.000000e+00> : vector<14x448xf32>
    %51 = tpu.matmul %48, %50, %cst_41 {dimension_numbers = #tpu.dot_dimension_numbers<[1], [0], [0], [1], [0, 0, 1, 1], [], []>} : vector<14x224xf32>, vector<224x448xf32>, vector<14x448xf32> -> vector<14x448xf32>
    %52 = arith.addf %47, %51 : vector<14x448xf32>
    %53 = vector.extract_strided_slice %43 {offsets = [2, 0], sizes = [14, 224], strides = [1, 1]} : vector<18x224xf32> to vector<14x224xf32>
    %c2_42 = arith.constant 2 : index
    %c0_43 = arith.constant 0 : index
    %c0_44 = arith.constant 0 : index
    %54 = vector.load %arg9[%c2_42, %c0_43, %c0_44] : memref<5x224x448xf32, #tpu.memory_space<vmem>>, vector<1x224x448xf32>
    %55 = vector.shape_cast %54 : vector<1x224x448xf32> to vector<224x448xf32>
    %cst_45 = arith.constant dense<0.000000e+00> : vector<14x448xf32>
    %56 = tpu.matmul %53, %55, %cst_45 {dimension_numbers = #tpu.dot_dimension_numbers<[1], [0], [0], [1], [0, 0, 1, 1], [], []>} : vector<14x224xf32>, vector<224x448xf32>, vector<14x448xf32> -> vector<14x448xf32>
    %57 = arith.addf %52, %56 : vector<14x448xf32>
    %58 = vector.extract_strided_slice %43 {offsets = [3, 0], sizes = [14, 224], strides = [1, 1]} : vector<18x224xf32> to vector<14x224xf32>
    %c3_46 = arith.constant 3 : index
    %c0_47 = arith.constant 0 : index
    %c0_48 = arith.constant 0 : index
    %59 = vector.load %arg9[%c3_46, %c0_47, %c0_48] : memref<5x224x448xf32, #tpu.memory_space<vmem>>, vector<1x224x448xf32>
    %60 = vector.shape_cast %59 : vector<1x224x448xf32> to vector<224x448xf32>
    %cst_49 = arith.constant dense<0.000000e+00> : vector<14x448xf32>
    %61 = tpu.matmul %58, %60, %cst_49 {dimension_numbers = #tpu.dot_dimension_numbers<[1], [0], [0], [1], [0, 0, 1, 1], [], []>} : vector<14x224xf32>, vector<224x448xf32>, vector<14x448xf32> -> vector<14x448xf32>
    %62 = arith.addf %57, %61 : vector<14x448xf32>
    %63 = vector.extract_strided_slice %43 {offsets = [4, 0], sizes = [14, 224], strides = [1, 1]} : vector<18x224xf32> to vector<14x224xf32>
    %c4_50 = arith.constant 4 : index
    %c0_51 = arith.constant 0 : index
    %c0_52 = arith.constant 0 : index
    %64 = vector.load %arg9[%c4_50, %c0_51, %c0_52] : memref<5x224x448xf32, #tpu.memory_space<vmem>>, vector<1x224x448xf32>
    %65 = vector.shape_cast %64 : vector<1x224x448xf32> to vector<224x448xf32>
    %cst_53 = arith.constant dense<0.000000e+00> : vector<14x448xf32>
    %66 = tpu.matmul %63, %65, %cst_53 {dimension_numbers = #tpu.dot_dimension_numbers<[1], [0], [0], [1], [0, 0, 1, 1], [], []>} : vector<14x224xf32>, vector<224x448xf32>, vector<14x448xf32> -> vector<14x448xf32>
    %67 = arith.addf %62, %66 : vector<14x448xf32>
    %c0_54 = arith.constant 0 : index
    %c0_55 = arith.constant 0 : index
    %68 = vector.load %arg10[%c0_54, %c0_55] : memref<1x448xf32, #tpu.memory_space<vmem>>, vector<1x448xf32>
    %69 = vector.broadcast %68 : vector<1x448xf32> to vector<14x448xf32>
    %70 = arith.mulf %67, %69 : vector<14x448xf32>
    %c0_56 = arith.constant 0 : index
    %c0_57 = arith.constant 0 : index
    %71 = vector.load %arg11[%c0_56, %c0_57] : memref<1x448xf32, #tpu.memory_space<vmem>>, vector<1x448xf32>
    %72 = vector.broadcast %71 : vector<1x448xf32> to vector<14x448xf32>
    %73 = arith.addf %70, %72 : vector<14x448xf32>
    %cst_58 = arith.constant 0.000000e+00 : f32
    %74 = vector.broadcast %cst_58 : f32 to vector<14x448xf32>
    %75 = arith.maximumf %73, %74 : vector<14x448xf32>
    %c0_59 = arith.constant 0 : index
    %c0_60 = arith.constant 0 : index
    %76 = vector.load %arg12[%c0_59, %c0_60] : memref<448x224xf32, #tpu.memory_space<vmem>>, vector<448x224xf32>
    %cst_61 = arith.constant dense<0.000000e+00> : vector<14x224xf32>
    %77 = tpu.matmul %75, %76, %cst_61 {dimension_numbers = #tpu.dot_dimension_numbers<[1], [0], [0], [1], [0, 0, 1, 1], [], []>} : vector<14x448xf32>, vector<448x224xf32>, vector<14x224xf32> -> vector<14x224xf32>
    %c0_62 = arith.constant 0 : index
    %c0_63 = arith.constant 0 : index
    %78 = vector.load %arg13[%c0_62, %c0_63] : memref<448x224xf32, #tpu.memory_space<vmem>>, vector<448x224xf32>
    %cst_64 = arith.constant dense<0.000000e+00> : vector<14x224xf32>
    %79 = tpu.matmul %75, %78, %cst_64 {dimension_numbers = #tpu.dot_dimension_numbers<[1], [0], [0], [1], [0, 0, 1, 1], [], []>} : vector<14x448xf32>, vector<448x224xf32>, vector<14x224xf32> -> vector<14x224xf32>
    %80 = arith.maximumf %77, %79 : vector<14x224xf32>
    %c0_65 = arith.constant 0 : index
    %c0_66 = arith.constant 0 : index
    %81 = vector.load %arg14[%c0_65, %c0_66] : memref<7x14xf32, #tpu.memory_space<vmem>>, vector<7x14xf32>
    %cst_67 = arith.constant dense<0.000000e+00> : vector<7x224xf32>
    %82 = tpu.matmul %81, %80, %cst_67 {dimension_numbers = #tpu.dot_dimension_numbers<[1], [0], [0], [1], [0, 0, 1, 1], [], []>} : vector<7x14xf32>, vector<14x224xf32>, vector<7x224xf32> -> vector<7x224xf32>
    %c0_68 = arith.constant 0 : index
    %c0_69 = arith.constant 0 : index
    %83 = vector.load %arg15[%c0_68, %c0_69] : memref<7x14xf32, #tpu.memory_space<vmem>>, vector<7x14xf32>
    %cst_70 = arith.constant dense<0.000000e+00> : vector<7x224xf32>
    %84 = tpu.matmul %83, %80, %cst_70 {dimension_numbers = #tpu.dot_dimension_numbers<[1], [0], [0], [1], [0, 0, 1, 1], [], []>} : vector<7x14xf32>, vector<14x224xf32>, vector<7x224xf32> -> vector<7x224xf32>
    %85 = arith.maximumf %82, %84 : vector<7x224xf32>
    %c0_71 = arith.constant 0 : index
    %c0_72 = arith.constant 0 : index
    %86 = vector.load %arg17[%c0_71, %c0_72] : memref<1x128xf32, #tpu.memory_space<vmem>>, vector<1x128xf32>
    %87 = vector.extract_strided_slice %85 {offsets = [0, 0], sizes = [1, 224], strides = [1, 1]} : vector<7x224xf32> to vector<1x224xf32>
    %c0_73 = arith.constant 0 : index
    %c0_74 = arith.constant 0 : index
    %c0_75 = arith.constant 0 : index
    %88 = vector.load %arg16[%c0_73, %c0_74, %c0_75] : memref<7x224x128xf32, #tpu.memory_space<vmem>>, vector<1x224x128xf32>
    %89 = vector.shape_cast %88 : vector<1x224x128xf32> to vector<224x128xf32>
    %cst_76 = arith.constant dense<0.000000e+00> : vector<1x128xf32>
    %90 = tpu.matmul %87, %89, %cst_76 {dimension_numbers = #tpu.dot_dimension_numbers<[1], [0], [0], [1], [0, 0, 1, 1], [], []>} : vector<1x224xf32>, vector<224x128xf32>, vector<1x128xf32> -> vector<1x128xf32>
    %91 = arith.addf %86, %90 : vector<1x128xf32>
    %92 = vector.extract_strided_slice %85 {offsets = [1, 0], sizes = [1, 224], strides = [1, 1]} : vector<7x224xf32> to vector<1x224xf32>
    %c1_77 = arith.constant 1 : index
    %c0_78 = arith.constant 0 : index
    %c0_79 = arith.constant 0 : index
    %93 = vector.load %arg16[%c1_77, %c0_78, %c0_79] : memref<7x224x128xf32, #tpu.memory_space<vmem>>, vector<1x224x128xf32>
    %94 = vector.shape_cast %93 : vector<1x224x128xf32> to vector<224x128xf32>
    %cst_80 = arith.constant dense<0.000000e+00> : vector<1x128xf32>
    %95 = tpu.matmul %92, %94, %cst_80 {dimension_numbers = #tpu.dot_dimension_numbers<[1], [0], [0], [1], [0, 0, 1, 1], [], []>} : vector<1x224xf32>, vector<224x128xf32>, vector<1x128xf32> -> vector<1x128xf32>
    %96 = arith.addf %91, %95 : vector<1x128xf32>
    %97 = vector.extract_strided_slice %85 {offsets = [2, 0], sizes = [1, 224], strides = [1, 1]} : vector<7x224xf32> to vector<1x224xf32>
    %c2_81 = arith.constant 2 : index
    %c0_82 = arith.constant 0 : index
    %c0_83 = arith.constant 0 : index
    %98 = vector.load %arg16[%c2_81, %c0_82, %c0_83] : memref<7x224x128xf32, #tpu.memory_space<vmem>>, vector<1x224x128xf32>
    %99 = vector.shape_cast %98 : vector<1x224x128xf32> to vector<224x128xf32>
    %cst_84 = arith.constant dense<0.000000e+00> : vector<1x128xf32>
    %100 = tpu.matmul %97, %99, %cst_84 {dimension_numbers = #tpu.dot_dimension_numbers<[1], [0], [0], [1], [0, 0, 1, 1], [], []>} : vector<1x224xf32>, vector<224x128xf32>, vector<1x128xf32> -> vector<1x128xf32>
    %101 = arith.addf %96, %100 : vector<1x128xf32>
    %102 = vector.extract_strided_slice %85 {offsets = [3, 0], sizes = [1, 224], strides = [1, 1]} : vector<7x224xf32> to vector<1x224xf32>
    %c3_85 = arith.constant 3 : index
    %c0_86 = arith.constant 0 : index
    %c0_87 = arith.constant 0 : index
    %103 = vector.load %arg16[%c3_85, %c0_86, %c0_87] : memref<7x224x128xf32, #tpu.memory_space<vmem>>, vector<1x224x128xf32>
    %104 = vector.shape_cast %103 : vector<1x224x128xf32> to vector<224x128xf32>
    %cst_88 = arith.constant dense<0.000000e+00> : vector<1x128xf32>
    %105 = tpu.matmul %102, %104, %cst_88 {dimension_numbers = #tpu.dot_dimension_numbers<[1], [0], [0], [1], [0, 0, 1, 1], [], []>} : vector<1x224xf32>, vector<224x128xf32>, vector<1x128xf32> -> vector<1x128xf32>
    %106 = arith.addf %101, %105 : vector<1x128xf32>
    %107 = vector.extract_strided_slice %85 {offsets = [4, 0], sizes = [1, 224], strides = [1, 1]} : vector<7x224xf32> to vector<1x224xf32>
    %c4_89 = arith.constant 4 : index
    %c0_90 = arith.constant 0 : index
    %c0_91 = arith.constant 0 : index
    %108 = vector.load %arg16[%c4_89, %c0_90, %c0_91] : memref<7x224x128xf32, #tpu.memory_space<vmem>>, vector<1x224x128xf32>
    %109 = vector.shape_cast %108 : vector<1x224x128xf32> to vector<224x128xf32>
    %cst_92 = arith.constant dense<0.000000e+00> : vector<1x128xf32>
    %110 = tpu.matmul %107, %109, %cst_92 {dimension_numbers = #tpu.dot_dimension_numbers<[1], [0], [0], [1], [0, 0, 1, 1], [], []>} : vector<1x224xf32>, vector<224x128xf32>, vector<1x128xf32> -> vector<1x128xf32>
    %111 = arith.addf %106, %110 : vector<1x128xf32>
    %112 = vector.extract_strided_slice %85 {offsets = [5, 0], sizes = [1, 224], strides = [1, 1]} : vector<7x224xf32> to vector<1x224xf32>
    %c5 = arith.constant 5 : index
    %c0_93 = arith.constant 0 : index
    %c0_94 = arith.constant 0 : index
    %113 = vector.load %arg16[%c5, %c0_93, %c0_94] : memref<7x224x128xf32, #tpu.memory_space<vmem>>, vector<1x224x128xf32>
    %114 = vector.shape_cast %113 : vector<1x224x128xf32> to vector<224x128xf32>
    %cst_95 = arith.constant dense<0.000000e+00> : vector<1x128xf32>
    %115 = tpu.matmul %112, %114, %cst_95 {dimension_numbers = #tpu.dot_dimension_numbers<[1], [0], [0], [1], [0, 0, 1, 1], [], []>} : vector<1x224xf32>, vector<224x128xf32>, vector<1x128xf32> -> vector<1x128xf32>
    %116 = arith.addf %111, %115 : vector<1x128xf32>
    %117 = vector.extract_strided_slice %85 {offsets = [6, 0], sizes = [1, 224], strides = [1, 1]} : vector<7x224xf32> to vector<1x224xf32>
    %c6 = arith.constant 6 : index
    %c0_96 = arith.constant 0 : index
    %c0_97 = arith.constant 0 : index
    %118 = vector.load %arg16[%c6, %c0_96, %c0_97] : memref<7x224x128xf32, #tpu.memory_space<vmem>>, vector<1x224x128xf32>
    %119 = vector.shape_cast %118 : vector<1x224x128xf32> to vector<224x128xf32>
    %cst_98 = arith.constant dense<0.000000e+00> : vector<1x128xf32>
    %120 = tpu.matmul %117, %119, %cst_98 {dimension_numbers = #tpu.dot_dimension_numbers<[1], [0], [0], [1], [0, 0, 1, 1], [], []>} : vector<1x224xf32>, vector<224x128xf32>, vector<1x128xf32> -> vector<1x128xf32>
    %121 = arith.addf %116, %120 : vector<1x128xf32>
    %c0_99 = arith.constant 0 : index
    %c0_100 = arith.constant 0 : index
    %c0_101 = arith.constant 0 : index
    %122 = vector.load %arg18[%c0_99, %c0_100, %c0_101] : memref<1x1x128xf32, #tpu.memory_space<vmem>>, vector<1x1x128xf32>
    %123 = vector.shape_cast %122 : vector<1x1x128xf32> to vector<1x128xf32>
    %124 = vector.shape_cast %121 : vector<1x128xf32> to vector<1x1x128xf32>
    tpu.vector_store %arg18[%c0_99, %c0_100, %c0_101], %124 {strides = array<i32>} : memref<1x1x128xf32, #tpu.memory_space<vmem>>, vector<1x1x128xf32>,
    return
  }
  func.func @transform_0(%arg0: i32) -> (i32, i32, i32) {
    %c0_i32 = arith.constant 0 : i32
    %c0_i32_0 = arith.constant 0 : i32
    %c0_i32_1 = arith.constant 0 : i32
    return %arg0, %c0_i32, %c0_i32_0 : i32, i32, i32
  }
  func.func @transform_1(%arg0: i32) -> (i32, i32, i32) {
    %c0_i32 = arith.constant 0 : i32
    %c0_i32_0 = arith.constant 0 : i32
    %c0_i32_1 = arith.constant 0 : i32
    %c0_i32_2 = arith.constant 0 : i32
    return %c0_i32, %c0_i32_0, %c0_i32_1 : i32, i32, i32
  }
  func.func @transform_2(%arg0: i32) -> (i32, i32) {
    %c0_i32 = arith.constant 0 : i32
    %c0_i32_0 = arith.constant 0 : i32
    %c0_i32_1 = arith.constant 0 : i32
    return %c0_i32, %c0_i32_0 : i32, i32
  }
  func.func @transform_3(%arg0: i32) -> (i32, i32) {
    %c0_i32 = arith.constant 0 : i32
    %c0_i32_0 = arith.constant 0 : i32
    %c0_i32_1 = arith.constant 0 : i32
    return %c0_i32, %c0_i32_0 : i32, i32
  }
  func.func @transform_4(%arg0: i32) -> (i32, i32) {
    %c0_i32 = arith.constant 0 : i32
    %c0_i32_0 = arith.constant 0 : i32
    %c0_i32_1 = arith.constant 0 : i32
    return %c0_i32, %c0_i32_0 : i32, i32
  }
  func.func @transform_5(%arg0: i32) -> (i32, i32) {
    %c0_i32 = arith.constant 0 : i32
    %c0_i32_0 = arith.constant 0 : i32
    %c0_i32_1 = arith.constant 0 : i32
    return %c0_i32, %c0_i32_0 : i32, i32
  }
  func.func @transform_6(%arg0: i32) -> (i32, i32) {
    %c0_i32 = arith.constant 0 : i32
    %c0_i32_0 = arith.constant 0 : i32
    %c0_i32_1 = arith.constant 0 : i32
    return %c0_i32, %c0_i32_0 : i32, i32
  }
  func.func @transform_7(%arg0: i32) -> (i32, i32) {
    %c0_i32 = arith.constant 0 : i32
    %c0_i32_0 = arith.constant 0 : i32
    %c0_i32_1 = arith.constant 0 : i32
    return %c0_i32, %c0_i32_0 : i32, i32
  }
  func.func @transform_8(%arg0: i32) -> (i32, i32, i32) {
    %c0_i32 = arith.constant 0 : i32
    %c0_i32_0 = arith.constant 0 : i32
    %c0_i32_1 = arith.constant 0 : i32
    %c0_i32_2 = arith.constant 0 : i32
    return %c0_i32, %c0_i32_0, %c0_i32_1 : i32, i32, i32
  }
  func.func @transform_9(%arg0: i32) -> (i32, i32) {
    %c0_i32 = arith.constant 0 : i32
    %c0_i32_0 = arith.constant 0 : i32
    %c0_i32_1 = arith.constant 0 : i32
    return %c0_i32, %c0_i32_0 : i32, i32
  }
  func.func @transform_10(%arg0: i32) -> (i32, i32) {
    %c0_i32 = arith.constant 0 : i32
    %c0_i32_0 = arith.constant 0 : i32
    %c0_i32_1 = arith.constant 0 : i32
    return %c0_i32, %c0_i32_0 : i32, i32
  }
  func.func @transform_11(%arg0: i32) -> (i32, i32) {
    %c0_i32 = arith.constant 0 : i32
    %c0_i32_0 = arith.constant 0 : i32
    %c0_i32_1 = arith.constant 0 : i32
    return %c0_i32, %c0_i32_0 : i32, i32
  }
  func.func @transform_12(%arg0: i32) -> (i32, i32) {
    %c0_i32 = arith.constant 0 : i32
    %c0_i32_0 = arith.constant 0 : i32
    %c0_i32_1 = arith.constant 0 : i32
    return %c0_i32, %c0_i32_0 : i32, i32
  }
  func.func @transform_13(%arg0: i32) -> (i32, i32) {
    %c0_i32 = arith.constant 0 : i32
    %c0_i32_0 = arith.constant 0 : i32
    %c0_i32_1 = arith.constant 0 : i32
    return %c0_i32, %c0_i32_0 : i32, i32
  }
  func.func @transform_14(%arg0: i32) -> (i32, i32) {
    %c0_i32 = arith.constant 0 : i32
    %c0_i32_0 = arith.constant 0 : i32
    %c0_i32_1 = arith.constant 0 : i32
    return %c0_i32, %c0_i32_0 : i32, i32
  }
  func.func @transform_15(%arg0: i32) -> (i32, i32, i32) {
    %c0_i32 = arith.constant 0 : i32
    %c0_i32_0 = arith.constant 0 : i32
    %c0_i32_1 = arith.constant 0 : i32
    %c0_i32_2 = arith.constant 0 : i32
    return %c0_i32, %c0_i32_0, %c0_i32_1 : i32, i32, i32
  }
  func.func @transform_16(%arg0: i32) -> (i32, i32) {
    %c0_i32 = arith.constant 0 : i32
    %c0_i32_0 = arith.constant 0 : i32
    %c0_i32_1 = arith.constant 0 : i32
    return %c0_i32, %c0_i32_0 : i32, i32
  }
  func.func @transform_17(%arg0: i32) -> (i32, i32, i32) {
    %c0_i32 = arith.constant 0 : i32
    %c0_i32_0 = arith.constant 0 : i32
    %c0_i32_1 = arith.constant 0 : i32
    return %arg0, %c0_i32, %c0_i32_0 : i32, i32, i32
  }
}

</mosaic_0001>

<llo_original>
// kernel: cae_forward.1
$region0: #{cae_forward.1}
  #allocation0 [shape = 'u32[]', space=smem, size = 0x4, offset = 0x4, fixed_abs, tag = 'smem constant byte address 0x4 - core index']
  #allocation1 [shape = 'u32[72,128]{1,0:T(1,128)}', space=vmem, size = 0x9000, scoped, tag = 'internal scratch']
  %s0 = inlined_call_operand.vmem [shape: f32[2,32,28], index: 0, kind: input, shape index: {}]
  %s1 = inlined_call_operand.hbm [shape: f32[5,28,448], index: 1, kind: input, shape index: {}]
  %s2 = inlined_call_operand.hbm [shape: f32[1,448], index: 2, kind: input, shape index: {}]
  %s3 = inlined_call_operand.hbm [shape: f32[1,448], index: 3, kind: input, shape index: {}]
  %s4 = inlined_call_operand.hbm [shape: f32[448,224], index: 4, kind: input, shape index: {}]
  %s5 = inlined_call_operand.hbm [shape: f32[448,224], index: 5, kind: input, shape index: {}]
  %s6 = inlined_call_operand.hbm [shape: f32[18,28], index: 6, kind: input, shape index: {}]
  %s7 = inlined_call_operand.hbm [shape: f32[18,28], index: 7, kind: input, shape index: {}]
  %s8 = inlined_call_operand.hbm [shape: f32[5,224,448], index: 8, kind: input, shape index: {}]
  %s9 = inlined_call_operand.hbm [shape: f32[1,448], index: 9, kind: input, shape index: {}]
  %s10 = inlined_call_operand.hbm [shape: f32[1,448], index: 10, kind: input, shape index: {}]
  %s11 = inlined_call_operand.hbm [shape: f32[448,224], index: 11, kind: input, shape index: {}]
  %s12 = inlined_call_operand.hbm [shape: f32[448,224], index: 12, kind: input, shape index: {}]
  %s13 = inlined_call_operand.hbm [shape: f32[7,14], index: 13, kind: input, shape index: {}]
  %s14 = inlined_call_operand.hbm [shape: f32[7,14], index: 14, kind: input, shape index: {}]
  %s15 = inlined_call_operand.hbm [shape: f32[7,224,128], index: 15, kind: input, shape index: {}]
  %s16 = inlined_call_operand.hbm [shape: f32[1,128], index: 16, kind: input, shape index: {}]
  %s17 = inlined_call_operand.hbm [shape: f32[2,1,128], index: 17, kind: output, shape index: {}]
  %s18 = sld [smem:[#allocation0]]
  $region165: #{cae_forward.1} parent=0
    _
  %s20 = ssub.s32 1, %s18
  %s21 = scalar_select 0, %s20, %s18
  $region1: #{cae_forward.1} parent=0
    #allocation2 [shape = 'u8[327680]{0}', space=vmem, size = 0x50000, scoped, tag = 'input window, operand 1, single buffered']
    #allocation3 [shape = 's32[2]{0}', space=sflag, size = 0x8, scoped, tag = 'scoped memory for cae_forward.1']
    #allocation4 [shape = 's32[2]{0}', space=sflag, size = 0x8, scoped, tag = 'scoped memory for cae_forward.1']
    #allocation5 [shape = 'u8[2048]{0}', space=vmem, size = 0x800, scoped, tag = 'input window, operand 2, single buffered']
    #allocation6 [shape = 's32[1]{0}', space=sflag, size = 0x4, scoped, tag = 'scoped memory for cae_forward.1']
    #allocation7 [shape = 'u8[2048]{0}', space=vmem, size = 0x800, scoped, tag = 'input window, operand 3, single buffered']
    #allocation8 [shape = 'u8[458752]{0}', space=vmem, size = 0x70000, scoped, tag = 'input window, operand 4, single buffered']
    #allocation9 [shape = 's32[1]{0}', space=sflag, size = 0x4, scoped, tag = 'scoped memory for cae_forward.1']
    #allocation10 [shape = 'u8[458752]{0}', space=vmem, size = 0x70000, scoped, tag = 'input window, operand 5, single buffered']
    #allocation11 [shape = 'u8[12288]{0}', space=vmem, size = 0x3000, scoped, tag = 'input window, operand 6, single buffered']
    #allocation12 [shape = 's32[1]{0}', space=sflag, size = 0x4, scoped, tag = 'scoped memory for cae_forward.1']
    #allocation13 [shape = 'u8[12288]{0}', space=vmem, size = 0x3000, scoped, tag = 'input window, operand 7, single buffered']
    #allocation14 [shape = 'u8[2293760]{0}', space=vmem, size = 0x230000, scoped, tag = 'input window, operand 8, single buffered']
    #allocation15 [shape = 's32[1]{0}', space=sflag, size = 0x4, scoped, tag = 'scoped memory for cae_forward.1']
    #allocation16 [shape = 'u8[2048]{0}', space=vmem, size = 0x800, scoped, tag = 'input window, operand 9, single buffered']
    #allocation17 [shape = 'u8[2048]{0}', space=vmem, size = 0x800, scoped, tag = 'input window, operand 10, single buffered']
    #allocation18 [shape = 's32[1]{0}', space=sflag, size = 0x4, scoped, tag = 'scoped memory for cae_forward.1']
    #allocation19 [shape = 'u8[458752]{0}', space=vmem, size = 0x70000, scoped, tag = 'input window, operand 11, single buffered']
    #allocation20 [shape = 'u8[458752]{0}', space=vmem, size = 0x70000, scoped, tag = 'input window, operand 12, single buffered']
    #allocation21 [shape = 's32[1]{0}', space=sflag, size = 0x4, scoped, tag = 'scoped memory for cae_forward.1']
    #allocation22 [shape = 'u8[4096]{0}', space=vmem, size = 0x1000, scoped, tag = 'input window, operand 13, single buffered']
    #allocation23 [shape = 'u8[4096]{0}', space=vmem, size = 0x1000, scoped, tag = 'input window, operand 14, single buffered']
    #allocation24 [shape = 's32[1]{0}', space=sflag, size = 0x4, scoped, tag = 'scoped memory for cae_forward.1']
    #allocation25 [shape = 'u8[802816]{0}', space=vmem, size = 0xc4000, scoped, tag = 'input window, operand 15, single buffered']
    #allocation26 [shape = 'u8[512]{0}', space=vmem, size = 0x400, scoped, tag = 'input window, operand 16, single buffered']
    #allocation27 [shape = 's32[1]{0}', space=sflag, size = 0x4, scoped, tag = 'scoped memory for cae_forward.1']
    #allocation28 [shape = 'u8[1024]{0}', space=vmem, size = 0x400, scoped, tag = 'output window, operand 0']
    %22 = vsyncpa [#allocation3], 0
    %23 = vsyncpa [#allocation6], 0
    %24 = vsyncpa [#allocation9], 0
    %25 = vsyncpa [#allocation12], 0
    %26 = vsyncpa [#allocation15], 0
    %27 = vsyncpa [#allocation18], 0
    %28 = vsyncpa [#allocation21], 0
    %29 = vsyncpa [#allocation24], 0
    %30 = vsyncpa [#allocation27], 0
    %31 = vsyncpa [#allocation4], 0
    %s32 = scalar_lea.sflag [#allocation4], 1
    %33 = vsyncpa %s32, 0
    loop: start=0, step=1, limit=4
    $region2: #{cae_forward.1} parent=1 // loop_pre_header
      _
    $region3: #{cae_forward.1} parent=1 // loop_header
      %s35 = sphi 0, %s39
      %p36 = scmp.ge.s32.totalorder %s35, 4
      %s45 = sphi 0, %s47
      %s48 = sphi 0, %s45
      %s49 = sphi 0, %s48
      %s65 = sphi 0, %s49
      %s69 = sphi 0, %s69
      %s71 = sphi 0, %s69
      %s72 = sphi 0, %s71
      %s86 = sphi 0, %s72
      %s90 = sphi 0, %s90
      %s92 = sphi 0, %s90
      %s93 = sphi 0, %s92
      %s107 = sphi 0, %s93
      %s111 = sphi 0, %s111
      %s113 = sphi 0, %s111
      %s114 = sphi 0, %s113
      %s128 = sphi 0, %s114
      %s132 = sphi 0, %s132
      %s134 = sphi 0, %s132
      %s135 = sphi 0, %s134
      %s149 = sphi 0, %s135
      %s153 = sphi 0, %s153
      %s155 = sphi 0, %s153
      %s156 = sphi 0, %s155
      %s170 = sphi 0, %s156
      %s174 = sphi 0, %s174
      %s176 = sphi 0, %s174
      %s177 = sphi 0, %s176
      %s191 = sphi 0, %s177
      %s195 = sphi 0, %s195
      %s197 = sphi 0, %s195
      %s198 = sphi 0, %s197
      %s212 = sphi 0, %s198
      %s216 = sphi 0, %s216
      %s218 = sphi 0, %s216
      %s219 = sphi 0, %s218
      %s233 = sphi 0, %s219
      %s237 = sphi 0, %s237
      %s239 = sphi 0, %s237
      %s240 = sphi 0, %s239
      %s254 = sphi 0, %s240
      %s258 = sphi 0, %s258
      %s260 = sphi 0, %s258
      %s261 = sphi 0, %s260
      %s275 = sphi 0, %s261
      %s279 = sphi 0, %s279
      %s281 = sphi 0, %s279
      %s282 = sphi 0, %s281
      %s296 = sphi 0, %s282
      %s300 = sphi 0, %s300
      %s302 = sphi 0, %s300
      %s303 = sphi 0, %s302
      %s317 = sphi 0, %s303
      %s321 = sphi 0, %s321
      %s323 = sphi 0, %s321
      %s324 = sphi 0, %s323
      %s338 = sphi 0, %s324
      %s342 = sphi 0, %s342
      %s344 = sphi 0, %s342
      %s345 = sphi 0, %s344
      %s359 = sphi 0, %s345
      %s363 = sphi 0, %s363
      %s365 = sphi 0, %s363
      %s366 = sphi 0, %s365
      %s380 = sphi 0, %s366
      %s384 = sphi 0, %s384
      %s386 = sphi 0, %s384
      %s387 = sphi 0, %s386
      %s401 = sphi 0, %s387
      %s407 = sphi 0, %s409
      %s410 = sphi 0, %s407
      %s411 = sphi 0, %s410
      %s427 = sphi 0, %s411
    $region4: #{cae_forward.1} parent=1 // loop_header_branch
      %38 = sbr.rel (%p36) target = $region8
    $region5: #{cae_forward.1} parent=1 // loop_body
      %s40 = ssub.s32 %s35, 1
      %s41 = ssub.s32 %s35, 2
      %s42 = sadd.s32 %s35, 1
      %s43 = ssub.s32 %s35, %s42
      %p44 = scmp.eq.s32.totalorder %s43, 0
      %s46 = sadd.s32 %s45, 1
      %s47 = scalar_select %p44, %s45, %s46
      %p50 = pneg %p44
      %p51 = scmp.eq.s32.totalorder %s35, 1
      %p52 = por %p50, %p51
      %p53 = scmp.ne.s32.totalorder %s45, %s48
      %p54 = scmp.eq.s32.totalorder %s35, 0
      %p55 = por %p53, %p54
      %p56 = scmp.ne.s32.totalorder %s45, %s48
      %p57 = scmp.eq.s32.totalorder %s40, 1
      %p58 = por %p56, %p57
      %p59 = scmp.ne.s32.totalorder %s48, %s49
      %p60 = scmp.eq.s32.totalorder %s40, 0
      %p61 = por %p59, %p60
      %p62 = scmp.ne.s32.totalorder %s48, %s49
      %p63 = scmp.eq.s32.totalorder %s41, 1
      %p64 = por %p62, %p63
      %p66 = scmp.ne.s32.totalorder %s49, %s65
      %p67 = scmp.eq.s32.totalorder %s41, 0
      %p68 = por %p66, %p67
      %s70 = sadd.s32 %s69, 1
      %p73 = scmp.eq.s32.totalorder %s35, 1
      %p74 = scmp.ne.s32.totalorder %s69, %s71
      %p75 = scmp.eq.s32.totalorder %s35, 0
      %p76 = por %p74, %p75
      %p77 = scmp.ne.s32.totalorder %s69, %s71
      %p78 = scmp.eq.s32.totalorder %s40, 1
      %p79 = por %p77, %p78
      %p80 = scmp.ne.s32.totalorder %s71, %s72
      %p81 = scmp.eq.s32.totalorder %s40, 0
      %p82 = por %p80, %p81
      %p83 = scmp.ne.s32.totalorder %s71, %s72
      %p84 = scmp.eq.s32.totalorder %s41, 1
      %p85 = por %p83, %p84
      %p87 = scmp.ne.s32.totalorder %s72, %s86
      %p88 = scmp.eq.s32.totalorder %s41, 0
      %p89 = por %p87, %p88
      %s91 = sadd.s32 %s90, 1
      %p94 = scmp.eq.s32.totalorder %s35, 1
      %p95 = scmp.ne.s32.totalorder %s90, %s92
      %p96 = scmp.eq.s32.totalorder %s35, 0
      %p97 = por %p95, %p96
      %p98 = scmp.ne.s32.totalorder %s90, %s92
      %p99 = scmp.eq.s32.totalorder %s40, 1
      %p100 = por %p98, %p99
      %p101 = scmp.ne.s32.totalorder %s92, %s93
      %p102 = scmp.eq.s32.totalorder %s40, 0
      %p103 = por %p101, %p102
      %p104 = scmp.ne.s32.totalorder %s92, %s93
      %p105 = scmp.eq.s32.totalorder %s41, 1
      %p106 = por %p104, %p105
      %p108 = scmp.ne.s32.totalorder %s93, %s107
      %p109 = scmp.eq.s32.totalorder %s41, 0
      %p110 = por %p108, %p109
      %s112 = sadd.s32 %s111, 1
      %p115 = scmp.eq.s32.totalorder %s35, 1
      %p116 = scmp.ne.s32.totalorder %s111, %s113
      %p117 = scmp.eq.s32.totalorder %s35, 0
      %p118 = por %p116, %p117
      %p119 = scmp.ne.s32.totalorder %s111, %s113
      %p120 = scmp.eq.s32.totalorder %s40, 1
      %p121 = por %p119, %p120
      %p122 = scmp.ne.s32.totalorder %s113, %s114
      %p123 = scmp.eq.s32.totalorder %s40, 0
      %p124 = por %p122, %p123
      %p125 = scmp.ne.s32.totalorder %s113, %s114
      %p126 = scmp.eq.s32.totalorder %s41, 1
      %p127 = por %p125, %p126
      %p129 = scmp.ne.s32.totalorder %s114, %s128
      %p130 = scmp.eq.s32.totalorder %s41, 0
      %p131 = por %p129, %p130
      %s133 = sadd.s32 %s132, 1
      %p136 = scmp.eq.s32.totalorder %s35, 1
      %p137 = scmp.ne.s32.totalorder %s132, %s134
      %p138 = scmp.eq.s32.totalorder %s35, 0
      %p139 = por %p137, %p138
      %p140 = scmp.ne.s32.totalorder %s132, %s134
      %p141 = scmp.eq.s32.totalorder %s40, 1
      %p142 = por %p140, %p141
      %p143 = scmp.ne.s32.totalorder %s134, %s135
      %p144 = scmp.eq.s32.totalorder %s40, 0
      %p145 = por %p143, %p144
      %p146 = scmp.ne.s32.totalorder %s134, %s135
      %p147 = scmp.eq.s32.totalorder %s41, 1
      %p148 = por %p146, %p147
      %p150 = scmp.ne.s32.totalorder %s135, %s149
      %p151 = scmp.eq.s32.totalorder %s41, 0
      %p152 = por %p150, %p151
      %s154 = sadd.s32 %s153, 1
      %p157 = scmp.eq.s32.totalorder %s35, 1
      %p158 = scmp.ne.s32.totalorder %s153, %s155
      %p159 = scmp.eq.s32.totalorder %s35, 0
      %p160 = por %p158, %p159
      %p161 = scmp.ne.s32.totalorder %s153, %s155
      %p162 = scmp.eq.s32.totalorder %s40, 1
      %p163 = por %p161, %p162
      %p164 = scmp.ne.s32.totalorder %s155, %s156
      %p165 = scmp.eq.s32.totalorder %s40, 0
      %p166 = por %p164, %p165
      %p167 = scmp.ne.s32.totalorder %s155, %s156
      %p168 = scmp.eq.s32.totalorder %s41, 1
      %p169 = por %p167, %p168
      %p171 = scmp.ne.s32.totalorder %s156, %s170
      %p172 = scmp.eq.s32.totalorder %s41, 0
      %p173 = por %p171, %p172
      %s175 = sadd.s32 %s174, 1
      %p178 = scmp.eq.s32.totalorder %s35, 1
      %p179 = scmp.ne.s32.totalorder %s174, %s176
      %p180 = scmp.eq.s32.totalorder %s35, 0
      %p181 = por %p179, %p180
      %p182 = scmp.ne.s32.totalorder %s174, %s176
      %p183 = scmp.eq.s32.totalorder %s40, 1
      %p184 = por %p182, %p183
      %p185 = scmp.ne.s32.totalorder %s176, %s177
      %p186 = scmp.eq.s32.totalorder %s40, 0
      %p187 = por %p185, %p186
      %p188 = scmp.ne.s32.totalorder %s176, %s177
      %p189 = scmp.eq.s32.totalorder %s41, 1
      %p190 = por %p188, %p189
      %p192 = scmp.ne.s32.totalorder %s177, %s191
      %p193 = scmp.eq.s32.totalorder %s41, 0
      %p194 = por %p192, %p193
      %s196 = sadd.s32 %s195, 1
      %p199 = scmp.eq.s32.totalorder %s35, 1
      %p200 = scmp.ne.s32.totalorder %s195, %s197
      %p201 = scmp.eq.s32.totalorder %s35, 0
      %p202 = por %p200, %p201
      %p203 = scmp.ne.s32.totalorder %s195, %s197
      %p204 = scmp.eq.s32.totalorder %s40, 1
      %p205 = por %p203, %p204
      %p206 = scmp.ne.s32.totalorder %s197, %s198
      %p207 = scmp.eq.s32.totalorder %s40, 0
      %p208 = por %p206, %p207
      %p209 = scmp.ne.s32.totalorder %s197, %s198
      %p210 = scmp.eq.s32.totalorder %s41, 1
      %p211 = por %p209, %p210
      %p213 = scmp.ne.s32.totalorder %s198, %s212
      %p214 = scmp.eq.s32.totalorder %s41, 0
      %p215 = por %p213, %p214
      %s217 = sadd.s32 %s216, 1
      %p220 = scmp.eq.s32.totalorder %s35, 1
      %p221 = scmp.ne.s32.totalorder %s216, %s218
      %p222 = scmp.eq.s32.totalorder %s35, 0
      %p223 = por %p221, %p222
      %p224 = scmp.ne.s32.totalorder %s216, %s218
      %p225 = scmp.eq.s32.totalorder %s40, 1
      %p226 = por %p224, %p225
      %p227 = scmp.ne.s32.totalorder %s218, %s219
      %p228 = scmp.eq.s32.totalorder %s40, 0
      %p229 = por %p227, %p228
      %p230 = scmp.ne.s32.totalorder %s218, %s219
      %p231 = scmp.eq.s32.totalorder %s41, 1
      %p232 = por %p230, %p231
      %p234 = scmp.ne.s32.totalorder %s219, %s233
      %p235 = scmp.eq.s32.totalorder %s41, 0
      %p236 = por %p234, %p235
      %s238 = sadd.s32 %s237, 1
      %p241 = scmp.eq.s32.totalorder %s35, 1
      %p242 = scmp.ne.s32.totalorder %s237, %s239
      %p243 = scmp.eq.s32.totalorder %s35, 0
      %p244 = por %p242, %p243
      %p245 = scmp.ne.s32.totalorder %s237, %s239
      %p246 = scmp.eq.s32.totalorder %s40, 1
      %p247 = por %p245, %p246
      %p248 = scmp.ne.s32.totalorder %s239, %s240
      %p249 = scmp.eq.s32.totalorder %s40, 0
      %p250 = por %p248, %p249
      %p251 = scmp.ne.s32.totalorder %s239, %s240
      %p252 = scmp.eq.s32.totalorder %s41, 1
      %p253 = por %p251, %p252
      %p255 = scmp.ne.s32.totalorder %s240, %s254
      %p256 = scmp.eq.s32.totalorder %s41, 0
      %p257 = por %p255, %p256
      %s259 = sadd.s32 %s258, 1
      %p262 = scmp.eq.s32.totalorder %s35, 1
      %p263 = scmp.ne.s32.totalorder %s258, %s260
      %p264 = scmp.eq.s32.totalorder %s35, 0
      %p265 = por %p263, %p264
      %p266 = scmp.ne.s32.totalorder %s258, %s260
      %p267 = scmp.eq.s32.totalorder %s40, 1
      %p268 = por %p266, %p267
      %p269 = scmp.ne.s32.totalorder %s260, %s261
      %p270 = scmp.eq.s32.totalorder %s40, 0
      %p271 = por %p269, %p270
      %p272 = scmp.ne.s32.totalorder %s260, %s261
      %p273 = scmp.eq.s32.totalorder %s41, 1
      %p274 = por %p272, %p273
      %p276 = scmp.ne.s32.totalorder %s261, %s275
      %p277 = scmp.eq.s32.totalorder %s41, 0
      %p278 = por %p276, %p277
      %s280 = sadd.s32 %s279, 1
      %p283 = scmp.eq.s32.totalorder %s35, 1
      %p284 = scmp.ne.s32.totalorder %s279, %s281
      %p285 = scmp.eq.s32.totalorder %s35, 0
      %p286 = por %p284, %p285
      %p287 = scmp.ne.s32.totalorder %s279, %s281
      %p288 = scmp.eq.s32.totalorder %s40, 1
      %p289 = por %p287, %p288
      %p290 = scmp.ne.s32.totalorder %s281, %s282
      %p291 = scmp.eq.s32.totalorder %s40, 0
      %p292 = por %p290, %p291
      %p293 = scmp.ne.s32.totalorder %s281, %s282
      %p294 = scmp.eq.s32.totalorder %s41, 1
      %p295 = por %p293, %p294
      %p297 = scmp.ne.s32.totalorder %s282, %s296
      %p298 = scmp.eq.s32.totalorder %s41, 0
      %p299 = por %p297, %p298
      %s301 = sadd.s32 %s300, 1
      %p304 = scmp.eq.s32.totalorder %s35, 1
      %p305 = scmp.ne.s32.totalorder %s300, %s302
      %p306 = scmp.eq.s32.totalorder %s35, 0
      %p307 = por %p305, %p306
      %p308 = scmp.ne.s32.totalorder %s300, %s302
      %p309 = scmp.eq.s32.totalorder %s40, 1
      %p310 = por %p308, %p309
      %p311 = scmp.ne.s32.totalorder %s302, %s303
      %p312 = scmp.eq.s32.totalorder %s40, 0
      %p313 = por %p311, %p312
      %p314 = scmp.ne.s32.totalorder %s302, %s303
      %p315 = scmp.eq.s32.totalorder %s41, 1
      %p316 = por %p314, %p315
      %p318 = scmp.ne.s32.totalorder %s303, %s317
      %p319 = scmp.eq.s32.totalorder %s41, 0
      %p320 = por %p318, %p319
      %s322 = sadd.s32 %s321, 1
      %p325 = scmp.eq.s32.totalorder %s35, 1
      %p326 = scmp.ne.s32.totalorder %s321, %s323
      %p327 = scmp.eq.s32.totalorder %s35, 0
      %p328 = por %p326, %p327
      %p329 = scmp.ne.s32.totalorder %s321, %s323
      %p330 = scmp.eq.s32.totalorder %s40, 1
      %p331 = por %p329, %p330
      %p332 = scmp.ne.s32.totalorder %s323, %s324
      %p333 = scmp.eq.s32.totalorder %s40, 0
      %p334 = por %p332, %p333
      %p335 = scmp.ne.s32.totalorder %s323, %s324
      %p336 = scmp.eq.s32.totalorder %s41, 1
      %p337 = por %p335, %p336
      %p339 = scmp.ne.s32.totalorder %s324, %s338
      %p340 = scmp.eq.s32.totalorder %s41, 0
      %p341 = por %p339, %p340
      %s343 = sadd.s32 %s342, 1
      %p346 = scmp.eq.s32.totalorder %s35, 1
      %p347 = scmp.ne.s32.totalorder %s342, %s344
      %p348 = scmp.eq.s32.totalorder %s35, 0
      %p349 = por %p347, %p348
      %p350 = scmp.ne.s32.totalorder %s342, %s344
      %p351 = scmp.eq.s32.totalorder %s40, 1
      %p352 = por %p350, %p351
      %p353 = scmp.ne.s32.totalorder %s344, %s345
      %p354 = scmp.eq.s32.totalorder %s40, 0
      %p355 = por %p353, %p354
      %p356 = scmp.ne.s32.totalorder %s344, %s345
      %p357 = scmp.eq.s32.totalorder %s41, 1
      %p358 = por %p356, %p357
      %p360 = scmp.ne.s32.totalorder %s345, %s359
      %p361 = scmp.eq.s32.totalorder %s41, 0
      %p362 = por %p360, %p361
      %s364 = sadd.s32 %s363, 1
      %p367 = scmp.eq.s32.totalorder %s35, 1
      %p368 = scmp.ne.s32.totalorder %s363, %s365
      %p369 = scmp.eq.s32.totalorder %s35, 0
      %p370 = por %p368, %p369
      %p371 = scmp.ne.s32.totalorder %s363, %s365
      %p372 = scmp.eq.s32.totalorder %s40, 1
      %p373 = por %p371, %p372
      %p374 = scmp.ne.s32.totalorder %s365, %s366
      %p375 = scmp.eq.s32.totalorder %s40, 0
      %p376 = por %p374, %p375
      %p377 = scmp.ne.s32.totalorder %s365, %s366
      %p378 = scmp.eq.s32.totalorder %s41, 1
      %p379 = por %p377, %p378
      %p381 = scmp.ne.s32.totalorder %s366, %s380
      %p382 = scmp.eq.s32.totalorder %s41, 0
      %p383 = por %p381, %p382
      %s385 = sadd.s32 %s384, 1
      %p388 = scmp.eq.s32.totalorder %s35, 1
      %p389 = scmp.ne.s32.totalorder %s384, %s386
      %p390 = scmp.eq.s32.totalorder %s35, 0
      %p391 = por %p389, %p390
      %p392 = scmp.ne.s32.totalorder %s384, %s386
      %p393 = scmp.eq.s32.totalorder %s40, 1
      %p394 = por %p392, %p393
      %p395 = scmp.ne.s32.totalorder %s386, %s387
      %p396 = scmp.eq.s32.totalorder %s40, 0
      %p397 = por %p395, %p396
      %p398 = scmp.ne.s32.totalorder %s386, %s387
      %p399 = scmp.eq.s32.totalorder %s41, 1
      %p400 = por %p398, %p399
      %p402 = scmp.ne.s32.totalorder %s387, %s401
      %p403 = scmp.eq.s32.totalorder %s41, 0
      %p404 = por %p402, %p403
      %s405 = ssub.s32 %s35, %s42
      %p406 = scmp.eq.s32.totalorder %s405, 0
      %s408 = sadd.s32 %s407, 1
      %s409 = scalar_select %p406, %s407, %s408
      %p412 = pneg %p406
      %p413 = scmp.eq.s32.totalorder %s35, 1
      %p414 = por %p412, %p413
      %p415 = scmp.ne.s32.totalorder %s407, %s410
      %p416 = scmp.eq.s32.totalorder %s35, 0
      %p417 = por %p415, %p416
      %p418 = scmp.ne.s32.totalorder %s407, %s410
      %p419 = scmp.eq.s32.totalorder %s40, 1
      %p420 = por %p418, %p419
      %p421 = scmp.ne.s32.totalorder %s410, %s411
      %p422 = scmp.eq.s32.totalorder %s40, 0
      %p423 = por %p421, %p422
      %p424 = scmp.ne.s32.totalorder %s410, %s411
      %p425 = scmp.eq.s32.totalorder %s41, 1
      %p426 = por %p424, %p425
      %p428 = scmp.ne.s32.totalorder %s411, %s427
      %p429 = scmp.eq.s32.totalorder %s41, 0
      %p430 = por %p428, %p429
      %p431 = scmp.le.s32.totalorder 1, %s35
      %p432 = scmp.lt.s32.totalorder %s35, 3
      %p433 = pnand %p431, %p432
      %p434 = pneg %p433
      // Predicated region
      $region9: #{cae_forward.1} parent=5 // pred_check
        _
      $region10: #{cae_forward.1} parent=5 // pred_check_branch
        %436 = sbr.rel (%p433) target = $region12
      $region11: #{cae_forward.1} parent=5 // pred_region
        %s437 = ssub.s32 %s35, 1
        // Predicated region
        $region13: #{cae_forward.1} parent=11 // pred_check
          %p438 = pneg %p82
        $region14: #{cae_forward.1} parent=11 // pred_check_branch
          %440 = sbr.rel (%p438) target = $region16
        $region15: #{cae_forward.1} parent=11 // pred_region
          %442 = vsyncadd [#allocation3], 0
          %s443 = sshll.u32 %s1, 4
          %s444 = int_to_ptr.hbm [resolvable:$true] %s443
          %s445 = sshll.u32 [#allocation2], 4
          %s446 = int_to_ptr.vmem [resolvable:$true] %s445
          %451 = dma.hbm_to_vmem [thread:$0]  %s444, 10240, %s446, [#allocation3], 512, 512, 32
        $region16: #{cae_forward.1} parent=11 // pred_fallthru
          _
        // Predicated region
        $region17: #{cae_forward.1} parent=11 // pred_check
          %p452 = pneg %p103
        $region18: #{cae_forward.1} parent=11 // pred_check_branch
          %454 = sbr.rel (%p452) target = $region20
        $region19: #{cae_forward.1} parent=11 // pred_region
          %456 = vsyncadd [#allocation6], 0
          %s458 = sshll.u32 %s2, 4
          %s459 = int_to_ptr.hbm [resolvable:$true] %s458
          %s460 = sshll.u32 [#allocation5], 4
          %s461 = int_to_ptr.vmem [resolvable:$true] %s460
          %463 = dma.hbm_to_vmem [thread:$0]  %s459, 64, %s461, [#allocation6]
        $region20: #{cae_forward.1} parent=11 // pred_fallthru
          _
        // Predicated region
        $region21: #{cae_forward.1} parent=11 // pred_check
          %p464 = pneg %p124
        $region22: #{cae_forward.1} parent=11 // pred_check_branch
          %466 = sbr.rel (%p464) target = $region24
        $region23: #{cae_forward.1} parent=11 // pred_region
          %468 = vsyncadd [#allocation6], 0
          %s470 = sshll.u32 %s3, 4
          %s471 = int_to_ptr.hbm [resolvable:$true] %s470
          %s472 = sshll.u32 [#allocation7], 4
          %s473 = int_to_ptr.vmem [resolvable:$true] %s472
          %475 = dma.hbm_to_vmem [thread:$0]  %s471, 64, %s473, [#allocation6]
        $region24: #{cae_forward.1} parent=11 // pred_fallthru
          _
        // Predicated region
        $region25: #{cae_forward.1} parent=11 // pred_check
          %p476 = pneg %p145
        $region26: #{cae_forward.1} parent=11 // pred_check_branch
          %478 = sbr.rel (%p476) target = $region28
        $region27: #{cae_forward.1} parent=11 // pred_region
          %480 = vsyncadd [#allocation9], 0
          %s481 = sshll.u32 %s4, 4
          %s482 = int_to_ptr.hbm [resolvable:$true] %s481
          %s483 = sshll.u32 [#allocation8], 4
          %s484 = int_to_ptr.vmem [resolvable:$true] %s483
          %489 = dma.hbm_to_vmem [thread:$0]  %s482, 14336, %s484, [#allocation9], 256, 256, 16
        $region28: #{cae_forward.1} parent=11 // pred_fallthru
          _
        // Predicated region
        $region29: #{cae_forward.1} parent=11 // pred_check
          %p490 = pneg %p166
        $region30: #{cae_forward.1} parent=11 // pred_check_branch
          %492 = sbr.rel (%p490) target = $region32
        $region31: #{cae_forward.1} parent=11 // pred_region
          %494 = vsyncadd [#allocation9], 0
          %s495 = sshll.u32 %s5, 4
          %s496 = int_to_ptr.hbm [resolvable:$true] %s495
          %s497 = sshll.u32 [#allocation10], 4
          %s498 = int_to_ptr.vmem [resolvable:$true] %s497
          %503 = dma.hbm_to_vmem [thread:$0]  %s496, 14336, %s498, [#allocation9], 256, 256, 16
        $region32: #{cae_forward.1} parent=11 // pred_fallthru
          _
        // Predicated region
        $region33: #{cae_forward.1} parent=11 // pred_check
          %p504 = pneg %p187
        $region34: #{cae_forward.1} parent=11 // pred_check_branch
          %506 = sbr.rel (%p504) target = $region36
        $region35: #{cae_forward.1} parent=11 // pred_region
          %508 = vsyncadd [#allocation12], 0
          %s509 = sshll.u32 %s6, 4
          %s510 = int_to_ptr.hbm [resolvable:$true] %s509
          %s511 = sshll.u32 [#allocation11], 4
          %s512 = int_to_ptr.vmem [resolvable:$true] %s511
          %517 = dma.hbm_to_vmem [thread:$0]  %s510, 384, %s512, [#allocation12], 128, 128, 8
        $region36: #{cae_forward.1} parent=11 // pred_fallthru
          _
        // Predicated region
        $region37: #{cae_forward.1} parent=11 // pred_check
          %p518 = pneg %p208
        $region38: #{cae_forward.1} parent=11 // pred_check_branch
          %520 = sbr.rel (%p518) target = $region40
        $region39: #{cae_forward.1} parent=11 // pred_region
          %522 = vsyncadd [#allocation12], 0
          %s523 = sshll.u32 %s7, 4
          %s524 = int_to_ptr.hbm [resolvable:$true] %s523
          %s525 = sshll.u32 [#allocation13], 4
          %s526 = int_to_ptr.vmem [resolvable:$true] %s525
          %531 = dma.hbm_to_vmem [thread:$0]  %s524, 384, %s526, [#allocation12], 128, 128, 8
        $region40: #{cae_forward.1} parent=11 // pred_fallthru
          _
        // Predicated region
        $region41: #{cae_forward.1} parent=11 // pred_check
          %p532 = pneg %p229
        $region42: #{cae_forward.1} parent=11 // pred_check_branch
          %534 = sbr.rel (%p532) target = $region44
        $region43: #{cae_forward.1} parent=11 // pred_region
          %536 = vsyncadd [#allocation15], 0
          %s537 = sshll.u32 %s8, 4
          %s538 = int_to_ptr.hbm [resolvable:$true] %s537
          %s539 = sshll.u32 [#allocation14], 4
          %s540 = int_to_ptr.vmem [resolvable:$true] %s539
          %545 = dma.hbm_to_vmem [thread:$0]  %s538, 71680, %s540, [#allocation15], 512, 512, 32
        $region44: #{cae_forward.1} parent=11 // pred_fallthru
          _
        // Predicated region
        $region45: #{cae_forward.1} parent=11 // pred_check
          %p546 = pneg %p250
        $region46: #{cae_forward.1} parent=11 // pred_check_branch
          %548 = sbr.rel (%p546) target = $region48
        $region47: #{cae_forward.1} parent=11 // pred_region
          %550 = vsyncadd [#allocation15], 0
          %s552 = sshll.u32 %s9, 4
          %s553 = int_to_ptr.hbm [resolvable:$true] %s552
          %s554 = sshll.u32 [#allocation16], 4
          %s555 = int_to_ptr.vmem [resolvable:$true] %s554
          %557 = dma.hbm_to_vmem [thread:$0]  %s553, 64, %s555, [#allocation15]
        $region48: #{cae_forward.1} parent=11 // pred_fallthru
          _
        // Predicated region
        $region49: #{cae_forward.1} parent=11 // pred_check
          %p558 = pneg %p271
        $region50: #{cae_forward.1} parent=11 // pred_check_branch
          %560 = sbr.rel (%p558) target = $region52
        $region51: #{cae_forward.1} parent=11 // pred_region
          %562 = vsyncadd [#allocation18], 0
          %s564 = sshll.u32 %s10, 4
          %s565 = int_to_ptr.hbm [resolvable:$true] %s564
          %s566 = sshll.u32 [#allocation17], 4
          %s567 = int_to_ptr.vmem [resolvable:$true] %s566
          %569 = dma.hbm_to_vmem [thread:$0]  %s565, 64, %s567, [#allocation18]
        $region52: #{cae_forward.1} parent=11 // pred_fallthru
          _
        // Predicated region
        $region53: #{cae_forward.1} parent=11 // pred_check
          %p570 = pneg %p292
        $region54: #{cae_forward.1} parent=11 // pred_check_branch
          %572 = sbr.rel (%p570) target = $region56
        $region55: #{cae_forward.1} parent=11 // pred_region
          %574 = vsyncadd [#allocation18], 0
          %s575 = sshll.u32 %s11, 4
          %s576 = int_to_ptr.hbm [resolvable:$true] %s575
          %s577 = sshll.u32 [#allocation19], 4
          %s578 = int_to_ptr.vmem [resolvable:$true] %s577
          %583 = dma.hbm_to_vmem [thread:$0]  %s576, 14336, %s578, [#allocation18], 256, 256, 16
        $region56: #{cae_forward.1} parent=11 // pred_fallthru
          _
        // Predicated region
        $region57: #{cae_forward.1} parent=11 // pred_check
          %p584 = pneg %p313
        $region58: #{cae_forward.1} parent=11 // pred_check_branch
          %586 = sbr.rel (%p584) target = $region60
        $region59: #{cae_forward.1} parent=11 // pred_region
          %588 = vsyncadd [#allocation21], 0
          %s589 = sshll.u32 %s12, 4
          %s590 = int_to_ptr.hbm [resolvable:$true] %s589
          %s591 = sshll.u32 [#allocation20], 4
          %s592 = int_to_ptr.vmem [resolvable:$true] %s591
          %597 = dma.hbm_to_vmem [thread:$0]  %s590, 14336, %s592, [#allocation21], 256, 256, 16
        $region60: #{cae_forward.1} parent=11 // pred_fallthru
          _
        // Predicated region
        $region61: #{cae_forward.1} parent=11 // pred_check
          %p598 = pneg %p334
        $region62: #{cae_forward.1} parent=11 // pred_check_branch
          %600 = sbr.rel (%p598) target = $region64
        $region63: #{cae_forward.1} parent=11 // pred_region
          %602 = vsyncadd [#allocation21], 0
          %s604 = sshll.u32 %s13, 4
          %s605 = int_to_ptr.hbm [resolvable:$true] %s604
          %s606 = sshll.u32 [#allocation22], 4
          %s607 = int_to_ptr.vmem [resolvable:$true] %s606
          %609 = dma.hbm_to_vmem [thread:$0]  %s605, 128, %s607, [#allocation21]
        $region64: #{cae_forward.1} parent=11 // pred_fallthru
          _
        // Predicated region
        $region65: #{cae_forward.1} parent=11 // pred_check
          %p610 = pneg %p355
        $region66: #{cae_forward.1} parent=11 // pred_check_branch
          %612 = sbr.rel (%p610) target = $region68
        $region67: #{cae_forward.1} parent=11 // pred_region
          %614 = vsyncadd [#allocation24], 0
          %s616 = sshll.u32 %s14, 4
          %s617 = int_to_ptr.hbm [resolvable:$true] %s616
          %s618 = sshll.u32 [#allocation23], 4
          %s619 = int_to_ptr.vmem [resolvable:$true] %s618
          %621 = dma.hbm_to_vmem [thread:$0]  %s617, 128, %s619, [#allocation24]
        $region68: #{cae_forward.1} parent=11 // pred_fallthru
          _
        // Predicated region
        $region69: #{cae_forward.1} parent=11 // pred_check
          %p622 = pneg %p376
        $region70: #{cae_forward.1} parent=11 // pred_check_branch
          %624 = sbr.rel (%p622) target = $region72
        $region71: #{cae_forward.1} parent=11 // pred_region
          %626 = vsyncadd [#allocation24], 0
          %s627 = sshll.u32 %s15, 4
          %s628 = int_to_ptr.hbm [resolvable:$true] %s627
          %s629 = sshll.u32 [#allocation25], 4
          %s630 = int_to_ptr.vmem [resolvable:$true] %s629
          %635 = dma.hbm_to_vmem [thread:$0]  %s628, 25088, %s630, [#allocation24], 128, 128, 8
        $region72: #{cae_forward.1} parent=11 // pred_fallthru
          _
        // Predicated region
        $region73: #{cae_forward.1} parent=11 // pred_check
          %p636 = pneg %p397
        $region74: #{cae_forward.1} parent=11 // pred_check_branch
          %638 = sbr.rel (%p636) target = $region76
        $region75: #{cae_forward.1} parent=11 // pred_region
          %640 = vsyncadd [#allocation27], 0
          %s642 = sshll.u32 %s16, 4
          %s643 = int_to_ptr.hbm [resolvable:$true] %s642
          %s644 = sshll.u32 [#allocation26], 4
          %s645 = int_to_ptr.vmem [resolvable:$true] %s644
          %647 = dma.hbm_to_vmem [thread:$0]  %s643, 16, %s645, [#allocation27]
        $region76: #{cae_forward.1} parent=11 // pred_fallthru
          _
      $region12: #{cae_forward.1} parent=5 // pred_fallthru
        _
      %p648 = scmp.lt.s32.totalorder %s35, 2
      // Predicated region
      $region77: #{cae_forward.1} parent=5 // pred_check
        %p649 = pneg %p648
      $region78: #{cae_forward.1} parent=5 // pred_check_branch
        %651 = sbr.rel (%p649) target = $region80
      $region79: #{cae_forward.1} parent=5 // pred_region
        // Predicated region
        $region81: #{cae_forward.1} parent=79 // pred_check
          %p652 = pneg %p55
        $region82: #{cae_forward.1} parent=79 // pred_check_branch
          %654 = sbr.rel (%p652) target = $region84
        $region83: #{cae_forward.1} parent=79 // pred_region
          %p655 = scmp.lt.s32.totalorder %s35, 1
          %s656 = scalar_select %p655, %s35, 1
          %s657 = smul.addr %s656, 4
          %s658 = smul.addr %s657, 8
          %s659 = scalar_lea.vmem %s0, %s658
        $region84: #{cae_forward.1} parent=79 // pred_fallthru
          _
      $region80: #{cae_forward.1} parent=5 // pred_fallthru
        _
      %p660 = scmp.le.s32.totalorder 1, %s35
      %p661 = scmp.lt.s32.totalorder %s35, 3
      %p662 = pnand %p660, %p661
      %p663 = pneg %p662
      // Predicated region
      $region85: #{cae_forward.1} parent=5 // pred_check
        _
      $region86: #{cae_forward.1} parent=5 // pred_check_branch
        %665 = sbr.rel (%p662) target = $region88
      $region87: #{cae_forward.1} parent=5 // pred_region
        %s666 = ssub.s32 %s35, 1
        // Predicated region
        $region89: #{cae_forward.1} parent=87 // pred_check
          %p667 = pneg %p82
        $region90: #{cae_forward.1} parent=87 // pred_check_branch
          %669 = sbr.rel (%p667) target = $region92
        $region91: #{cae_forward.1} parent=87 // pred_region
          %671 = dma.done [#allocation3], 10240
        $region92: #{cae_forward.1} parent=87 // pred_fallthru
          _
        // Predicated region
        $region93: #{cae_forward.1} parent=87 // pred_check
          %p672 = pneg %p103
        $region94: #{cae_forward.1} parent=87 // pred_check_branch
          %674 = sbr.rel (%p672) target = $region96
        $region95: #{cae_forward.1} parent=87 // pred_region
          %676 = dma.done [#allocation6], 64
        $region96: #{cae_forward.1} parent=87 // pred_fallthru
          _
        // Predicated region
        $region97: #{cae_forward.1} parent=87 // pred_check
          %p677 = pneg %p124
        $region98: #{cae_forward.1} parent=87 // pred_check_branch
          %679 = sbr.rel (%p677) target = $region100
        $region99: #{cae_forward.1} parent=87 // pred_region
          %681 = dma.done [#allocation6], 64
        $region100: #{cae_forward.1} parent=87 // pred_fallthru
          _
        // Predicated region
        $region101: #{cae_forward.1} parent=87 // pred_check
          %p682 = pneg %p145
        $region102: #{cae_forward.1} parent=87 // pred_check_branch
          %684 = sbr.rel (%p682) target = $region104
        $region103: #{cae_forward.1} parent=87 // pred_region
          %686 = dma.done [#allocation9], 14336
        $region104: #{cae_forward.1} parent=87 // pred_fallthru
          _
        // Predicated region
        $region105: #{cae_forward.1} parent=87 // pred_check
          %p687 = pneg %p166
        $region106: #{cae_forward.1} parent=87 // pred_check_branch
          %689 = sbr.rel (%p687) target = $region108
        $region107: #{cae_forward.1} parent=87 // pred_region
          %691 = dma.done [#allocation9], 14336
        $region108: #{cae_forward.1} parent=87 // pred_fallthru
          _
        // Predicated region
        $region109: #{cae_forward.1} parent=87 // pred_check
          %p692 = pneg %p187
        $region110: #{cae_forward.1} parent=87 // pred_check_branch
          %694 = sbr.rel (%p692) target = $region112
        $region111: #{cae_forward.1} parent=87 // pred_region
          %696 = dma.done [#allocation12], 384
        $region112: #{cae_forward.1} parent=87 // pred_fallthru
          _
        // Predicated region
        $region113: #{cae_forward.1} parent=87 // pred_check
          %p697 = pneg %p208
        $region114: #{cae_forward.1} parent=87 // pred_check_branch
          %699 = sbr.rel (%p697) target = $region116
        $region115: #{cae_forward.1} parent=87 // pred_region
          %701 = dma.done [#allocation12], 384
        $region116: #{cae_forward.1} parent=87 // pred_fallthru
          _
        // Predicated region
        $region117: #{cae_forward.1} parent=87 // pred_check
          %p702 = pneg %p229
        $region118: #{cae_forward.1} parent=87 // pred_check_branch
          %704 = sbr.rel (%p702) target = $region120
        $region119: #{cae_forward.1} parent=87 // pred_region
          %706 = dma.done [#allocation15], 71680
        $region120: #{cae_forward.1} parent=87 // pred_fallthru
          _
        // Predicated region
        $region121: #{cae_forward.1} parent=87 // pred_check
          %p707 = pneg %p250
        $region122: #{cae_forward.1} parent=87 // pred_check_branch
          %709 = sbr.rel (%p707) target = $region124
        $region123: #{cae_forward.1} parent=87 // pred_region
          %711 = dma.done [#allocation15], 64
        $region124: #{cae_forward.1} parent=87 // pred_fallthru
          _
        // Predicated region
        $region125: #{cae_forward.1} parent=87 // pred_check
          %p712 = pneg %p271
        $region126: #{cae_forward.1} parent=87 // pred_check_branch
          %714 = sbr.rel (%p712) target = $region128
        $region127: #{cae_forward.1} parent=87 // pred_region
          %716 = dma.done [#allocation18], 64
        $region128: #{cae_forward.1} parent=87 // pred_fallthru
          _
        // Predicated region
        $region129: #{cae_forward.1} parent=87 // pred_check
          %p717 = pneg %p292
        $region130: #{cae_forward.1} parent=87 // pred_check_branch
          %719 = sbr.rel (%p717) target = $region132
        $region131: #{cae_forward.1} parent=87 // pred_region
          %721 = dma.done [#allocation18], 14336
        $region132: #{cae_forward.1} parent=87 // pred_fallthru
          _
        // Predicated region
        $region133: #{cae_forward.1} parent=87 // pred_check
          %p722 = pneg %p313
        $region134: #{cae_forward.1} parent=87 // pred_check_branch
          %724 = sbr.rel (%p722) target = $region136
        $region135: #{cae_forward.1} parent=87 // pred_region
          %726 = dma.done [#allocation21], 14336
        $region136: #{cae_forward.1} parent=87 // pred_fallthru
          _
        // Predicated region
        $region137: #{cae_forward.1} parent=87 // pred_check
          %p727 = pneg %p334
        $region138: #{cae_forward.1} parent=87 // pred_check_branch
          %729 = sbr.rel (%p727) target = $region140
        $region139: #{cae_forward.1} parent=87 // pred_region
          %731 = dma.done [#allocation21], 128
        $region140: #{cae_forward.1} parent=87 // pred_fallthru
          _
        // Predicated region
        $region141: #{cae_forward.1} parent=87 // pred_check
          %p732 = pneg %p355
        $region142: #{cae_forward.1} parent=87 // pred_check_branch
          %734 = sbr.rel (%p732) target = $region144
        $region143: #{cae_forward.1} parent=87 // pred_region
          %736 = dma.done [#allocation24], 128
        $region144: #{cae_forward.1} parent=87 // pred_fallthru
          _
        // Predicated region
        $region145: #{cae_forward.1} parent=87 // pred_check
          %p737 = pneg %p376
        $region146: #{cae_forward.1} parent=87 // pred_check_branch
          %739 = sbr.rel (%p737) target = $region148
        $region147: #{cae_forward.1} parent=87 // pred_region
          %741 = dma.done [#allocation24], 25088
        $region148: #{cae_forward.1} parent=87 // pred_fallthru
          _
        // Predicated region
        $region149: #{cae_forward.1} parent=87 // pred_check
          %p742 = pneg %p397
        $region150: #{cae_forward.1} parent=87 // pred_check_branch
          %744 = sbr.rel (%p742) target = $region152
        $region151: #{cae_forward.1} parent=87 // pred_region
          %746 = dma.done [#allocation27], 16
        $region152: #{cae_forward.1} parent=87 // pred_fallthru
          _
        %p747 = scmp.lt.s32.totalorder %s40, 1
        %s748 = scalar_select %p747, %s40, 1
        %s749 = smul.addr %s748, 4
        %s750 = smul.addr %s749, 8
        %s751 = scalar_lea.vmem %s0, %s750
        %p752 = pneg %p61
        %p753 = pneg %p58
        %p754 = pneg %p82
        %p755 = pneg %p79
        %p756 = pneg %p103
        %p757 = pneg %p100
        %p758 = pneg %p124
        %p759 = pneg %p121
        %p760 = pneg %p145
        %p761 = pneg %p142
        %p762 = pneg %p166
        %p763 = pneg %p163
        %p764 = pneg %p187
        %p765 = pneg %p184
        %p766 = pneg %p208
        %p767 = pneg %p205
        %p768 = pneg %p229
        %p769 = pneg %p226
        %p770 = pneg %p250
        %p771 = pneg %p247
        %p772 = pneg %p271
        %p773 = pneg %p268
        %p774 = pneg %p292
        %p775 = pneg %p289
        %p776 = pneg %p313
        %p777 = pneg %p310
        %p778 = pneg %p334
        %p779 = pneg %p331
        %p780 = pneg %p355
        %p781 = pneg %p352
        %p782 = pneg %p376
        %p783 = pneg %p373
        %p784 = pneg %p397
        %p785 = pneg %p394
        %p786 = pneg %p423
        %p787 = pneg %p420
        %s788 = sand.u32 %s410, 1
        %s789 = scalar_lea.sflag [#allocation4], %s788
        %s790 = sand.u32 %s410, 1
        %s791 = scalar_lea.vmem [#allocation28], %s790
        %p792 = scmp.lt.s32.totalorder %s40, 1
        %s793 = scalar_select %p792, %s40, 1
        %s794 = smul.addr %s793, 4
        %s795 = smul.addr %s794, 8
        %s796 = scalar_lea.vmem %s0, %s795
        %v797 = vld [vmem:[%s796] sm:$0xff]
        %v798 = vld [vmem:[%s796 + $0x8] sm:$0xff]
        %v799 = vld [vmem:[%s796 + $0x10] sm:$0xff]
        %v800 = vld [vmem:[%s796 + $0x18] sm:$0xff]
        %v801 = vld [vmem:[#allocation2] sm:$0xff]
        %v802 = vld [vmem:[#allocation2 + $0x8] sm:$0xff]
        %v803 = vld [vmem:[#allocation2 + $0x10] sm:$0xff]
        %v804 = vld [vmem:[#allocation2 + $0x18] sm:$0xff]
        %v805 = vld [vmem:[#allocation2 + $0x20] sm:$0xff]
        %v806 = vld [vmem:[#allocation2 + $0x28] sm:$0xff]
        %v807 = vld [vmem:[#allocation2 + $0x30] sm:$0xff]
        %v808 = vld [vmem:[#allocation2 + $0x38] sm:$0xff]
        %v809 = vld [vmem:[#allocation2 + $0x40] sm:$0xff]
        %v810 = vld [vmem:[#allocation2 + $0x48] sm:$0xff]
        %v811 = vld [vmem:[#allocation2 + $0x50] sm:$0xff]
        %v812 = vld [vmem:[#allocation2 + $0x58] sm:$0xff]
        %v813 = vld [vmem:[#allocation2 + $0x60] sm:$0xf]
        %v814 = vld [vmem:[#allocation2 + $0x68] sm:$0xf]
        %v815 = vld [vmem:[#allocation2 + $0x70] sm:$0xf]
        %v816 = vld [vmem:[#allocation2 + $0x78] sm:$0xf]
        %s817 = scalar_lea.vmem [#allocation2], 128
        %v818 = vld [vmem:[%s817] sm:$0xff]
        %v819 = vld [vmem:[%s817 + $0x8] sm:$0xff]
        %v820 = vld [vmem:[%s817 + $0x10] sm:$0xff]
        %v821 = vld [vmem:[%s817 + $0x18] sm:$0xff]
        %v822 = vld [vmem:[%s817 + $0x20] sm:$0xff]
        %v823 = vld [vmem:[%s817 + $0x28] sm:$0xff]
        %v824 = vld [vmem:[%s817 + $0x30] sm:$0xff]
        %v825 = vld [vmem:[%s817 + $0x38] sm:$0xff]
        %v826 = vld [vmem:[%s817 + $0x40] sm:$0xff]
        %v827 = vld [vmem:[%s817 + $0x48] sm:$0xff]
        %v828 = vld [vmem:[%s817 + $0x50] sm:$0xff]
        %v829 = vld [vmem:[%s817 + $0x58] sm:$0xff]
        %v830 = vld [vmem:[%s817 + $0x60] sm:$0xf]
        %v831 = vld [vmem:[%s817 + $0x68] sm:$0xf]
        %v832 = vld [vmem:[%s817 + $0x70] sm:$0xf]
        %v833 = vld [vmem:[%s817 + $0x78] sm:$0xf]
        %vm838 = vcmask 1046528
        %v839 = vrot.slane %v797, 1
        %v840 = vrot.slane %v798, 1
        %v841 = vsel %vm838, %v839, %v840
        %v842 = vrot.slane %v799, 1
        %v843 = vsel %vm838, %v840, %v842
        %v844 = vrot.slane %v800, 1
        %v845 = vsel %vm838, %v842, %v844
        %vm846 = vcmask 228352
        %v847 = vsel %vm846, %v841, 0
        %v849 = vsel %vm846, %v843, 0
        %v851 = vsel %vm846, %v845, 0
        %v853 = vsel %vm846, %v844, 0
        %vm855 = vcmask 1043456
        %v857 = vsel %vm855, %v830, 0
        %v860 = vsel %vm855, %v831, 0
        %v863 = vsel %vm855, %v832, 0
        %v866 = vsel %vm855, %v833, 0
        %868 = vmatpush.msra.mxu0 0.0
        %869 = vmatpush.msra.mxu0 0.0
        %870 = vmatpush.msra.mxu0 0.0
        %871 = vmatpush.msra.mxu0 0.0
        %872 = vmatpush.msra.mxu0 0.0
        %873 = vmatpush.msra.mxu0 0.0
        %874 = vmatpush.msra.mxu0 0.0
        %875 = vmatpush.msra.mxu0 0.0
        %876 = vmatpush.msra.mxu0 0.0
        %877 = vmatpush.msra.mxu0 0.0
        %878 = vmatpush.msra.mxu0 0.0
        %879 = vmatpush.msra.mxu0 0.0
        %880 = vmatpush.msra.mxu0 %v857
        %881 = vmatpush.msra.mxu0 %v826
        %882 = vmatpush.msra.mxu0 %v822
        %883 = vmatpush.msra.mxu0 %v818
        %884 = vmatmul.f32.gmra.mxu0 %v847
        %v885 = vpop.f32.mrf.mxu0
        %v886 = vadd.f32 0.0, %v885
        %887 = vmatmul.f32.gmra.mxu0 %v849
        %v888 = vpop.f32.mrf.mxu0
        %v889 = vadd.f32 0.0, %v888
        %890 = vmatmul.f32.gmra.mxu0 %v851
        %v891 = vpop.f32.mrf.mxu0
        %v892 = vadd.f32 0.0, %v891
        %893 = vmatmul.f32.gmra.mxu0 %v853
        %v894 = vpop.f32.mrf.mxu0
        %v895 = vadd.f32 0.0, %v894
        %896 = vdwg.mxu0
        %897 = vmatpush.msra.mxu0 0.0
        %898 = vmatpush.msra.mxu0 0.0
        %899 = vmatpush.msra.mxu0 0.0
        %900 = vmatpush.msra.mxu0 0.0
        %901 = vmatpush.msra.mxu0 0.0
        %902 = vmatpush.msra.mxu0 0.0
        %903 = vmatpush.msra.mxu0 0.0
        %904 = vmatpush.msra.mxu0 0.0
        %905 = vmatpush.msra.mxu0 0.0
        %906 = vmatpush.msra.mxu0 0.0
        %907 = vmatpush.msra.mxu0 0.0
        %908 = vmatpush.msra.mxu0 0.0
        %909 = vmatpush.msra.mxu0 %v860
        %910 = vmatpush.msra.mxu0 %v827
        %911 = vmatpush.msra.mxu0 %v823
        %912 = vmatpush.msra.mxu0 %v819
        %913 = vmatmul.f32.gmra.mxu0 %v847
        %v914 = vpop.f32.mrf.mxu0
        %v915 = vadd.f32 0.0, %v914
        %916 = vmatmul.f32.gmra.mxu0 %v849
        %v917 = vpop.f32.mrf.mxu0
        %v918 = vadd.f32 0.0, %v917
        %919 = vmatmul.f32.gmra.mxu0 %v851
        %v920 = vpop.f32.mrf.mxu0
        %v921 = vadd.f32 0.0, %v920
        %922 = vmatmul.f32.gmra.mxu0 %v853
        %v923 = vpop.f32.mrf.mxu0
        %v924 = vadd.f32 0.0, %v923
        %925 = vdwg.mxu0
        %926 = vmatpush.msra.mxu0 0.0
        %927 = vmatpush.msra.mxu0 0.0
        %928 = vmatpush.msra.mxu0 0.0
        %929 = vmatpush.msra.mxu0 0.0
        %930 = vmatpush.msra.mxu0 0.0
        %931 = vmatpush.msra.mxu0 0.0
        %932 = vmatpush.msra.mxu0 0.0
        %933 = vmatpush.msra.mxu0 0.0
        %934 = vmatpush.msra.mxu0 0.0
        %935 = vmatpush.msra.mxu0 0.0
        %936 = vmatpush.msra.mxu0 0.0
        %937 = vmatpush.msra.mxu0 0.0
        %938 = vmatpush.msra.mxu0 %v863
        %939 = vmatpush.msra.mxu0 %v828
        %940 = vmatpush.msra.mxu0 %v824
        %941 = vmatpush.msra.mxu0 %v820
        %942 = vmatmul.f32.gmra.mxu0 %v847
        %v943 = vpop.f32.mrf.mxu0
        %v944 = vadd.f32 0.0, %v943
        %945 = vmatmul.f32.gmra.mxu0 %v849
        %v946 = vpop.f32.mrf.mxu0
        %v947 = vadd.f32 0.0, %v946
        %948 = vmatmul.f32.gmra.mxu0 %v851
        %v949 = vpop.f32.mrf.mxu0
        %v950 = vadd.f32 0.0, %v949
        %951 = vmatmul.f32.gmra.mxu0 %v853
        %v952 = vpop.f32.mrf.mxu0
        %v953 = vadd.f32 0.0, %v952
        %954 = vdwg.mxu0
        %955 = vmatpush.msra.mxu0 0.0
        %956 = vmatpush.msra.mxu0 0.0
        %957 = vmatpush.msra.mxu0 0.0
        %958 = vmatpush.msra.mxu0 0.0
        %959 = vmatpush.msra.mxu0 0.0
        %960 = vmatpush.msra.mxu0 0.0
        %961 = vmatpush.msra.mxu0 0.0
        %962 = vmatpush.msra.mxu0 0.0
        %963 = vmatpush.msra.mxu0 0.0
        %964 = vmatpush.msra.mxu0 0.0
        %965 = vmatpush.msra.mxu0 0.0
        %966 = vmatpush.msra.mxu0 0.0
        %967 = vmatpush.msra.mxu0 %v866
        %968 = vmatpush.msra.mxu0 %v829
        %969 = vmatpush.msra.mxu0 %v825
        %970 = vmatpush.msra.mxu0 %v821
        %971 = vmatmul.f32.gmra.mxu0 %v847
        %v972 = vpop.f32.mrf.mxu0
        %v973 = vadd.f32 0.0, %v972
        %974 = vmatmul.f32.gmra.mxu0 %v849
        %v975 = vpop.f32.mrf.mxu0
        %v976 = vadd.f32 0.0, %v975
        %977 = vmatmul.f32.gmra.mxu0 %v851
        %v978 = vpop.f32.mrf.mxu0
        %v979 = vadd.f32 0.0, %v978
        %980 = vmatmul.f32.gmra.mxu0 %v853
        %v981 = vpop.f32.mrf.mxu0
        %v982 = vadd.f32 0.0, %v981
        %983 = vdwg.mxu0
        %v984 = vsel %vm846, %v797, 0
        %v986 = vsel %vm846, %v798, 0
        %v988 = vsel %vm846, %v799, 0
        %v990 = vsel %vm846, %v800, 0
        %v993 = vsel %vm855, %v813, 0
        %v996 = vsel %vm855, %v814, 0
        %v999 = vsel %vm855, %v815, 0
        %v1002 = vsel %vm855, %v816, 0
        %1004 = vmatpush.msra.mxu0 0.0
        %1005 = vmatpush.msra.mxu0 0.0
        %1006 = vmatpush.msra.mxu0 0.0
        %1007 = vmatpush.msra.mxu0 0.0
        %1008 = vmatpush.msra.mxu0 0.0
        %1009 = vmatpush.msra.mxu0 0.0
        %1010 = vmatpush.msra.mxu0 0.0
        %1011 = vmatpush.msra.mxu0 0.0
        %1012 = vmatpush.msra.mxu0 0.0
        %1013 = vmatpush.msra.mxu0 0.0
        %1014 = vmatpush.msra.mxu0 0.0
        %1015 = vmatpush.msra.mxu0 0.0
        %1016 = vmatpush.msra.mxu0 %v993
        %1017 = vmatpush.msra.mxu0 %v809
        %1018 = vmatpush.msra.mxu0 %v805
        %1019 = vmatpush.msra.mxu0 %v801
        %1020 = vmatmul.f32.gmra.mxu0 %v984
        %v1021 = vpop.f32.mrf.mxu0
        %v1022 = vadd.f32 %v886, %v1021
        %1023 = vmatmul.f32.gmra.mxu0 %v986
        %v1024 = vpop.f32.mrf.mxu0
        %v1025 = vadd.f32 %v889, %v1024
        %1026 = vmatmul.f32.gmra.mxu0 %v988
        %v1027 = vpop.f32.mrf.mxu0
        %v1028 = vadd.f32 %v892, %v1027
        %1029 = vmatmul.f32.gmra.mxu0 %v990
        %v1030 = vpop.f32.mrf.mxu0
        %v1031 = vadd.f32 %v895, %v1030
        %1032 = vdwg.mxu0
        %1033 = vmatpush.msra.mxu0 0.0
        %1034 = vmatpush.msra.mxu0 0.0
        %1035 = vmatpush.msra.mxu0 0.0
        %1036 = vmatpush.msra.mxu0 0.0
        %1037 = vmatpush.msra.mxu0 0.0
        %1038 = vmatpush.msra.mxu0 0.0
        %1039 = vmatpush.msra.mxu0 0.0
        %1040 = vmatpush.msra.mxu0 0.0
        %1041 = vmatpush.msra.mxu0 0.0
        %1042 = vmatpush.msra.mxu0 0.0
        %1043 = vmatpush.msra.mxu0 0.0
        %1044 = vmatpush.msra.mxu0 0.0
        %1045 = vmatpush.msra.mxu0 %v996
        %1046 = vmatpush.msra.mxu0 %v810
        %1047 = vmatpush.msra.mxu0 %v806
        %1048 = vmatpush.msra.mxu0 %v802
        %1049 = vmatmul.f32.gmra.mxu0 %v984
        %v1050 = vpop.f32.mrf.mxu0
        %v1051 = vadd.f32 %v915, %v1050
        %1052 = vmatmul.f32.gmra.mxu0 %v986
        %v1053 = vpop.f32.mrf.mxu0
        %v1054 = vadd.f32 %v918, %v1053
        %1055 = vmatmul.f32.gmra.mxu0 %v988
        %v1056 = vpop.f32.mrf.mxu0
        %v1057 = vadd.f32 %v921, %v1056
        %1058 = vmatmul.f32.gmra.mxu0 %v990
        %v1059 = vpop.f32.mrf.mxu0
        %v1060 = vadd.f32 %v924, %v1059
        %1061 = vdwg.mxu0
        %1062 = vmatpush.msra.mxu0 0.0
        %1063 = vmatpush.msra.mxu0 0.0
        %1064 = vmatpush.msra.mxu0 0.0
        %1065 = vmatpush.msra.mxu0 0.0
        %1066 = vmatpush.msra.mxu0 0.0
        %1067 = vmatpush.msra.mxu0 0.0
        %1068 = vmatpush.msra.mxu0 0.0
        %1069 = vmatpush.msra.mxu0 0.0
        %1070 = vmatpush.msra.mxu0 0.0
        %1071 = vmatpush.msra.mxu0 0.0
        %1072 = vmatpush.msra.mxu0 0.0
        %1073 = vmatpush.msra.mxu0 0.0
        %1074 = vmatpush.msra.mxu0 %v999
        %1075 = vmatpush.msra.mxu0 %v811
        %1076 = vmatpush.msra.mxu0 %v807
        %1077 = vmatpush.msra.mxu0 %v803
        %1078 = vmatmul.f32.gmra.mxu0 %v984
        %v1079 = vpop.f32.mrf.mxu0
        %v1080 = vadd.f32 %v944, %v1079
        %1081 = vmatmul.f32.gmra.mxu0 %v986
        %v1082 = vpop.f32.mrf.mxu0
        %v1083 = vadd.f32 %v947, %v1082
        %1084 = vmatmul.f32.gmra.mxu0 %v988
        %v1085 = vpop.f32.mrf.mxu0
        %v1086 = vadd.f32 %v950, %v1085
        %1087 = vmatmul.f32.gmra.mxu0 %v990
        %v1088 = vpop.f32.mrf.mxu0
        %v1089 = vadd.f32 %v953, %v1088
        %1090 = vdwg.mxu0
        %1091 = vmatpush.msra.mxu0 0.0
        %1092 = vmatpush.msra.mxu0 0.0
        %1093 = vmatpush.msra.mxu0 0.0
        %1094 = vmatpush.msra.mxu0 0.0
        %1095 = vmatpush.msra.mxu0 0.0
        %1096 = vmatpush.msra.mxu0 0.0
        %1097 = vmatpush.msra.mxu0 0.0
        %1098 = vmatpush.msra.mxu0 0.0
        %1099 = vmatpush.msra.mxu0 0.0
        %1100 = vmatpush.msra.mxu0 0.0
        %1101 = vmatpush.msra.mxu0 0.0
        %1102 = vmatpush.msra.mxu0 0.0
        %1103 = vmatpush.msra.mxu0 %v1002
        %1104 = vmatpush.msra.mxu0 %v812
        %1105 = vmatpush.msra.mxu0 %v808
        %1106 = vmatpush.msra.mxu0 %v804
        %1107 = vmatmul.f32.gmra.mxu0 %v984
        %v1108 = vpop.f32.mrf.mxu0
        %v1109 = vadd.f32 %v973, %v1108
        %1110 = vmatmul.f32.gmra.mxu0 %v986
        %v1111 = vpop.f32.mrf.mxu0
        %v1112 = vadd.f32 %v976, %v1111
        %1113 = vmatmul.f32.gmra.mxu0 %v988
        %v1114 = vpop.f32.mrf.mxu0
        %v1115 = vadd.f32 %v979, %v1114
        %1116 = vmatmul.f32.gmra.mxu0 %v990
        %v1117 = vpop.f32.mrf.mxu0
        %v1118 = vadd.f32 %v982, %v1117
        %1119 = vdwg.mxu0
        %s1120 = scalar_lea.vmem [#allocation2], 256
        %v1121 = vld [vmem:[%s1120] sm:$0xff]
        %v1122 = vld [vmem:[%s1120 + $0x8] sm:$0xff]
        %v1123 = vld [vmem:[%s1120 + $0x10] sm:$0xff]
        %v1124 = vld [vmem:[%s1120 + $0x18] sm:$0xff]
        %v1125 = vld [vmem:[%s1120 + $0x20] sm:$0xff]
        %v1126 = vld [vmem:[%s1120 + $0x28] sm:$0xff]
        %v1127 = vld [vmem:[%s1120 + $0x30] sm:$0xff]
        %v1128 = vld [vmem:[%s1120 + $0x38] sm:$0xff]
        %v1129 = vld [vmem:[%s1120 + $0x40] sm:$0xff]
        %v1130 = vld [vmem:[%s1120 + $0x48] sm:$0xff]
        %v1131 = vld [vmem:[%s1120 + $0x50] sm:$0xff]
        %v1132 = vld [vmem:[%s1120 + $0x58] sm:$0xff]
        %v1133 = vld [vmem:[%s1120 + $0x60] sm:$0xf]
        %v1134 = vld [vmem:[%s1120 + $0x68] sm:$0xf]
        %v1135 = vld [vmem:[%s1120 + $0x70] sm:$0xf]
        %v1136 = vld [vmem:[%s1120 + $0x78] sm:$0xf]
        %vm1137 = vcmask 1045504
        %v1138 = vrot.slane %v797, 2
        %v1139 = vrot.slane %v798, 2
        %v1140 = vsel %vm1137, %v1138, %v1139
        %v1141 = vrot.slane %v799, 2
        %v1142 = vsel %vm1137, %v1139, %v1141
        %v1143 = vrot.slane %v800, 2
        %v1144 = vsel %vm1137, %v1141, %v1143
        %v1145 = vsel %vm846, %v1140, 0
        %v1147 = vsel %vm846, %v1142, 0
        %v1149 = vsel %vm846, %v1144, 0
        %v1151 = vsel %vm846, %v1143, 0
        %v1154 = vsel %vm855, %v1133, 0
        %v1157 = vsel %vm855, %v1134, 0
        %v1160 = vsel %vm855, %v1135, 0
        %v1163 = vsel %vm855, %v1136, 0
        %1165 = vmatpush.msra.mxu0 0.0
        %1166 = vmatpush.msra.mxu0 0.0
        %1167 = vmatpush.msra.mxu0 0.0
        %1168 = vmatpush.msra.mxu0 0.0
        %1169 = vmatpush.msra.mxu0 0.0
        %1170 = vmatpush.msra.mxu0 0.0
        %1171 = vmatpush.msra.mxu0 0.0
        %1172 = vmatpush.msra.mxu0 0.0
        %1173 = vmatpush.msra.mxu0 0.0
        %1174 = vmatpush.msra.mxu0 0.0
        %1175 = vmatpush.msra.mxu0 0.0
        %1176 = vmatpush.msra.mxu0 0.0
        %1177 = vmatpush.msra.mxu0 %v1154
        %1178 = vmatpush.msra.mxu0 %v1129
        %1179 = vmatpush.msra.mxu0 %v1125
        %1180 = vmatpush.msra.mxu0 %v1121
        %1181 = vmatmul.f32.gmra.mxu0 %v1145
        %v1182 = vpop.f32.mrf.mxu0
        %v1183 = vadd.f32 0.0, %v1182
        %1184 = vmatmul.f32.gmra.mxu0 %v1147
        %v1185 = vpop.f32.mrf.mxu0
        %v1186 = vadd.f32 0.0, %v1185
        %1187 = vmatmul.f32.gmra.mxu0 %v1149
        %v1188 = vpop.f32.mrf.mxu0
        %v1189 = vadd.f32 0.0, %v1188
        %1190 = vmatmul.f32.gmra.mxu0 %v1151
        %v1191 = vpop.f32.mrf.mxu0
        %v1192 = vadd.f32 0.0, %v1191
        %1193 = vdwg.mxu0
        %1194 = vmatpush.msra.mxu0 0.0
        %1195 = vmatpush.msra.mxu0 0.0
        %1196 = vmatpush.msra.mxu0 0.0
        %1197 = vmatpush.msra.mxu0 0.0
        %1198 = vmatpush.msra.mxu0 0.0
        %1199 = vmatpush.msra.mxu0 0.0
        %1200 = vmatpush.msra.mxu0 0.0
        %1201 = vmatpush.msra.mxu0 0.0
        %1202 = vmatpush.msra.mxu0 0.0
        %1203 = vmatpush.msra.mxu0 0.0
        %1204 = vmatpush.msra.mxu0 0.0
        %1205 = vmatpush.msra.mxu0 0.0
        %1206 = vmatpush.msra.mxu0 %v1157
        %1207 = vmatpush.msra.mxu0 %v1130
        %1208 = vmatpush.msra.mxu0 %v1126
        %1209 = vmatpush.msra.mxu0 %v1122
        %1210 = vmatmul.f32.gmra.mxu0 %v1145
        %v1211 = vpop.f32.mrf.mxu0
        %v1212 = vadd.f32 0.0, %v1211
        %1213 = vmatmul.f32.gmra.mxu0 %v1147
        %v1214 = vpop.f32.mrf.mxu0
        %v1215 = vadd.f32 0.0, %v1214
        %1216 = vmatmul.f32.gmra.mxu0 %v1149
        %v1217 = vpop.f32.mrf.mxu0
        %v1218 = vadd.f32 0.0, %v1217
        %1219 = vmatmul.f32.gmra.mxu0 %v1151
        %v1220 = vpop.f32.mrf.mxu0
        %v1221 = vadd.f32 0.0, %v1220
        %1222 = vdwg.mxu0
        %1223 = vmatpush.msra.mxu0 0.0
        %1224 = vmatpush.msra.mxu0 0.0
        %1225 = vmatpush.msra.mxu0 0.0
        %1226 = vmatpush.msra.mxu0 0.0
        %1227 = vmatpush.msra.mxu0 0.0
        %1228 = vmatpush.msra.mxu0 0.0
        %1229 = vmatpush.msra.mxu0 0.0
        %1230 = vmatpush.msra.mxu0 0.0
        %1231 = vmatpush.msra.mxu0 0.0
        %1232 = vmatpush.msra.mxu0 0.0
        %1233 = vmatpush.msra.mxu0 0.0
        %1234 = vmatpush.msra.mxu0 0.0
        %1235 = vmatpush.msra.mxu0 %v1160
        %1236 = vmatpush.msra.mxu0 %v1131
        %1237 = vmatpush.msra.mxu0 %v1127
        %1238 = vmatpush.msra.mxu0 %v1123
        %1239 = vmatmul.f32.gmra.mxu0 %v1145
        %v1240 = vpop.f32.mrf.mxu0
        %v1241 = vadd.f32 0.0, %v1240
        %1242 = vmatmul.f32.gmra.mxu0 %v1147
        %v1243 = vpop.f32.mrf.mxu0
        %v1244 = vadd.f32 0.0, %v1243
        %1245 = vmatmul.f32.gmra.mxu0 %v1149
        %v1246 = vpop.f32.mrf.mxu0
        %v1247 = vadd.f32 0.0, %v1246
        %1248 = vmatmul.f32.gmra.mxu0 %v1151
        %v1249 = vpop.f32.mrf.mxu0
        %v1250 = vadd.f32 0.0, %v1249
        %1251 = vdwg.mxu0
        %1252 = vmatpush.msra.mxu0 0.0
        %1253 = vmatpush.msra.mxu0 0.0
        %1254 = vmatpush.msra.mxu0 0.0
        %1255 = vmatpush.msra.mxu0 0.0
        %1256 = vmatpush.msra.mxu0 0.0
        %1257 = vmatpush.msra.mxu0 0.0
        %1258 = vmatpush.msra.mxu0 0.0
        %1259 = vmatpush.msra.mxu0 0.0
        %1260 = vmatpush.msra.mxu0 0.0
        %1261 = vmatpush.msra.mxu0 0.0
        %1262 = vmatpush.msra.mxu0 0.0
        %1263 = vmatpush.msra.mxu0 0.0
        %1264 = vmatpush.msra.mxu0 %v1163
        %1265 = vmatpush.msra.mxu0 %v1132
        %1266 = vmatpush.msra.mxu0 %v1128
        %1267 = vmatpush.msra.mxu0 %v1124
        %1268 = vmatmul.f32.gmra.mxu0 %v1145
        %v1269 = vpop.f32.mrf.mxu0
        %v1270 = vadd.f32 0.0, %v1269
        %1271 = vmatmul.f32.gmra.mxu0 %v1147
        %v1272 = vpop.f32.mrf.mxu0
        %v1273 = vadd.f32 0.0, %v1272
        %1274 = vmatmul.f32.gmra.mxu0 %v1149
        %v1275 = vpop.f32.mrf.mxu0
        %v1276 = vadd.f32 0.0, %v1275
        %1277 = vmatmul.f32.gmra.mxu0 %v1151
        %v1278 = vpop.f32.mrf.mxu0
        %v1279 = vadd.f32 0.0, %v1278
        %1280 = vdwg.mxu0
        %v1281 = vadd.f32 %v1022, %v1183
        %v1282 = vadd.f32 %v1051, %v1212
        %v1283 = vadd.f32 %v1080, %v1241
        %v1284 = vadd.f32 %v1109, %v1270
        %v1285 = vadd.f32 %v1025, %v1186
        %v1286 = vadd.f32 %v1054, %v1215
        %v1287 = vadd.f32 %v1083, %v1244
        %v1288 = vadd.f32 %v1112, %v1273
        %v1289 = vadd.f32 %v1028, %v1189
        %v1290 = vadd.f32 %v1057, %v1218
        %v1291 = vadd.f32 %v1086, %v1247
        %v1292 = vadd.f32 %v1115, %v1276
        %v1293 = vadd.f32 %v1031, %v1192
        %v1294 = vadd.f32 %v1060, %v1221
        %v1295 = vadd.f32 %v1089, %v1250
        %v1296 = vadd.f32 %v1118, %v1279
        %s1297 = scalar_lea.vmem [#allocation2], 384
        %v1298 = vld [vmem:[%s1297] sm:$0xff]
        %v1299 = vld [vmem:[%s1297 + $0x8] sm:$0xff]
        %v1300 = vld [vmem:[%s1297 + $0x10] sm:$0xff]
        %v1301 = vld [vmem:[%s1297 + $0x18] sm:$0xff]
        %v1302 = vld [vmem:[%s1297 + $0x20] sm:$0xff]
        %v1303 = vld [vmem:[%s1297 + $0x28] sm:$0xff]
        %v1304 = vld [vmem:[%s1297 + $0x30] sm:$0xff]
        %v1305 = vld [vmem:[%s1297 + $0x38] sm:$0xff]
        %v1306 = vld [vmem:[%s1297 + $0x40] sm:$0xff]
        %v1307 = vld [vmem:[%s1297 + $0x48] sm:$0xff]
        %v1308 = vld [vmem:[%s1297 + $0x50] sm:$0xff]
        %v1309 = vld [vmem:[%s1297 + $0x58] sm:$0xff]
        %v1310 = vld [vmem:[%s1297 + $0x60] sm:$0xf]
        %v1311 = vld [vmem:[%s1297 + $0x68] sm:$0xf]
        %v1312 = vld [vmem:[%s1297 + $0x70] sm:$0xf]
        %v1313 = vld [vmem:[%s1297 + $0x78] sm:$0xf]
        %vm1314 = vcmask 1044480
        %v1315 = vrot.slane %v797, 3
        %v1316 = vrot.slane %v798, 3
        %v1317 = vsel %vm1314, %v1315, %v1316
        %v1318 = vrot.slane %v799, 3
        %v1319 = vsel %vm1314, %v1316, %v1318
        %v1320 = vrot.slane %v800, 3
        %v1321 = vsel %vm1314, %v1318, %v1320
        %v1322 = vsel %vm846, %v1317, 0
        %v1324 = vsel %vm846, %v1319, 0
        %v1326 = vsel %vm846, %v1321, 0
        %v1328 = vsel %vm846, %v1320, 0
        %v1331 = vsel %vm855, %v1310, 0
        %v1334 = vsel %vm855, %v1311, 0
        %v1337 = vsel %vm855, %v1312, 0
        %v1340 = vsel %vm855, %v1313, 0
        %1342 = vmatpush.msra.mxu0 0.0
        %1343 = vmatpush.msra.mxu0 0.0
        %1344 = vmatpush.msra.mxu0 0.0
        %1345 = vmatpush.msra.mxu0 0.0
        %1346 = vmatpush.msra.mxu0 0.0
        %1347 = vmatpush.msra.mxu0 0.0
        %1348 = vmatpush.msra.mxu0 0.0
        %1349 = vmatpush.msra.mxu0 0.0
        %1350 = vmatpush.msra.mxu0 0.0
        %1351 = vmatpush.msra.mxu0 0.0
        %1352 = vmatpush.msra.mxu0 0.0
        %1353 = vmatpush.msra.mxu0 0.0
        %1354 = vmatpush.msra.mxu0 %v1331
        %1355 = vmatpush.msra.mxu0 %v1306
        %1356 = vmatpush.msra.mxu0 %v1302
        %1357 = vmatpush.msra.mxu0 %v1298
        %1358 = vmatmul.f32.gmra.mxu0 %v1322
        %v1359 = vpop.f32.mrf.mxu0
        %v1360 = vadd.f32 0.0, %v1359
        %1361 = vmatmul.f32.gmra.mxu0 %v1324
        %v1362 = vpop.f32.mrf.mxu0
        %v1363 = vadd.f32 0.0, %v1362
        %1364 = vmatmul.f32.gmra.mxu0 %v1326
        %v1365 = vpop.f32.mrf.mxu0
        %v1366 = vadd.f32 0.0, %v1365
        %1367 = vmatmul.f32.gmra.mxu0 %v1328
        %v1368 = vpop.f32.mrf.mxu0
        %v1369 = vadd.f32 0.0, %v1368
        %1370 = vdwg.mxu0
        %1371 = vmatpush.msra.mxu0 0.0
        %1372 = vmatpush.msra.mxu0 0.0
        %1373 = vmatpush.msra.mxu0 0.0
        %1374 = vmatpush.msra.mxu0 0.0
        %1375 = vmatpush.msra.mxu0 0.0
        %1376 = vmatpush.msra.mxu0 0.0
        %1377 = vmatpush.msra.mxu0 0.0
        %1378 = vmatpush.msra.mxu0 0.0
        %1379 = vmatpush.msra.mxu0 0.0
        %1380 = vmatpush.msra.mxu0 0.0
        %1381 = vmatpush.msra.mxu0 0.0
        %1382 = vmatpush.msra.mxu0 0.0
        %1383 = vmatpush.msra.mxu0 %v1334
        %1384 = vmatpush.msra.mxu0 %v1307
        %1385 = vmatpush.msra.mxu0 %v1303
        %1386 = vmatpush.msra.mxu0 %v1299
        %1387 = vmatmul.f32.gmra.mxu0 %v1322
        %v1388 = vpop.f32.mrf.mxu0
        %v1389 = vadd.f32 0.0, %v1388
        %1390 = vmatmul.f32.gmra.mxu0 %v1324
        %v1391 = vpop.f32.mrf.mxu0
        %v1392 = vadd.f32 0.0, %v1391
        %1393 = vmatmul.f32.gmra.mxu0 %v1326
        %v1394 = vpop.f32.mrf.mxu0
        %v1395 = vadd.f32 0.0, %v1394
        %1396 = vmatmul.f32.gmra.mxu0 %v1328
        %v1397 = vpop.f32.mrf.mxu0
        %v1398 = vadd.f32 0.0, %v1397
        %1399 = vdwg.mxu0
        %1400 = vmatpush.msra.mxu0 0.0
        %1401 = vmatpush.msra.mxu0 0.0
        %1402 = vmatpush.msra.mxu0 0.0
        %1403 = vmatpush.msra.mxu0 0.0
        %1404 = vmatpush.msra.mxu0 0.0
        %1405 = vmatpush.msra.mxu0 0.0
        %1406 = vmatpush.msra.mxu0 0.0
        %1407 = vmatpush.msra.mxu0 0.0
        %1408 = vmatpush.msra.mxu0 0.0
        %1409 = vmatpush.msra.mxu0 0.0
        %1410 = vmatpush.msra.mxu0 0.0
        %1411 = vmatpush.msra.mxu0 0.0
        %1412 = vmatpush.msra.mxu0 %v1337
        %1413 = vmatpush.msra.mxu0 %v1308
        %1414 = vmatpush.msra.mxu0 %v1304
        %1415 = vmatpush.msra.mxu0 %v1300
        %1416 = vmatmul.f32.gmra.mxu0 %v1322
        %v1417 = vpop.f32.mrf.mxu0
        %v1418 = vadd.f32 0.0, %v1417
        %1419 = vmatmul.f32.gmra.mxu0 %v1324
        %v1420 = vpop.f32.mrf.mxu0
        %v1421 = vadd.f32 0.0, %v1420
        %1422 = vmatmul.f32.gmra.mxu0 %v1326
        %v1423 = vpop.f32.mrf.mxu0
        %v1424 = vadd.f32 0.0, %v1423
        %1425 = vmatmul.f32.gmra.mxu0 %v1328
        %v1426 = vpop.f32.mrf.mxu0
        %v1427 = vadd.f32 0.0, %v1426
        %1428 = vdwg.mxu0
        %1429 = vmatpush.msra.mxu0 0.0
        %1430 = vmatpush.msra.mxu0 0.0
        %1431 = vmatpush.msra.mxu0 0.0
        %1432 = vmatpush.msra.mxu0 0.0
        %1433 = vmatpush.msra.mxu0 0.0
        %1434 = vmatpush.msra.mxu0 0.0
        %1435 = vmatpush.msra.mxu0 0.0
        %1436 = vmatpush.msra.mxu0 0.0
        %1437 = vmatpush.msra.mxu0 0.0
        %1438 = vmatpush.msra.mxu0 0.0
        %1439 = vmatpush.msra.mxu0 0.0
        %1440 = vmatpush.msra.mxu0 0.0
        %1441 = vmatpush.msra.mxu0 %v1340
        %1442 = vmatpush.msra.mxu0 %v1309
        %1443 = vmatpush.msra.mxu0 %v1305
        %1444 = vmatpush.msra.mxu0 %v1301
        %1445 = vmatmul.f32.gmra.mxu0 %v1322
        %v1446 = vpop.f32.mrf.mxu0
        %v1447 = vadd.f32 0.0, %v1446
        %1448 = vmatmul.f32.gmra.mxu0 %v1324
        %v1449 = vpop.f32.mrf.mxu0
        %v1450 = vadd.f32 0.0, %v1449
        %1451 = vmatmul.f32.gmra.mxu0 %v1326
        %v1452 = vpop.f32.mrf.mxu0
        %v1453 = vadd.f32 0.0, %v1452
        %1454 = vmatmul.f32.gmra.mxu0 %v1328
        %v1455 = vpop.f32.mrf.mxu0
        %v1456 = vadd.f32 0.0, %v1455
        %1457 = vdwg.mxu0
        %v1458 = vadd.f32 %v1281, %v1360
        %v1459 = vadd.f32 %v1282, %v1389
        %v1460 = vadd.f32 %v1283, %v1418
        %v1461 = vadd.f32 %v1284, %v1447
        %v1462 = vadd.f32 %v1285, %v1363
        %v1463 = vadd.f32 %v1286, %v1392
        %v1464 = vadd.f32 %v1287, %v1421
        %v1465 = vadd.f32 %v1288, %v1450
        %v1466 = vadd.f32 %v1289, %v1366
        %v1467 = vadd.f32 %v1290, %v1395
        %v1468 = vadd.f32 %v1291, %v1424
        %v1469 = vadd.f32 %v1292, %v1453
        %v1470 = vadd.f32 %v1293, %v1369
        %v1471 = vadd.f32 %v1294, %v1398
        %v1472 = vadd.f32 %v1295, %v1427
        %v1473 = vadd.f32 %v1296, %v1456
        %s1474 = scalar_lea.vmem [#allocation2], 512
        %v1475 = vld [vmem:[%s1474] sm:$0xff]
        %v1476 = vld [vmem:[%s1474 + $0x8] sm:$0xff]
        %v1477 = vld [vmem:[%s1474 + $0x10] sm:$0xff]
        %v1478 = vld [vmem:[%s1474 + $0x18] sm:$0xff]
        %v1479 = vld [vmem:[%s1474 + $0x20] sm:$0xff]
        %v1480 = vld [vmem:[%s1474 + $0x28] sm:$0xff]
        %v1481 = vld [vmem:[%s1474 + $0x30] sm:$0xff]
        %v1482 = vld [vmem:[%s1474 + $0x38] sm:$0xff]
        %v1483 = vld [vmem:[%s1474 + $0x40] sm:$0xff]
        %v1484 = vld [vmem:[%s1474 + $0x48] sm:$0xff]
        %v1485 = vld [vmem:[%s1474 + $0x50] sm:$0xff]
        %v1486 = vld [vmem:[%s1474 + $0x58] sm:$0xff]
        %v1487 = vld [vmem:[%s1474 + $0x60] sm:$0xf]
        %v1488 = vld [vmem:[%s1474 + $0x68] sm:$0xf]
        %v1489 = vld [vmem:[%s1474 + $0x70] sm:$0xf]
        %v1490 = vld [vmem:[%s1474 + $0x78] sm:$0xf]
        %v1491 = vrot.slane %v797, 4
        %v1492 = vrot.slane %v798, 4
        %v1493 = vsel %vm855, %v1491, %v1492
        %v1494 = vrot.slane %v799, 4
        %v1495 = vsel %vm855, %v1492, %v1494
        %v1496 = vrot.slane %v800, 4
        %v1497 = vsel %vm855, %v1494, %v1496
        %v1498 = vsel %vm846, %v1493, 0
        %v1500 = vsel %vm846, %v1495, 0
        %v1502 = vsel %vm846, %v1497, 0
        %v1504 = vsel %vm846, %v1496, 0
        %v1507 = vsel %vm855, %v1487, 0
        %v1510 = vsel %vm855, %v1488, 0
        %v1513 = vsel %vm855, %v1489, 0
        %v1516 = vsel %vm855, %v1490, 0
        %1518 = vmatpush.msra.mxu0 0.0
        %1519 = vmatpush.msra.mxu0 0.0
        %1520 = vmatpush.msra.mxu0 0.0
        %1521 = vmatpush.msra.mxu0 0.0
        %1522 = vmatpush.msra.mxu0 0.0
        %1523 = vmatpush.msra.mxu0 0.0
        %1524 = vmatpush.msra.mxu0 0.0
        %1525 = vmatpush.msra.mxu0 0.0
        %1526 = vmatpush.msra.mxu0 0.0
        %1527 = vmatpush.msra.mxu0 0.0
        %1528 = vmatpush.msra.mxu0 0.0
        %1529 = vmatpush.msra.mxu0 0.0
        %1530 = vmatpush.msra.mxu0 %v1507
        %1531 = vmatpush.msra.mxu0 %v1483
        %1532 = vmatpush.msra.mxu0 %v1479
        %1533 = vmatpush.msra.mxu0 %v1475
        %1534 = vmatmul.f32.gmra.mxu0 %v1498
        %v1535 = vpop.f32.mrf.mxu0
        %v1536 = vadd.f32 0.0, %v1535
        %1537 = vmatmul.f32.gmra.mxu0 %v1500
        %v1538 = vpop.f32.mrf.mxu0
        %v1539 = vadd.f32 0.0, %v1538
        %1540 = vmatmul.f32.gmra.mxu0 %v1502
        %v1541 = vpop.f32.mrf.mxu0
        %v1542 = vadd.f32 0.0, %v1541
        %1543 = vmatmul.f32.gmra.mxu0 %v1504
        %v1544 = vpop.f32.mrf.mxu0
        %v1545 = vadd.f32 0.0, %v1544
        %1546 = vdwg.mxu0
        %1547 = vmatpush.msra.mxu0 0.0
        %1548 = vmatpush.msra.mxu0 0.0
        %1549 = vmatpush.msra.mxu0 0.0
        %1550 = vmatpush.msra.mxu0 0.0
        %1551 = vmatpush.msra.mxu0 0.0
        %1552 = vmatpush.msra.mxu0 0.0
        %1553 = vmatpush.msra.mxu0 0.0
        %1554 = vmatpush.msra.mxu0 0.0
        %1555 = vmatpush.msra.mxu0 0.0
        %1556 = vmatpush.msra.mxu0 0.0
        %1557 = vmatpush.msra.mxu0 0.0
        %1558 = vmatpush.msra.mxu0 0.0
        %1559 = vmatpush.msra.mxu0 %v1510
        %1560 = vmatpush.msra.mxu0 %v1484
        %1561 = vmatpush.msra.mxu0 %v1480
        %1562 = vmatpush.msra.mxu0 %v1476
        %1563 = vmatmul.f32.gmra.mxu0 %v1498
        %v1564 = vpop.f32.mrf.mxu0
        %v1565 = vadd.f32 0.0, %v1564
        %1566 = vmatmul.f32.gmra.mxu0 %v1500
        %v1567 = vpop.f32.mrf.mxu0
        %v1568 = vadd.f32 0.0, %v1567
        %1569 = vmatmul.f32.gmra.mxu0 %v1502
        %v1570 = vpop.f32.mrf.mxu0
        %v1571 = vadd.f32 0.0, %v1570
        %1572 = vmatmul.f32.gmra.mxu0 %v1504
        %v1573 = vpop.f32.mrf.mxu0
        %v1574 = vadd.f32 0.0, %v1573
        %1575 = vdwg.mxu0
        %1576 = vmatpush.msra.mxu0 0.0
        %1577 = vmatpush.msra.mxu0 0.0
        %1578 = vmatpush.msra.mxu0 0.0
        %1579 = vmatpush.msra.mxu0 0.0
        %1580 = vmatpush.msra.mxu0 0.0
        %1581 = vmatpush.msra.mxu0 0.0
        %1582 = vmatpush.msra.mxu0 0.0
        %1583 = vmatpush.msra.mxu0 0.0
        %1584 = vmatpush.msra.mxu0 0.0
        %1585 = vmatpush.msra.mxu0 0.0
        %1586 = vmatpush.msra.mxu0 0.0
        %1587 = vmatpush.msra.mxu0 0.0
        %1588 = vmatpush.msra.mxu0 %v1513
        %1589 = vmatpush.msra.mxu0 %v1485
        %1590 = vmatpush.msra.mxu0 %v1481
        %1591 = vmatpush.msra.mxu0 %v1477
        %1592 = vmatmul.f32.gmra.mxu0 %v1498
        %v1593 = vpop.f32.mrf.mxu0
        %v1594 = vadd.f32 0.0, %v1593
        %1595 = vmatmul.f32.gmra.mxu0 %v1500
        %v1596 = vpop.f32.mrf.mxu0
        %v1597 = vadd.f32 0.0, %v1596
        %1598 = vmatmul.f32.gmra.mxu0 %v1502
        %v1599 = vpop.f32.mrf.mxu0
        %v1600 = vadd.f32 0.0, %v1599
        %1601 = vmatmul.f32.gmra.mxu0 %v1504
        %v1602 = vpop.f32.mrf.mxu0
        %v1603 = vadd.f32 0.0, %v1602
        %1604 = vdwg.mxu0
        %1605 = vmatpush.msra.mxu0 0.0
        %1606 = vmatpush.msra.mxu0 0.0
        %1607 = vmatpush.msra.mxu0 0.0
        %1608 = vmatpush.msra.mxu0 0.0
        %1609 = vmatpush.msra.mxu0 0.0
        %1610 = vmatpush.msra.mxu0 0.0
        %1611 = vmatpush.msra.mxu0 0.0
        %1612 = vmatpush.msra.mxu0 0.0
        %1613 = vmatpush.msra.mxu0 0.0
        %1614 = vmatpush.msra.mxu0 0.0
        %1615 = vmatpush.msra.mxu0 0.0
        %1616 = vmatpush.msra.mxu0 0.0
        %1617 = vmatpush.msra.mxu0 %v1516
        %1618 = vmatpush.msra.mxu0 %v1486
        %1619 = vmatpush.msra.mxu0 %v1482
        %1620 = vmatpush.msra.mxu0 %v1478
        %1621 = vmatmul.f32.gmra.mxu0 %v1498
        %v1622 = vpop.f32.mrf.mxu0
        %v1623 = vadd.f32 0.0, %v1622
        %1624 = vmatmul.f32.gmra.mxu0 %v1500
        %v1625 = vpop.f32.mrf.mxu0
        %v1626 = vadd.f32 0.0, %v1625
        %1627 = vmatmul.f32.gmra.mxu0 %v1502
        %v1628 = vpop.f32.mrf.mxu0
        %v1629 = vadd.f32 0.0, %v1628
        %1630 = vmatmul.f32.gmra.mxu0 %v1504
        %v1631 = vpop.f32.mrf.mxu0
        %v1632 = vadd.f32 0.0, %v1631
        %1633 = vdwg.mxu0
        %v1634 = vadd.f32 %v1458, %v1536
        %v1635 = vadd.f32 %v1459, %v1565
        %v1636 = vadd.f32 %v1460, %v1594
        %v1637 = vadd.f32 %v1461, %v1623
        %v1638 = vadd.f32 %v1462, %v1539
        %v1639 = vadd.f32 %v1463, %v1568
        %v1640 = vadd.f32 %v1464, %v1597
        %v1641 = vadd.f32 %v1465, %v1626
        %v1642 = vadd.f32 %v1466, %v1542
        %v1643 = vadd.f32 %v1467, %v1571
        %v1644 = vadd.f32 %v1468, %v1600
        %v1645 = vadd.f32 %v1469, %v1629
        %v1646 = vadd.f32 %v1470, %v1545
        %v1647 = vadd.f32 %v1471, %v1574
        %v1648 = vadd.f32 %v1472, %v1603
        %v1649 = vadd.f32 %v1473, %v1632
        %v1650 = vld [vmem:[#allocation5] sm:$0xf]
        %v1652 = vperm.slane %v1650, 0
        %v1653 = vperm.slane %v1650, 1
        %v1654 = vperm.slane %v1650, 2
        %v1655 = vperm.slane %v1650, 3
        %v1660 = vmul.f32 %v1634, %v1652
        %v1661 = vmul.f32 %v1635, %v1653
        %v1662 = vmul.f32 %v1636, %v1654
        %v1663 = vmul.f32 %v1637, %v1655
        %v1664 = vmul.f32 %v1638, %v1652
        %v1665 = vmul.f32 %v1639, %v1653
        %v1666 = vmul.f32 %v1640, %v1654
        %v1667 = vmul.f32 %v1641, %v1655
        %v1668 = vmul.f32 %v1642, %v1652
        %v1669 = vmul.f32 %v1643, %v1653
        %v1670 = vmul.f32 %v1644, %v1654
        %v1671 = vmul.f32 %v1645, %v1655
        %v1672 = vmul.f32 %v1646, %v1652
        %v1673 = vmul.f32 %v1647, %v1653
        %v1674 = vmul.f32 %v1648, %v1654
        %v1675 = vmul.f32 %v1649, %v1655
        %v1676 = vld [vmem:[#allocation7] sm:$0xf]
        %v1678 = vperm.slane %v1676, 0
        %v1679 = vperm.slane %v1676, 1
        %v1680 = vperm.slane %v1676, 2
        %v1681 = vperm.slane %v1676, 3
        %v1686 = vadd.f32 %v1660, %v1678
        %v1687 = vadd.f32 %v1661, %v1679
        %v1688 = vadd.f32 %v1662, %v1680
        %v1689 = vadd.f32 %v1663, %v1681
        %v1690 = vadd.f32 %v1664, %v1678
        %v1691 = vadd.f32 %v1665, %v1679
        %v1692 = vadd.f32 %v1666, %v1680
        %v1693 = vadd.f32 %v1667, %v1681
        %v1694 = vadd.f32 %v1668, %v1678
        %v1695 = vadd.f32 %v1669, %v1679
        %v1696 = vadd.f32 %v1670, %v1680
        %v1697 = vadd.f32 %v1671, %v1681
        %v1698 = vadd.f32 %v1672, %v1678
        %v1699 = vadd.f32 %v1673, %v1679
        %v1700 = vadd.f32 %v1674, %v1680
        %v1701 = vadd.f32 %v1675, %v1681
        %v1702 = vmax.f32 %v1686, 0.0
        %v1703 = vmax.f32 %v1687, 0.0
        %v1704 = vmax.f32 %v1688, 0.0
        %v1705 = vmax.f32 %v1689, 0.0
        %v1706 = vmax.f32 %v1690, 0.0
        %v1707 = vmax.f32 %v1691, 0.0
        %v1708 = vmax.f32 %v1692, 0.0
        %v1709 = vmax.f32 %v1693, 0.0
        %v1710 = vmax.f32 %v1694, 0.0
        %v1711 = vmax.f32 %v1695, 0.0
        %v1712 = vmax.f32 %v1696, 0.0
        %v1713 = vmax.f32 %v1697, 0.0
        %v1714 = vmax.f32 %v1698, 0.0
        %v1715 = vmax.f32 %v1699, 0.0
        %v1716 = vmax.f32 %v1700, 0.0
        %v1717 = vmax.f32 %v1701, 0.0
        %v1718 = vld [vmem:[#allocation8] sm:$0xff]
        %v1719 = vld [vmem:[#allocation8 + $0x8] sm:$0xff]
        %v1720 = vld [vmem:[#allocation8 + $0x10] sm:$0xff]
        %v1721 = vld [vmem:[#allocation8 + $0x18] sm:$0xff]
        %v1722 = vld [vmem:[#allocation8 + $0x20] sm:$0xff]
        %v1723 = vld [vmem:[#allocation8 + $0x28] sm:$0xff]
        %v1724 = vld [vmem:[#allocation8 + $0x30] sm:$0xff]
        %v1725 = vld [vmem:[#allocation8 + $0x38] sm:$0xff]
        %v1726 = vld [vmem:[#allocation8 + $0x40] sm:$0xff]
        %v1727 = vld [vmem:[#allocation8 + $0x48] sm:$0xff]
        %v1728 = vld [vmem:[#allocation8 + $0x50] sm:$0xff]
        %v1729 = vld [vmem:[#allocation8 + $0x58] sm:$0xff]
        %v1730 = vld [vmem:[#allocation8 + $0x60] sm:$0xff]
        %v1731 = vld [vmem:[#allocation8 + $0x68] sm:$0xff]
        %v1732 = vld [vmem:[#allocation8 + $0x70] sm:$0xff]
        %v1733 = vld [vmem:[#allocation8 + $0x78] sm:$0xff]
        %v1734 = vld [vmem:[#allocation8 + $0x80] sm:$0xff]
        %v1735 = vld [vmem:[#allocation8 + $0x88] sm:$0xff]
        %v1736 = vld [vmem:[#allocation8 + $0x90] sm:$0xff]
        %v1737 = vld [vmem:[#allocation8 + $0x98] sm:$0xff]
        %v1738 = vld [vmem:[#allocation8 + $0xa0] sm:$0xff]
        %v1739 = vld [vmem:[#allocation8 + $0xa8] sm:$0xff]
        %v1740 = vld [vmem:[#allocation8 + $0xb0] sm:$0xff]
        %v1741 = vld [vmem:[#allocation8 + $0xb8] sm:$0xff]
        %v1742 = vld [vmem:[#allocation8 + $0xc0] sm:$0xff]
        %v1743 = vld [vmem:[#allocation8 + $0xc8] sm:$0xff]
        %v1744 = vld [vmem:[#allocation8 + $0xd0] sm:$0xff]
        %v1745 = vld [vmem:[#allocation8 + $0xd8] sm:$0xff]
        %v1746 = vld [vmem:[#allocation8 + $0xe0] sm:$0xff]
        %v1747 = vld [vmem:[#allocation8 + $0xe8] sm:$0xff]
        %v1748 = vld [vmem:[#allocation8 + $0xf0] sm:$0xff]
        %v1749 = vld [vmem:[#allocation8 + $0xf8] sm:$0xff]
        %v1750 = vld [vmem:[#allocation8 + $0x100] sm:$0xff]
        %v1751 = vld [vmem:[#allocation8 + $0x108] sm:$0xff]
        %v1752 = vld [vmem:[#allocation8 + $0x110] sm:$0xff]
        %v1753 = vld [vmem:[#allocation8 + $0x118] sm:$0xff]
        %v1754 = vld [vmem:[#allocation8 + $0x120] sm:$0xff]
        %v1755 = vld [vmem:[#allocation8 + $0x128] sm:$0xff]
        %v1756 = vld [vmem:[#allocation8 + $0x130] sm:$0xff]
        %v1757 = vld [vmem:[#allocation8 + $0x138] sm:$0xff]
        %v1758 = vld [vmem:[#allocation8 + $0x140] sm:$0xff]
        %v1759 = vld [vmem:[#allocation8 + $0x148] sm:$0xff]
        %v1760 = vld [vmem:[#allocation8 + $0x150] sm:$0xff]
        %v1761 = vld [vmem:[#allocation8 + $0x158] sm:$0xff]
        %v1762 = vld [vmem:[#allocation8 + $0x160] sm:$0xff]
        %v1763 = vld [vmem:[#allocation8 + $0x168] sm:$0xff]
        %v1764 = vld [vmem:[#allocation8 + $0x170] sm:$0xff]
        %v1765 = vld [vmem:[#allocation8 + $0x178] sm:$0xff]
        %v1766 = vld [vmem:[#allocation8 + $0x180] sm:$0xff]
        %v1767 = vld [vmem:[#allocation8 + $0x188] sm:$0xff]
        %v1768 = vld [vmem:[#allocation8 + $0x190] sm:$0xff]
        %v1769 = vld [vmem:[#allocation8 + $0x198] sm:$0xff]
        %v1770 = vld [vmem:[#allocation8 + $0x1a0] sm:$0xff]
        %v1771 = vld [vmem:[#allocation8 + $0x1a8] sm:$0xff]
        %v1772 = vld [vmem:[#allocation8 + $0x1b0] sm:$0xff]
        %v1773 = vld [vmem:[#allocation8 + $0x1b8] sm:$0xff]
        %v1774 = vld [vmem:[#allocation8 + $0x1c0] sm:$0xff]
        %v1775 = vld [vmem:[#allocation8 + $0x1c8] sm:$0xff]
        %v1776 = vld [vmem:[#allocation8 + $0x1d0] sm:$0xff]
        %v1777 = vld [vmem:[#allocation8 + $0x1d8] sm:$0xff]
        %v1778 = vld [vmem:[#allocation8 + $0x1e0] sm:$0xff]
        %v1779 = vld [vmem:[#allocation8 + $0x1e8] sm:$0xff]
        %v1780 = vld [vmem:[#allocation8 + $0x1f0] sm:$0xff]
        %v1781 = vld [vmem:[#allocation8 + $0x1f8] sm:$0xff]
        %v1782 = vld [vmem:[#allocation8 + $0x200] sm:$0xff]
        %v1783 = vld [vmem:[#allocation8 + $0x208] sm:$0xff]
        %v1784 = vld [vmem:[#allocation8 + $0x210] sm:$0xff]
        %v1785 = vld [vmem:[#allocation8 + $0x218] sm:$0xff]
        %v1786 = vld [vmem:[#allocation8 + $0x220] sm:$0xff]
        %v1787 = vld [vmem:[#allocation8 + $0x228] sm:$0xff]
        %v1788 = vld [vmem:[#allocation8 + $0x230] sm:$0xff]
        %v1789 = vld [vmem:[#allocation8 + $0x238] sm:$0xff]
        %v1790 = vld [vmem:[#allocation8 + $0x240] sm:$0xff]
        %v1791 = vld [vmem:[#allocation8 + $0x248] sm:$0xff]
        %v1792 = vld [vmem:[#allocation8 + $0x250] sm:$0xff]
        %v1793 = vld [vmem:[#allocation8 + $0x258] sm:$0xff]
        %v1794 = vld [vmem:[#allocation8 + $0x260] sm:$0xff]
        %v1795 = vld [vmem:[#allocation8 + $0x268] sm:$0xff]
        %v1796 = vld [vmem:[#allocation8 + $0x270] sm:$0xff]
        %v1797 = vld [vmem:[#allocation8 + $0x278] sm:$0xff]
        %v1798 = vld [vmem:[#allocation8 + $0x280] sm:$0xff]
        %v1799 = vld [vmem:[#allocation8 + $0x288] sm:$0xff]
        %v1800 = vld [vmem:[#allocation8 + $0x290] sm:$0xff]
        %v1801 = vld [vmem:[#allocation8 + $0x298] sm:$0xff]
        %v1802 = vld [vmem:[#allocation8 + $0x2a0] sm:$0xff]
        %v1803 = vld [vmem:[#allocation8 + $0x2a8] sm:$0xff]
        %v1804 = vld [vmem:[#allocation8 + $0x2b0] sm:$0xff]
        %v1805 = vld [vmem:[#allocation8 + $0x2b8] sm:$0xff]
        %v1806 = vld [vmem:[#allocation8 + $0x2c0] sm:$0xff]
        %v1807 = vld [vmem:[#allocation8 + $0x2c8] sm:$0xff]
        %v1808 = vld [vmem:[#allocation8 + $0x2d0] sm:$0xff]
        %v1809 = vld [vmem:[#allocation8 + $0x2d8] sm:$0xff]
        %v1810 = vld [vmem:[#allocation8 + $0x2e0] sm:$0xff]
        %v1811 = vld [vmem:[#allocation8 + $0x2e8] sm:$0xff]
        %v1812 = vld [vmem:[#allocation8 + $0x2f0] sm:$0xff]
        %v1813 = vld [vmem:[#allocation8 + $0x2f8] sm:$0xff]
        %v1814 = vld [vmem:[#allocation8 + $0x300] sm:$0xff]
        %v1815 = vld [vmem:[#allocation8 + $0x308] sm:$0xff]
        %v1816 = vld [vmem:[#allocation8 + $0x310] sm:$0xff]
        %v1817 = vld [vmem:[#allocation8 + $0x318] sm:$0xff]
        %v1818 = vld [vmem:[#allocation8 + $0x320] sm:$0xff]
        %v1819 = vld [vmem:[#allocation8 + $0x328] sm:$0xff]
        %v1820 = vld [vmem:[#allocation8 + $0x330] sm:$0xff]
        %v1821 = vld [vmem:[#allocation8 + $0x338] sm:$0xff]
        %v1822 = vld [vmem:[#allocation8 + $0x340] sm:$0xff]
        %v1823 = vld [vmem:[#allocation8 + $0x348] sm:$0xff]
        %v1824 = vld [vmem:[#allocation8 + $0x350] sm:$0xff]
        %v1825 = vld [vmem:[#allocation8 + $0x358] sm:$0xff]
        %v1826 = vld [vmem:[#allocation8 + $0x360] sm:$0xff]
        %v1827 = vld [vmem:[#allocation8 + $0x368] sm:$0xff]
        %v1828 = vld [vmem:[#allocation8 + $0x370] sm:$0xff]
        %v1829 = vld [vmem:[#allocation8 + $0x378] sm:$0xff]
        %vm1830 = vcmask 523264
        %v1832 = vsel %vm1830, %v1705, 0
        %v1835 = vsel %vm1830, %v1709, 0
        %v1838 = vsel %vm1830, %v1713, 0
        %v1841 = vsel %vm1830, %v1717, 0
        %1843 = vmatpush.msra.mxu0 %v1748
        %1844 = vmatpush.msra.mxu0 %v1746
        %1845 = vmatpush.msra.mxu0 %v1744
        %1846 = vmatpush.msra.mxu0 %v1742
        %1847 = vmatpush.msra.mxu0 %v1740
        %1848 = vmatpush.msra.mxu0 %v1738
        %1849 = vmatpush.msra.mxu0 %v1736
        %1850 = vmatpush.msra.mxu0 %v1734
        %1851 = vmatpush.msra.mxu0 %v1732
        %1852 = vmatpush.msra.mxu0 %v1730
        %1853 = vmatpush.msra.mxu0 %v1728
        %1854 = vmatpush.msra.mxu0 %v1726
        %1855 = vmatpush.msra.mxu0 %v1724
        %1856 = vmatpush.msra.mxu0 %v1722
        %1857 = vmatpush.msra.mxu0 %v1720
        %1858 = vmatpush.msra.mxu0 %v1718
        %1859 = vmatmul.f32.gmra.mxu0 %v1702
        %v1860 = vpop.f32.mrf.mxu0
        %v1861 = vadd.f32 0.0, %v1860
        %1862 = vmatmul.f32.gmra.mxu0 %v1706
        %v1863 = vpop.f32.mrf.mxu0
        %v1864 = vadd.f32 0.0, %v1863
        %1865 = vmatmul.f32.gmra.mxu0 %v1710
        %v1866 = vpop.f32.mrf.mxu0
        %v1867 = vadd.f32 0.0, %v1866
        %1868 = vmatmul.f32.gmra.mxu0 %v1714
        %v1869 = vpop.f32.mrf.mxu0
        %v1870 = vadd.f32 0.0, %v1869
        %1871 = vdwg.mxu0
        %1872 = vmatpush.msra.mxu0 %v1780
        %1873 = vmatpush.msra.mxu0 %v1778
        %1874 = vmatpush.msra.mxu0 %v1776
        %1875 = vmatpush.msra.mxu0 %v1774
        %1876 = vmatpush.msra.mxu0 %v1772
        %1877 = vmatpush.msra.mxu0 %v1770
        %1878 = vmatpush.msra.mxu0 %v1768
        %1879 = vmatpush.msra.mxu0 %v1766
        %1880 = vmatpush.msra.mxu0 %v1764
        %1881 = vmatpush.msra.mxu0 %v1762
        %1882 = vmatpush.msra.mxu0 %v1760
        %1883 = vmatpush.msra.mxu0 %v1758
        %1884 = vmatpush.msra.mxu0 %v1756
        %1885 = vmatpush.msra.mxu0 %v1754
        %1886 = vmatpush.msra.mxu0 %v1752
        %1887 = vmatpush.msra.mxu0 %v1750
        %1888 = vmatmul.f32.gmra.mxu0 %v1703
        %v1889 = vpop.f32.mrf.mxu0
        %v1890 = vadd.f32 %v1861, %v1889
        %1891 = vmatmul.f32.gmra.mxu0 %v1707
        %v1892 = vpop.f32.mrf.mxu0
        %v1893 = vadd.f32 %v1864, %v1892
        %1894 = vmatmul.f32.gmra.mxu0 %v1711
        %v1895 = vpop.f32.mrf.mxu0
        %v1896 = vadd.f32 %v1867, %v1895
        %1897 = vmatmul.f32.gmra.mxu0 %v1715
        %v1898 = vpop.f32.mrf.mxu0
        %v1899 = vadd.f32 %v1870, %v1898
        %1900 = vdwg.mxu0
        %1901 = vmatpush.msra.mxu0 %v1812
        %1902 = vmatpush.msra.mxu0 %v1810
        %1903 = vmatpush.msra.mxu0 %v1808
        %1904 = vmatpush.msra.mxu0 %v1806
        %1905 = vmatpush.msra.mxu0 %v1804
        %1906 = vmatpush.msra.mxu0 %v1802
        %1907 = vmatpush.msra.mxu0 %v1800
        %1908 = vmatpush.msra.mxu0 %v1798
        %1909 = vmatpush.msra.mxu0 %v1796
        %1910 = vmatpush.msra.mxu0 %v1794
        %1911 = vmatpush.msra.mxu0 %v1792
        %1912 = vmatpush.msra.mxu0 %v1790
        %1913 = vmatpush.msra.mxu0 %v1788
        %1914 = vmatpush.msra.mxu0 %v1786
        %1915 = vmatpush.msra.mxu0 %v1784
        %1916 = vmatpush.msra.mxu0 %v1782
        %1917 = vmatmul.f32.gmra.mxu0 %v1704
        %v1918 = vpop.f32.mrf.mxu0
        %v1919 = vadd.f32 %v1890, %v1918
        %1920 = vmatmul.f32.gmra.mxu0 %v1708
        %v1921 = vpop.f32.mrf.mxu0
        %v1922 = vadd.f32 %v1893, %v1921
        %1923 = vmatmul.f32.gmra.mxu0 %v1712
        %v1924 = vpop.f32.mrf.mxu0
        %v1925 = vadd.f32 %v1896, %v1924
        %1926 = vmatmul.f32.gmra.mxu0 %v1716
        %v1927 = vpop.f32.mrf.mxu0
        %v1928 = vadd.f32 %v1899, %v1927
        %1929 = vdwg.mxu0
        %1930 = vmatpush.msra.mxu0 0.0
        %1931 = vmatpush.msra.mxu0 0.0
        %1932 = vmatpush.msra.mxu0 0.0
        %1933 = vmatpush.msra.mxu0 0.0
        %1934 = vmatpush.msra.mxu0 0.0
        %1935 = vmatpush.msra.mxu0 0.0
        %1936 = vmatpush.msra.mxu0 0.0
        %1937 = vmatpush.msra.mxu0 0.0
        %1938 = vmatpush.msra.mxu0 %v1828
        %1939 = vmatpush.msra.mxu0 %v1826
        %1940 = vmatpush.msra.mxu0 %v1824
        %1941 = vmatpush.msra.mxu0 %v1822
        %1942 = vmatpush.msra.mxu0 %v1820
        %1943 = vmatpush.msra.mxu0 %v1818
        %1944 = vmatpush.msra.mxu0 %v1816
        %1945 = vmatpush.msra.mxu0 %v1814
        %1946 = vmatmul.f32.gmra.mxu0 %v1832
        %v1947 = vpop.f32.mrf.mxu0
        %v1948 = vadd.f32 %v1919, %v1947
        %1949 = vmatmul.f32.gmra.mxu0 %v1835
        %v1950 = vpop.f32.mrf.mxu0
        %v1951 = vadd.f32 %v1922, %v1950
        %1952 = vmatmul.f32.gmra.mxu0 %v1838
        %v1953 = vpop.f32.mrf.mxu0
        %v1954 = vadd.f32 %v1925, %v1953
        %1955 = vmatmul.f32.gmra.mxu0 %v1841
        %v1956 = vpop.f32.mrf.mxu0
        %v1957 = vadd.f32 %v1928, %v1956
        %1958 = vdwg.mxu0
        %1959 = vmatpush.msra.mxu0 %v1749
        %1960 = vmatpush.msra.mxu0 %v1747
        %1961 = vmatpush.msra.mxu0 %v1745
        %1962 = vmatpush.msra.mxu0 %v1743
        %1963 = vmatpush.msra.mxu0 %v1741
        %1964 = vmatpush.msra.mxu0 %v1739
        %1965 = vmatpush.msra.mxu0 %v1737
        %1966 = vmatpush.msra.mxu0 %v1735
        %1967 = vmatpush.msra.mxu0 %v1733
        %1968 = vmatpush.msra.mxu0 %v1731
        %1969 = vmatpush.msra.mxu0 %v1729
        %1970 = vmatpush.msra.mxu0 %v1727
        %1971 = vmatpush.msra.mxu0 %v1725
        %1972 = vmatpush.msra.mxu0 %v1723
        %1973 = vmatpush.msra.mxu0 %v1721
        %1974 = vmatpush.msra.mxu0 %v1719
        %1975 = vmatmul.f32.gmra.mxu0 %v1702
        %v1976 = vpop.f32.mrf.mxu0
        %v1977 = vadd.f32 0.0, %v1976
        %1978 = vmatmul.f32.gmra.mxu0 %v1706
        %v1979 = vpop.f32.mrf.mxu0
        %v1980 = vadd.f32 0.0, %v1979
        %1981 = vmatmul.f32.gmra.mxu0 %v1710
        %v1982 = vpop.f32.mrf.mxu0
        %v1983 = vadd.f32 0.0, %v1982
        %1984 = vmatmul.f32.gmra.mxu0 %v1714
        %v1985 = vpop.f32.mrf.mxu0
        %v1986 = vadd.f32 0.0, %v1985
        %1987 = vdwg.mxu0
        %1988 = vmatpush.msra.mxu0 %v1781
        %1989 = vmatpush.msra.mxu0 %v1779
        %1990 = vmatpush.msra.mxu0 %v1777
        %1991 = vmatpush.msra.mxu0 %v1775
        %1992 = vmatpush.msra.mxu0 %v1773
        %1993 = vmatpush.msra.mxu0 %v1771
        %1994 = vmatpush.msra.mxu0 %v1769
        %1995 = vmatpush.msra.mxu0 %v1767
        %1996 = vmatpush.msra.mxu0 %v1765
        %1997 = vmatpush.msra.mxu0 %v1763
        %1998 = vmatpush.msra.mxu0 %v1761
        %1999 = vmatpush.msra.mxu0 %v1759
        %2000 = vmatpush.msra.mxu0 %v1757
        %2001 = vmatpush.msra.mxu0 %v1755
        %2002 = vmatpush.msra.mxu0 %v1753
        %2003 = vmatpush.msra.mxu0 %v1751
        %2004 = vmatmul.f32.gmra.mxu0 %v1703
        %v2005 = vpop.f32.mrf.mxu0
        %v2006 = vadd.f32 %v1977, %v2005
        %2007 = vmatmul.f32.gmra.mxu0 %v1707
        %v2008 = vpop.f32.mrf.mxu0
        %v2009 = vadd.f32 %v1980, %v2008
        %2010 = vmatmul.f32.gmra.mxu0 %v1711
        %v2011 = vpop.f32.mrf.mxu0
        %v2012 = vadd.f32 %v1983, %v2011
        %2013 = vmatmul.f32.gmra.mxu0 %v1715
        %v2014 = vpop.f32.mrf.mxu0
        %v2015 = vadd.f32 %v1986, %v2014
        %2016 = vdwg.mxu0
        %2017 = vmatpush.msra.mxu0 %v1813
        %2018 = vmatpush.msra.mxu0 %v1811
        %2019 = vmatpush.msra.mxu0 %v1809
        %2020 = vmatpush.msra.mxu0 %v1807
        %2021 = vmatpush.msra.mxu0 %v1805
        %2022 = vmatpush.msra.mxu0 %v1803
        %2023 = vmatpush.msra.mxu0 %v1801
        %2024 = vmatpush.msra.mxu0 %v1799
        %2025 = vmatpush.msra.mxu0 %v1797
        %2026 = vmatpush.msra.mxu0 %v1795
        %2027 = vmatpush.msra.mxu0 %v1793
        %2028 = vmatpush.msra.mxu0 %v1791
        %2029 = vmatpush.msra.mxu0 %v1789
        %2030 = vmatpush.msra.mxu0 %v1787
        %2031 = vmatpush.msra.mxu0 %v1785
        %2032 = vmatpush.msra.mxu0 %v1783
        %2033 = vmatmul.f32.gmra.mxu0 %v1704
        %v2034 = vpop.f32.mrf.mxu0
        %v2035 = vadd.f32 %v2006, %v2034
        %2036 = vmatmul.f32.gmra.mxu0 %v1708
        %v2037 = vpop.f32.mrf.mxu0
        %v2038 = vadd.f32 %v2009, %v2037
        %2039 = vmatmul.f32.gmra.mxu0 %v1712
        %v2040 = vpop.f32.mrf.mxu0
        %v2041 = vadd.f32 %v2012, %v2040
        %2042 = vmatmul.f32.gmra.mxu0 %v1716
        %v2043 = vpop.f32.mrf.mxu0
        %v2044 = vadd.f32 %v2015, %v2043
        %2045 = vdwg.mxu0
        %2046 = vmatpush.msra.mxu0 0.0
        %2047 = vmatpush.msra.mxu0 0.0
        %2048 = vmatpush.msra.mxu0 0.0
        %2049 = vmatpush.msra.mxu0 0.0
        %2050 = vmatpush.msra.mxu0 0.0
        %2051 = vmatpush.msra.mxu0 0.0
        %2052 = vmatpush.msra.mxu0 0.0
        %2053 = vmatpush.msra.mxu0 0.0
        %2054 = vmatpush.msra.mxu0 %v1829
        %2055 = vmatpush.msra.mxu0 %v1827
        %2056 = vmatpush.msra.mxu0 %v1825
        %2057 = vmatpush.msra.mxu0 %v1823
        %2058 = vmatpush.msra.mxu0 %v1821
        %2059 = vmatpush.msra.mxu0 %v1819
        %2060 = vmatpush.msra.mxu0 %v1817
        %2061 = vmatpush.msra.mxu0 %v1815
        %2062 = vmatmul.f32.gmra.mxu0 %v1832
        %v2063 = vpop.f32.mrf.mxu0
        %v2064 = vadd.f32 %v2035, %v2063
        %2065 = vmatmul.f32.gmra.mxu0 %v1835
        %v2066 = vpop.f32.mrf.mxu0
        %v2067 = vadd.f32 %v2038, %v2066
        %2068 = vmatmul.f32.gmra.mxu0 %v1838
        %v2069 = vpop.f32.mrf.mxu0
        %v2070 = vadd.f32 %v2041, %v2069
        %2071 = vmatmul.f32.gmra.mxu0 %v1841
        %v2072 = vpop.f32.mrf.mxu0
        %v2073 = vadd.f32 %v2044, %v2072
        %2074 = vdwg.mxu0
        %v2075 = vld [vmem:[#allocation10] sm:$0xff]
        %v2076 = vld [vmem:[#allocation10 + $0x8] sm:$0xff]
        %v2077 = vld [vmem:[#allocation10 + $0x10] sm:$0xff]
        %v2078 = vld [vmem:[#allocation10 + $0x18] sm:$0xff]
        %v2079 = vld [vmem:[#allocation10 + $0x20] sm:$0xff]
        %v2080 = vld [vmem:[#allocation10 + $0x28] sm:$0xff]
        %v2081 = vld [vmem:[#allocation10 + $0x30] sm:$0xff]
        %v2082 = vld [vmem:[#allocation10 + $0x38] sm:$0xff]
        %v2083 = vld [vmem:[#allocation10 + $0x40] sm:$0xff]
        %v2084 = vld [vmem:[#allocation10 + $0x48] sm:$0xff]
        %v2085 = vld [vmem:[#allocation10 + $0x50] sm:$0xff]
        %v2086 = vld [vmem:[#allocation10 + $0x58] sm:$0xff]
        %v2087 = vld [vmem:[#allocation10 + $0x60] sm:$0xff]
        %v2088 = vld [vmem:[#allocation10 + $0x68] sm:$0xff]
        %v2089 = vld [vmem:[#allocation10 + $0x70] sm:$0xff]
        %v2090 = vld [vmem:[#allocation10 + $0x78] sm:$0xff]
        %v2091 = vld [vmem:[#allocation10 + $0x80] sm:$0xff]
        %v2092 = vld [vmem:[#allocation10 + $0x88] sm:$0xff]
        %v2093 = vld [vmem:[#allocation10 + $0x90] sm:$0xff]
        %v2094 = vld [vmem:[#allocation10 + $0x98] sm:$0xff]
        %v2095 = vld [vmem:[#allocation10 + $0xa0] sm:$0xff]
        %v2096 = vld [vmem:[#allocation10 + $0xa8] sm:$0xff]
        %v2097 = vld [vmem:[#allocation10 + $0xb0] sm:$0xff]
        %v2098 = vld [vmem:[#allocation10 + $0xb8] sm:$0xff]
        %v2099 = vld [vmem:[#allocation10 + $0xc0] sm:$0xff]
        %v2100 = vld [vmem:[#allocation10 + $0xc8] sm:$0xff]
        %v2101 = vld [vmem:[#allocation10 + $0xd0] sm:$0xff]
        %v2102 = vld [vmem:[#allocation10 + $0xd8] sm:$0xff]
        %v2103 = vld [vmem:[#allocation10 + $0xe0] sm:$0xff]
        %v2104 = vld [vmem:[#allocation10 + $0xe8] sm:$0xff]
        %v2105 = vld [vmem:[#allocation10 + $0xf0] sm:$0xff]
        %v2106 = vld [vmem:[#allocation10 + $0xf8] sm:$0xff]
        %v2107 = vld [vmem:[#allocation10 + $0x100] sm:$0xff]
        %v2108 = vld [vmem:[#allocation10 + $0x108] sm:$0xff]
        %v2109 = vld [vmem:[#allocation10 + $0x110] sm:$0xff]
        %v2110 = vld [vmem:[#allocation10 + $0x118] sm:$0xff]
        %v2111 = vld [vmem:[#allocation10 + $0x120] sm:$0xff]
        %v2112 = vld [vmem:[#allocation10 + $0x128] sm:$0xff]
        %v2113 = vld [vmem:[#allocation10 + $0x130] sm:$0xff]
        %v2114 = vld [vmem:[#allocation10 + $0x138] sm:$0xff]
        %v2115 = vld [vmem:[#allocation10 + $0x140] sm:$0xff]
        %v2116 = vld [vmem:[#allocation10 + $0x148] sm:$0xff]
        %v2117 = vld [vmem:[#allocation10 + $0x150] sm:$0xff]
        %v2118 = vld [vmem:[#allocation10 + $0x158] sm:$0xff]
        %v2119 = vld [vmem:[#allocation10 + $0x160] sm:$0xff]
        %v2120 = vld [vmem:[#allocation10 + $0x168] sm:$0xff]
        %v2121 = vld [vmem:[#allocation10 + $0x170] sm:$0xff]
        %v2122 = vld [vmem:[#allocation10 + $0x178] sm:$0xff]
        %v2123 = vld [vmem:[#allocation10 + $0x180] sm:$0xff]
        %v2124 = vld [vmem:[#allocation10 + $0x188] sm:$0xff]
        %v2125 = vld [vmem:[#allocation10 + $0x190] sm:$0xff]
        %v2126 = vld [vmem:[#allocation10 + $0x198] sm:$0xff]
        %v2127 = vld [vmem:[#allocation10 + $0x1a0] sm:$0xff]
        %v2128 = vld [vmem:[#allocation10 + $0x1a8] sm:$0xff]
        %v2129 = vld [vmem:[#allocation10 + $0x1b0] sm:$0xff]
        %v2130 = vld [vmem:[#allocation10 + $0x1b8] sm:$0xff]
        %v2131 = vld [vmem:[#allocation10 + $0x1c0] sm:$0xff]
        %v2132 = vld [vmem:[#allocation10 + $0x1c8] sm:$0xff]
        %v2133 = vld [vmem:[#allocation10 + $0x1d0] sm:$0xff]
        %v2134 = vld [vmem:[#allocation10 + $0x1d8] sm:$0xff]
        %v2135 = vld [vmem:[#allocation10 + $0x1e0] sm:$0xff]
        %v2136 = vld [vmem:[#allocation10 + $0x1e8] sm:$0xff]
        %v2137 = vld [vmem:[#allocation10 + $0x1f0] sm:$0xff]
        %v2138 = vld [vmem:[#allocation10 + $0x1f8] sm:$0xff]
        %v2139 = vld [vmem:[#allocation10 + $0x200] sm:$0xff]
        %v2140 = vld [vmem:[#allocation10 + $0x208] sm:$0xff]
        %v2141 = vld [vmem:[#allocation10 + $0x210] sm:$0xff]
        %v2142 = vld [vmem:[#allocation10 + $0x218] sm:$0xff]
        %v2143 = vld [vmem:[#allocation10 + $0x220] sm:$0xff]
        %v2144 = vld [vmem:[#allocation10 + $0x228] sm:$0xff]
        %v2145 = vld [vmem:[#allocation10 + $0x230] sm:$0xff]
        %v2146 = vld [vmem:[#allocation10 + $0x238] sm:$0xff]
        %v2147 = vld [vmem:[#allocation10 + $0x240] sm:$0xff]
        %v2148 = vld [vmem:[#allocation10 + $0x248] sm:$0xff]
        %v2149 = vld [vmem:[#allocation10 + $0x250] sm:$0xff]
        %v2150 = vld [vmem:[#allocation10 + $0x258] sm:$0xff]
        %v2151 = vld [vmem:[#allocation10 + $0x260] sm:$0xff]
        %v2152 = vld [vmem:[#allocation10 + $0x268] sm:$0xff]
        %v2153 = vld [vmem:[#allocation10 + $0x270] sm:$0xff]
        %v2154 = vld [vmem:[#allocation10 + $0x278] sm:$0xff]
        %v2155 = vld [vmem:[#allocation10 + $0x280] sm:$0xff]
        %v2156 = vld [vmem:[#allocation10 + $0x288] sm:$0xff]
        %v2157 = vld [vmem:[#allocation10 + $0x290] sm:$0xff]
        %v2158 = vld [vmem:[#allocation10 + $0x298] sm:$0xff]
        %v2159 = vld [vmem:[#allocation10 + $0x2a0] sm:$0xff]
        %v2160 = vld [vmem:[#allocation10 + $0x2a8] sm:$0xff]
        %v2161 = vld [vmem:[#allocation10 + $0x2b0] sm:$0xff]
        %v2162 = vld [vmem:[#allocation10 + $0x2b8] sm:$0xff]
        %v2163 = vld [vmem:[#allocation10 + $0x2c0] sm:$0xff]
        %v2164 = vld [vmem:[#allocation10 + $0x2c8] sm:$0xff]
        %v2165 = vld [vmem:[#allocation10 + $0x2d0] sm:$0xff]
        %v2166 = vld [vmem:[#allocation10 + $0x2d8] sm:$0xff]
        %v2167 = vld [vmem:[#allocation10 + $0x2e0] sm:$0xff]
        %v2168 = vld [vmem:[#allocation10 + $0x2e8] sm:$0xff]
        %v2169 = vld [vmem:[#allocation10 + $0x2f0] sm:$0xff]
        %v2170 = vld [vmem:[#allocation10 + $0x2f8] sm:$0xff]
        %v2171 = vld [vmem:[#allocation10 + $0x300] sm:$0xff]
        %v2172 = vld [vmem:[#allocation10 + $0x308] sm:$0xff]
        %v2173 = vld [vmem:[#allocation10 + $0x310] sm:$0xff]
        %v2174 = vld [vmem:[#allocation10 + $0x318] sm:$0xff]
        %v2175 = vld [vmem:[#allocation10 + $0x320] sm:$0xff]
        %v2176 = vld [vmem:[#allocation10 + $0x328] sm:$0xff]
        %v2177 = vld [vmem:[#allocation10 + $0x330] sm:$0xff]
        %v2178 = vld [vmem:[#allocation10 + $0x338] sm:$0xff]
        %v2179 = vld [vmem:[#allocation10 + $0x340] sm:$0xff]
        %v2180 = vld [vmem:[#allocation10 + $0x348] sm:$0xff]
        %v2181 = vld [vmem:[#allocation10 + $0x350] sm:$0xff]
        %v2182 = vld [vmem:[#allocation10 + $0x358] sm:$0xff]
        %v2183 = vld [vmem:[#allocation10 + $0x360] sm:$0xff]
        %v2184 = vld [vmem:[#allocation10 + $0x368] sm:$0xff]
        %v2185 = vld [vmem:[#allocation10 + $0x370] sm:$0xff]
        %v2186 = vld [vmem:[#allocation10 + $0x378] sm:$0xff]
        %2187 = vmatpush.msra.mxu0 %v2105
        %2188 = vmatpush.msra.mxu0 %v2103
        %2189 = vmatpush.msra.mxu0 %v2101
        %2190 = vmatpush.msra.mxu0 %v2099
        %2191 = vmatpush.msra.mxu0 %v2097
        %2192 = vmatpush.msra.mxu0 %v2095
        %2193 = vmatpush.msra.mxu0 %v2093
        %2194 = vmatpush.msra.mxu0 %v2091
        %2195 = vmatpush.msra.mxu0 %v2089
        %2196 = vmatpush.msra.mxu0 %v2087
        %2197 = vmatpush.msra.mxu0 %v2085
        %2198 = vmatpush.msra.mxu0 %v2083
        %2199 = vmatpush.msra.mxu0 %v2081
        %2200 = vmatpush.msra.mxu0 %v2079
        %2201 = vmatpush.msra.mxu0 %v2077
        %2202 = vmatpush.msra.mxu0 %v2075
        %2203 = vmatmul.f32.gmra.mxu0 %v1702
        %v2204 = vpop.f32.mrf.mxu0
        %v2205 = vadd.f32 0.0, %v2204
        %2206 = vmatmul.f32.gmra.mxu0 %v1706
        %v2207 = vpop.f32.mrf.mxu0
        %v2208 = vadd.f32 0.0, %v2207
        %2209 = vmatmul.f32.gmra.mxu0 %v1710
        %v2210 = vpop.f32.mrf.mxu0
        %v2211 = vadd.f32 0.0, %v2210
        %2212 = vmatmul.f32.gmra.mxu0 %v1714
        %v2213 = vpop.f32.mrf.mxu0
        %v2214 = vadd.f32 0.0, %v2213
        %2215 = vdwg.mxu0
        %2216 = vmatpush.msra.mxu0 %v2137
        %2217 = vmatpush.msra.mxu0 %v2135
        %2218 = vmatpush.msra.mxu0 %v2133
        %2219 = vmatpush.msra.mxu0 %v2131
        %2220 = vmatpush.msra.mxu0 %v2129
        %2221 = vmatpush.msra.mxu0 %v2127
        %2222 = vmatpush.msra.mxu0 %v2125
        %2223 = vmatpush.msra.mxu0 %v2123
        %2224 = vmatpush.msra.mxu0 %v2121
        %2225 = vmatpush.msra.mxu0 %v2119
        %2226 = vmatpush.msra.mxu0 %v2117
        %2227 = vmatpush.msra.mxu0 %v2115
        %2228 = vmatpush.msra.mxu0 %v2113
        %2229 = vmatpush.msra.mxu0 %v2111
        %2230 = vmatpush.msra.mxu0 %v2109
        %2231 = vmatpush.msra.mxu0 %v2107
        %2232 = vmatmul.f32.gmra.mxu0 %v1703
        %v2233 = vpop.f32.mrf.mxu0
        %v2234 = vadd.f32 %v2205, %v2233
        %2235 = vmatmul.f32.gmra.mxu0 %v1707
        %v2236 = vpop.f32.mrf.mxu0
        %v2237 = vadd.f32 %v2208, %v2236
        %2238 = vmatmul.f32.gmra.mxu0 %v1711
        %v2239 = vpop.f32.mrf.mxu0
        %v2240 = vadd.f32 %v2211, %v2239
        %2241 = vmatmul.f32.gmra.mxu0 %v1715
        %v2242 = vpop.f32.mrf.mxu0
        %v2243 = vadd.f32 %v2214, %v2242
        %2244 = vdwg.mxu0
        %2245 = vmatpush.msra.mxu0 %v2169
        %2246 = vmatpush.msra.mxu0 %v2167
        %2247 = vmatpush.msra.mxu0 %v2165
        %2248 = vmatpush.msra.mxu0 %v2163
        %2249 = vmatpush.msra.mxu0 %v2161
        %2250 = vmatpush.msra.mxu0 %v2159
        %2251 = vmatpush.msra.mxu0 %v2157
        %2252 = vmatpush.msra.mxu0 %v2155
        %2253 = vmatpush.msra.mxu0 %v2153
        %2254 = vmatpush.msra.mxu0 %v2151
        %2255 = vmatpush.msra.mxu0 %v2149
        %2256 = vmatpush.msra.mxu0 %v2147
        %2257 = vmatpush.msra.mxu0 %v2145
        %2258 = vmatpush.msra.mxu0 %v2143
        %2259 = vmatpush.msra.mxu0 %v2141
        %2260 = vmatpush.msra.mxu0 %v2139
        %2261 = vmatmul.f32.gmra.mxu0 %v1704
        %v2262 = vpop.f32.mrf.mxu0
        %v2263 = vadd.f32 %v2234, %v2262
        %2264 = vmatmul.f32.gmra.mxu0 %v1708
        %v2265 = vpop.f32.mrf.mxu0
        %v2266 = vadd.f32 %v2237, %v2265
        %2267 = vmatmul.f32.gmra.mxu0 %v1712
        %v2268 = vpop.f32.mrf.mxu0
        %v2269 = vadd.f32 %v2240, %v2268
        %2270 = vmatmul.f32.gmra.mxu0 %v1716
        %v2271 = vpop.f32.mrf.mxu0
        %v2272 = vadd.f32 %v2243, %v2271
        %2273 = vdwg.mxu0
        %2274 = vmatpush.msra.mxu0 0.0
        %2275 = vmatpush.msra.mxu0 0.0
        %2276 = vmatpush.msra.mxu0 0.0
        %2277 = vmatpush.msra.mxu0 0.0
        %2278 = vmatpush.msra.mxu0 0.0
        %2279 = vmatpush.msra.mxu0 0.0
        %2280 = vmatpush.msra.mxu0 0.0
        %2281 = vmatpush.msra.mxu0 0.0
        %2282 = vmatpush.msra.mxu0 %v2185
        %2283 = vmatpush.msra.mxu0 %v2183
        %2284 = vmatpush.msra.mxu0 %v2181
        %2285 = vmatpush.msra.mxu0 %v2179
        %2286 = vmatpush.msra.mxu0 %v2177
        %2287 = vmatpush.msra.mxu0 %v2175
        %2288 = vmatpush.msra.mxu0 %v2173
        %2289 = vmatpush.msra.mxu0 %v2171
        %2290 = vmatmul.f32.gmra.mxu0 %v1832
        %v2291 = vpop.f32.mrf.mxu0
        %v2292 = vadd.f32 %v2263, %v2291
        %2293 = vmatmul.f32.gmra.mxu0 %v1835
        %v2294 = vpop.f32.mrf.mxu0
        %v2295 = vadd.f32 %v2266, %v2294
        %2296 = vmatmul.f32.gmra.mxu0 %v1838
        %v2297 = vpop.f32.mrf.mxu0
        %v2298 = vadd.f32 %v2269, %v2297
        %2299 = vmatmul.f32.gmra.mxu0 %v1841
        %v2300 = vpop.f32.mrf.mxu0
        %v2301 = vadd.f32 %v2272, %v2300
        %2302 = vdwg.mxu0
        %2303 = vmatpush.msra.mxu0 %v2106
        %2304 = vmatpush.msra.mxu0 %v2104
        %2305 = vmatpush.msra.mxu0 %v2102
        %2306 = vmatpush.msra.mxu0 %v2100
        %2307 = vmatpush.msra.mxu0 %v2098
        %2308 = vmatpush.msra.mxu0 %v2096
        %2309 = vmatpush.msra.mxu0 %v2094
        %2310 = vmatpush.msra.mxu0 %v2092
        %2311 = vmatpush.msra.mxu0 %v2090
        %2312 = vmatpush.msra.mxu0 %v2088
        %2313 = vmatpush.msra.mxu0 %v2086
        %2314 = vmatpush.msra.mxu0 %v2084
        %2315 = vmatpush.msra.mxu0 %v2082
        %2316 = vmatpush.msra.mxu0 %v2080
        %2317 = vmatpush.msra.mxu0 %v2078
        %2318 = vmatpush.msra.mxu0 %v2076
        %2319 = vmatmul.f32.gmra.mxu0 %v1702
        %v2320 = vpop.f32.mrf.mxu0
        %v2321 = vadd.f32 0.0, %v2320
        %2322 = vmatmul.f32.gmra.mxu0 %v1706
        %v2323 = vpop.f32.mrf.mxu0
        %v2324 = vadd.f32 0.0, %v2323
        %2325 = vmatmul.f32.gmra.mxu0 %v1710
        %v2326 = vpop.f32.mrf.mxu0
        %v2327 = vadd.f32 0.0, %v2326
        %2328 = vmatmul.f32.gmra.mxu0 %v1714
        %v2329 = vpop.f32.mrf.mxu0
        %v2330 = vadd.f32 0.0, %v2329
        %2331 = vdwg.mxu0
        %2332 = vmatpush.msra.mxu0 %v2138
        %2333 = vmatpush.msra.mxu0 %v2136
        %2334 = vmatpush.msra.mxu0 %v2134
        %2335 = vmatpush.msra.mxu0 %v2132
        %2336 = vmatpush.msra.mxu0 %v2130
        %2337 = vmatpush.msra.mxu0 %v2128
        %2338 = vmatpush.msra.mxu0 %v2126
        %2339 = vmatpush.msra.mxu0 %v2124
        %2340 = vmatpush.msra.mxu0 %v2122
        %2341 = vmatpush.msra.mxu0 %v2120
        %2342 = vmatpush.msra.mxu0 %v2118
        %2343 = vmatpush.msra.mxu0 %v2116
        %2344 = vmatpush.msra.mxu0 %v2114
        %2345 = vmatpush.msra.mxu0 %v2112
        %2346 = vmatpush.msra.mxu0 %v2110
        %2347 = vmatpush.msra.mxu0 %v2108
        %2348 = vmatmul.f32.gmra.mxu0 %v1703
        %v2349 = vpop.f32.mrf.mxu0
        %v2350 = vadd.f32 %v2321, %v2349
        %2351 = vmatmul.f32.gmra.mxu0 %v1707
        %v2352 = vpop.f32.mrf.mxu0
        %v2353 = vadd.f32 %v2324, %v2352
        %2354 = vmatmul.f32.gmra.mxu0 %v1711
        %v2355 = vpop.f32.mrf.mxu0
        %v2356 = vadd.f32 %v2327, %v2355
        %2357 = vmatmul.f32.gmra.mxu0 %v1715
        %v2358 = vpop.f32.mrf.mxu0
        %v2359 = vadd.f32 %v2330, %v2358
        %2360 = vdwg.mxu0
        %2361 = vmatpush.msra.mxu0 %v2170
        %2362 = vmatpush.msra.mxu0 %v2168
        %2363 = vmatpush.msra.mxu0 %v2166
        %2364 = vmatpush.msra.mxu0 %v2164
        %2365 = vmatpush.msra.mxu0 %v2162
        %2366 = vmatpush.msra.mxu0 %v2160
        %2367 = vmatpush.msra.mxu0 %v2158
        %2368 = vmatpush.msra.mxu0 %v2156
        %2369 = vmatpush.msra.mxu0 %v2154
        %2370 = vmatpush.msra.mxu0 %v2152
        %2371 = vmatpush.msra.mxu0 %v2150
        %2372 = vmatpush.msra.mxu0 %v2148
        %2373 = vmatpush.msra.mxu0 %v2146
        %2374 = vmatpush.msra.mxu0 %v2144
        %2375 = vmatpush.msra.mxu0 %v2142
        %2376 = vmatpush.msra.mxu0 %v2140
        %2377 = vmatmul.f32.gmra.mxu0 %v1704
        %v2378 = vpop.f32.mrf.mxu0
        %v2379 = vadd.f32 %v2350, %v2378
        %2380 = vmatmul.f32.gmra.mxu0 %v1708
        %v2381 = vpop.f32.mrf.mxu0
        %v2382 = vadd.f32 %v2353, %v2381
        %2383 = vmatmul.f32.gmra.mxu0 %v1712
        %v2384 = vpop.f32.mrf.mxu0
        %v2385 = vadd.f32 %v2356, %v2384
        %2386 = vmatmul.f32.gmra.mxu0 %v1716
        %v2387 = vpop.f32.mrf.mxu0
        %v2388 = vadd.f32 %v2359, %v2387
        %2389 = vdwg.mxu0
        %2390 = vmatpush.msra.mxu0 0.0
        %2391 = vmatpush.msra.mxu0 0.0
        %2392 = vmatpush.msra.mxu0 0.0
        %2393 = vmatpush.msra.mxu0 0.0
        %2394 = vmatpush.msra.mxu0 0.0
        %2395 = vmatpush.msra.mxu0 0.0
        %2396 = vmatpush.msra.mxu0 0.0
        %2397 = vmatpush.msra.mxu0 0.0
        %2398 = vmatpush.msra.mxu0 %v2186
        %2399 = vmatpush.msra.mxu0 %v2184
        %2400 = vmatpush.msra.mxu0 %v2182
        %2401 = vmatpush.msra.mxu0 %v2180
        %2402 = vmatpush.msra.mxu0 %v2178
        %2403 = vmatpush.msra.mxu0 %v2176
        %2404 = vmatpush.msra.mxu0 %v2174
        %2405 = vmatpush.msra.mxu0 %v2172
        %2406 = vmatmul.f32.gmra.mxu0 %v1832
        %v2407 = vpop.f32.mrf.mxu0
        %v2408 = vadd.f32 %v2379, %v2407
        %2409 = vmatmul.f32.gmra.mxu0 %v1835
        %v2410 = vpop.f32.mrf.mxu0
        %v2411 = vadd.f32 %v2382, %v2410
        %2412 = vmatmul.f32.gmra.mxu0 %v1838
        %v2413 = vpop.f32.mrf.mxu0
        %v2414 = vadd.f32 %v2385, %v2413
        %2415 = vmatmul.f32.gmra.mxu0 %v1841
        %v2416 = vpop.f32.mrf.mxu0
        %v2417 = vadd.f32 %v2388, %v2416
        %2418 = vdwg.mxu0
        %v2419 = vmax.f32 %v1948, %v2292
        %v2420 = vmax.f32 %v2064, %v2408
        %v2421 = vmax.f32 %v1951, %v2295
        %v2422 = vmax.f32 %v2067, %v2411
        %v2423 = vmax.f32 %v1954, %v2298
        %v2424 = vmax.f32 %v2070, %v2414
        %v2425 = vmax.f32 %v1957, %v2301
        %v2426 = vmax.f32 %v2073, %v2417
        %v2427 = vld [vmem:[#allocation11] sm:$0xff]
        %v2428 = vld [vmem:[#allocation11 + $0x8] sm:$0xff]
        %v2429 = vld [vmem:[#allocation11 + $0x10] sm:$0x3]
        %v2431 = vsel %vm846, %v2427, 0
        %v2434 = vsel %vm846, %v2428, 0
        %v2437 = vsel %vm846, %v2429, 0
        %v2440 = vsel %vm855, %v2425, 0
        %v2443 = vsel %vm855, %v2426, 0
        %2445 = vmatpush.msra.mxu0 0.0
        %2446 = vmatpush.msra.mxu0 0.0
        %2447 = vmatpush.msra.mxu0 0.0
        %2448 = vmatpush.msra.mxu0 0.0
        %2449 = vmatpush.msra.mxu0 0.0
        %2450 = vmatpush.msra.mxu0 0.0
        %2451 = vmatpush.msra.mxu0 0.0
        %2452 = vmatpush.msra.mxu0 0.0
        %2453 = vmatpush.msra.mxu0 0.0
        %2454 = vmatpush.msra.mxu0 0.0
        %2455 = vmatpush.msra.mxu0 0.0
        %2456 = vmatpush.msra.mxu0 0.0
        %2457 = vmatpush.msra.mxu0 %v2440
        %2458 = vmatpush.msra.mxu0 %v2423
        %2459 = vmatpush.msra.mxu0 %v2421
        %2460 = vmatpush.msra.mxu0 %v2419
        %2461 = vmatmul.f32.gmra.mxu0 %v2431
        %v2462 = vpop.f32.mrf.mxu0
        %v2463 = vadd.f32 0.0, %v2462
        %2464 = vmatmul.f32.gmra.mxu0 %v2434
        %v2465 = vpop.f32.mrf.mxu0
        %v2466 = vadd.f32 0.0, %v2465
        %2467 = vmatmul.f32.gmra.mxu0 %v2437
        %v2468 = vpop.f32.mrf.mxu0
        %v2469 = vadd.f32 0.0, %v2468
        %2470 = vdwg.mxu0
        %2471 = vmatpush.msra.mxu0 0.0
        %2472 = vmatpush.msra.mxu0 0.0
        %2473 = vmatpush.msra.mxu0 0.0
        %2474 = vmatpush.msra.mxu0 0.0
        %2475 = vmatpush.msra.mxu0 0.0
        %2476 = vmatpush.msra.mxu0 0.0
        %2477 = vmatpush.msra.mxu0 0.0
        %2478 = vmatpush.msra.mxu0 0.0
        %2479 = vmatpush.msra.mxu0 0.0
        %2480 = vmatpush.msra.mxu0 0.0
        %2481 = vmatpush.msra.mxu0 0.0
        %2482 = vmatpush.msra.mxu0 0.0
        %2483 = vmatpush.msra.mxu0 %v2443
        %2484 = vmatpush.msra.mxu0 %v2424
        %2485 = vmatpush.msra.mxu0 %v2422
        %2486 = vmatpush.msra.mxu0 %v2420
        %2487 = vmatmul.f32.gmra.mxu0 %v2431
        %v2488 = vpop.f32.mrf.mxu0
        %v2489 = vadd.f32 0.0, %v2488
        %2490 = vmatmul.f32.gmra.mxu0 %v2434
        %v2491 = vpop.f32.mrf.mxu0
        %v2492 = vadd.f32 0.0, %v2491
        %2493 = vmatmul.f32.gmra.mxu0 %v2437
        %v2494 = vpop.f32.mrf.mxu0
        %v2495 = vadd.f32 0.0, %v2494
        %2496 = vdwg.mxu0
        %v2497 = vld [vmem:[#allocation13] sm:$0xff]
        %v2498 = vld [vmem:[#allocation13 + $0x8] sm:$0xff]
        %v2499 = vld [vmem:[#allocation13 + $0x10] sm:$0x3]
        %v2501 = vsel %vm846, %v2497, 0
        %v2504 = vsel %vm846, %v2498, 0
        %v2507 = vsel %vm846, %v2499, 0
        %2509 = vmatpush.msra.mxu0 0.0
        %2510 = vmatpush.msra.mxu0 0.0
        %2511 = vmatpush.msra.mxu0 0.0
        %2512 = vmatpush.msra.mxu0 0.0
        %2513 = vmatpush.msra.mxu0 0.0
        %2514 = vmatpush.msra.mxu0 0.0
        %2515 = vmatpush.msra.mxu0 0.0
        %2516 = vmatpush.msra.mxu0 0.0
        %2517 = vmatpush.msra.mxu0 0.0
        %2518 = vmatpush.msra.mxu0 0.0
        %2519 = vmatpush.msra.mxu0 0.0
        %2520 = vmatpush.msra.mxu0 0.0
        %2521 = vmatpush.msra.mxu0 %v2440
        %2522 = vmatpush.msra.mxu0 %v2423
        %2523 = vmatpush.msra.mxu0 %v2421
        %2524 = vmatpush.msra.mxu0 %v2419
        %2525 = vmatmul.f32.gmra.mxu0 %v2501
        %v2526 = vpop.f32.mrf.mxu0
        %v2527 = vadd.f32 0.0, %v2526
        %2528 = vmatmul.f32.gmra.mxu0 %v2504
        %v2529 = vpop.f32.mrf.mxu0
        %v2530 = vadd.f32 0.0, %v2529
        %2531 = vmatmul.f32.gmra.mxu0 %v2507
        %v2532 = vpop.f32.mrf.mxu0
        %v2533 = vadd.f32 0.0, %v2532
        %2534 = vdwg.mxu0
        %2535 = vmatpush.msra.mxu0 0.0
        %2536 = vmatpush.msra.mxu0 0.0
        %2537 = vmatpush.msra.mxu0 0.0
        %2538 = vmatpush.msra.mxu0 0.0
        %2539 = vmatpush.msra.mxu0 0.0
        %2540 = vmatpush.msra.mxu0 0.0
        %2541 = vmatpush.msra.mxu0 0.0
        %2542 = vmatpush.msra.mxu0 0.0
        %2543 = vmatpush.msra.mxu0 0.0
        %2544 = vmatpush.msra.mxu0 0.0
        %2545 = vmatpush.msra.mxu0 0.0
        %2546 = vmatpush.msra.mxu0 0.0
        %2547 = vmatpush.msra.mxu0 %v2443
        %2548 = vmatpush.msra.mxu0 %v2424
        %2549 = vmatpush.msra.mxu0 %v2422
        %2550 = vmatpush.msra.mxu0 %v2420
        %2551 = vmatmul.f32.gmra.mxu0 %v2501
        %v2552 = vpop.f32.mrf.mxu0
        %v2553 = vadd.f32 0.0, %v2552
        %2554 = vmatmul.f32.gmra.mxu0 %v2504
        %v2555 = vpop.f32.mrf.mxu0
        %v2556 = vadd.f32 0.0, %v2555
        %2557 = vmatmul.f32.gmra.mxu0 %v2507
        %v2558 = vpop.f32.mrf.mxu0
        %v2559 = vadd.f32 0.0, %v2558
        %2560 = vdwg.mxu0
        %v2561 = vmax.f32 %v2463, %v2527
        %v2562 = vmax.f32 %v2489, %v2553
        %v2563 = vmax.f32 %v2466, %v2530
        %v2564 = vmax.f32 %v2492, %v2556
        %v2565 = vmax.f32 %v2469, %v2533
        %v2566 = vmax.f32 %v2495, %v2559
        %v2567 = vld [vmem:[#allocation14] sm:$0xff]
        %v2568 = vld [vmem:[#allocation14 + $0x8] sm:$0xff]
        %v2569 = vld [vmem:[#allocation14 + $0x10] sm:$0xff]
        %v2570 = vld [vmem:[#allocation14 + $0x18] sm:$0xff]
        %v2571 = vld [vmem:[#allocation14 + $0x20] sm:$0xff]
        %v2572 = vld [vmem:[#allocation14 + $0x28] sm:$0xff]
        %v2573 = vld [vmem:[#allocation14 + $0x30] sm:$0xff]
        %v2574 = vld [vmem:[#allocation14 + $0x38] sm:$0xff]
        %v2575 = vld [vmem:[#allocation14 + $0x40] sm:$0xff]
        %v2576 = vld [vmem:[#allocation14 + $0x48] sm:$0xff]
        %v2577 = vld [vmem:[#allocation14 + $0x50] sm:$0xff]
        %v2578 = vld [vmem:[#allocation14 + $0x58] sm:$0xff]
        %v2579 = vld [vmem:[#allocation14 + $0x60] sm:$0xff]
        %v2580 = vld [vmem:[#allocation14 + $0x68] sm:$0xff]
        %v2581 = vld [vmem:[#allocation14 + $0x70] sm:$0xff]
        %v2582 = vld [vmem:[#allocation14 + $0x78] sm:$0xff]
        %v2583 = vld [vmem:[#allocation14 + $0x80] sm:$0xff]
        %v2584 = vld [vmem:[#allocation14 + $0x88] sm:$0xff]
        %v2585 = vld [vmem:[#allocation14 + $0x90] sm:$0xff]
        %v2586 = vld [vmem:[#allocation14 + $0x98] sm:$0xff]
        %v2587 = vld [vmem:[#allocation14 + $0xa0] sm:$0xff]
        %v2588 = vld [vmem:[#allocation14 + $0xa8] sm:$0xff]
        %v2589 = vld [vmem:[#allocation14 + $0xb0] sm:$0xff]
        %v2590 = vld [vmem:[#allocation14 + $0xb8] sm:$0xff]
        %v2591 = vld [vmem:[#allocation14 + $0xc0] sm:$0xff]
        %v2592 = vld [vmem:[#allocation14 + $0xc8] sm:$0xff]
        %v2593 = vld [vmem:[#allocation14 + $0xd0] sm:$0xff]
        %v2594 = vld [vmem:[#allocation14 + $0xd8] sm:$0xff]
        %v2595 = vld [vmem:[#allocation14 + $0xe0] sm:$0xff]
        %v2596 = vld [vmem:[#allocation14 + $0xe8] sm:$0xff]
        %v2597 = vld [vmem:[#allocation14 + $0xf0] sm:$0xff]
        %v2598 = vld [vmem:[#allocation14 + $0xf8] sm:$0xff]
        %v2599 = vld [vmem:[#allocation14 + $0x100] sm:$0xff]
        %v2600 = vld [vmem:[#allocation14 + $0x108] sm:$0xff]
        %v2601 = vld [vmem:[#allocation14 + $0x110] sm:$0xff]
        %v2602 = vld [vmem:[#allocation14 + $0x118] sm:$0xff]
        %v2603 = vld [vmem:[#allocation14 + $0x120] sm:$0xff]
        %v2604 = vld [vmem:[#allocation14 + $0x128] sm:$0xff]
        %v2605 = vld [vmem:[#allocation14 + $0x130] sm:$0xff]
        %v2606 = vld [vmem:[#allocation14 + $0x138] sm:$0xff]
        %v2607 = vld [vmem:[#allocation14 + $0x140] sm:$0xff]
        %v2608 = vld [vmem:[#allocation14 + $0x148] sm:$0xff]
        %v2609 = vld [vmem:[#allocation14 + $0x150] sm:$0xff]
        %v2610 = vld [vmem:[#allocation14 + $0x158] sm:$0xff]
        %v2611 = vld [vmem:[#allocation14 + $0x160] sm:$0xff]
        %v2612 = vld [vmem:[#allocation14 + $0x168] sm:$0xff]
        %v2613 = vld [vmem:[#allocation14 + $0x170] sm:$0xff]
        %v2614 = vld [vmem:[#allocation14 + $0x178] sm:$0xff]
        %v2615 = vld [vmem:[#allocation14 + $0x180] sm:$0xff]
        %v2616 = vld [vmem:[#allocation14 + $0x188] sm:$0xff]
        %v2617 = vld [vmem:[#allocation14 + $0x190] sm:$0xff]
        %v2618 = vld [vmem:[#allocation14 + $0x198] sm:$0xff]
        %v2619 = vld [vmem:[#allocation14 + $0x1a0] sm:$0xff]
        %v2620 = vld [vmem:[#allocation14 + $0x1a8] sm:$0xff]
        %v2621 = vld [vmem:[#allocation14 + $0x1b0] sm:$0xff]
        %v2622 = vld [vmem:[#allocation14 + $0x1b8] sm:$0xff]
        %v2623 = vld [vmem:[#allocation14 + $0x1c0] sm:$0xff]
        %v2624 = vld [vmem:[#allocation14 + $0x1c8] sm:$0xff]
        %v2625 = vld [vmem:[#allocation14 + $0x1d0] sm:$0xff]
        %v2626 = vld [vmem:[#allocation14 + $0x1d8] sm:$0xff]
        %v2627 = vld [vmem:[#allocation14 + $0x1e0] sm:$0xff]
        %v2628 = vld [vmem:[#allocation14 + $0x1e8] sm:$0xff]
        %v2629 = vld [vmem:[#allocation14 + $0x1f0] sm:$0xff]
        %v2630 = vld [vmem:[#allocation14 + $0x1f8] sm:$0xff]
        %v2631 = vld [vmem:[#allocation14 + $0x200] sm:$0xff]
        %v2632 = vld [vmem:[#allocation14 + $0x208] sm:$0xff]
        %v2633 = vld [vmem:[#allocation14 + $0x210] sm:$0xff]
        %v2634 = vld [vmem:[#allocation14 + $0x218] sm:$0xff]
        %v2635 = vld [vmem:[#allocation14 + $0x220] sm:$0xff]
        %v2636 = vld [vmem:[#allocation14 + $0x228] sm:$0xff]
        %v2637 = vld [vmem:[#allocation14 + $0x230] sm:$0xff]
        %v2638 = vld [vmem:[#allocation14 + $0x238] sm:$0xff]
        %v2639 = vld [vmem:[#allocation14 + $0x240] sm:$0xff]
        %v2640 = vld [vmem:[#allocation14 + $0x248] sm:$0xff]
        %v2641 = vld [vmem:[#allocation14 + $0x250] sm:$0xff]
        %v2642 = vld [vmem:[#allocation14 + $0x258] sm:$0xff]
        %v2643 = vld [vmem:[#allocation14 + $0x260] sm:$0xff]
        %v2644 = vld [vmem:[#allocation14 + $0x268] sm:$0xff]
        %v2645 = vld [vmem:[#allocation14 + $0x270] sm:$0xff]
        %v2646 = vld [vmem:[#allocation14 + $0x278] sm:$0xff]
        %v2647 = vld [vmem:[#allocation14 + $0x280] sm:$0xff]
        %v2648 = vld [vmem:[#allocation14 + $0x288] sm:$0xff]
        %v2649 = vld [vmem:[#allocation14 + $0x290] sm:$0xff]
        %v2650 = vld [vmem:[#allocation14 + $0x298] sm:$0xff]
        %v2651 = vld [vmem:[#allocation14 + $0x2a0] sm:$0xff]
        %v2652 = vld [vmem:[#allocation14 + $0x2a8] sm:$0xff]
        %v2653 = vld [vmem:[#allocation14 + $0x2b0] sm:$0xff]
        %v2654 = vld [vmem:[#allocation14 + $0x2b8] sm:$0xff]
        %v2655 = vld [vmem:[#allocation14 + $0x2c0] sm:$0xff]
        %v2656 = vld [vmem:[#allocation14 + $0x2c8] sm:$0xff]
        %v2657 = vld [vmem:[#allocation14 + $0x2d0] sm:$0xff]
        %v2658 = vld [vmem:[#allocation14 + $0x2d8] sm:$0xff]
        %v2659 = vld [vmem:[#allocation14 + $0x2e0] sm:$0xff]
        %v2660 = vld [vmem:[#allocation14 + $0x2e8] sm:$0xff]
        %v2661 = vld [vmem:[#allocation14 + $0x2f0] sm:$0xff]
        %v2662 = vld [vmem:[#allocation14 + $0x2f8] sm:$0xff]
        %v2663 = vld [vmem:[#allocation14 + $0x300] sm:$0xff]
        %v2664 = vld [vmem:[#allocation14 + $0x308] sm:$0xff]
        %v2665 = vld [vmem:[#allocation14 + $0x310] sm:$0xff]
        %v2666 = vld [vmem:[#allocation14 + $0x318] sm:$0xff]
        %v2667 = vld [vmem:[#allocation14 + $0x320] sm:$0xff]
        %v2668 = vld [vmem:[#allocation14 + $0x328] sm:$0xff]
        %v2669 = vld [vmem:[#allocation14 + $0x330] sm:$0xff]
        %v2670 = vld [vmem:[#allocation14 + $0x338] sm:$0xff]
        %v2671 = vld [vmem:[#allocation14 + $0x340] sm:$0xff]
        %v2672 = vld [vmem:[#allocation14 + $0x348] sm:$0xff]
        %v2673 = vld [vmem:[#allocation14 + $0x350] sm:$0xff]
        %v2674 = vld [vmem:[#allocation14 + $0x358] sm:$0xff]
        %v2675 = vld [vmem:[#allocation14 + $0x360] sm:$0xff]
        %v2676 = vld [vmem:[#allocation14 + $0x368] sm:$0xff]
        %v2677 = vld [vmem:[#allocation14 + $0x370] sm:$0xff]
        %v2678 = vld [vmem:[#allocation14 + $0x378] sm:$0xff]
        %s2679 = scalar_lea.vmem [#allocation14], 896
        %v2680 = vld [vmem:[%s2679] sm:$0xff]
        %v2681 = vld [vmem:[%s2679 + $0x8] sm:$0xff]
        %v2682 = vld [vmem:[%s2679 + $0x10] sm:$0xff]
        %v2683 = vld [vmem:[%s2679 + $0x18] sm:$0xff]
        %v2684 = vld [vmem:[%s2679 + $0x20] sm:$0xff]
        %v2685 = vld [vmem:[%s2679 + $0x28] sm:$0xff]
        %v2686 = vld [vmem:[%s2679 + $0x30] sm:$0xff]
        %v2687 = vld [vmem:[%s2679 + $0x38] sm:$0xff]
        %v2688 = vld [vmem:[%s2679 + $0x40] sm:$0xff]
        %v2689 = vld [vmem:[%s2679 + $0x48] sm:$0xff]
        %v2690 = vld [vmem:[%s2679 + $0x50] sm:$0xff]
        %v2691 = vld [vmem:[%s2679 + $0x58] sm:$0xff]
        %v2692 = vld [vmem:[%s2679 + $0x60] sm:$0xff]
        %v2693 = vld [vmem:[%s2679 + $0x68] sm:$0xff]
        %v2694 = vld [vmem:[%s2679 + $0x70] sm:$0xff]
        %v2695 = vld [vmem:[%s2679 + $0x78] sm:$0xff]
        %v2696 = vld [vmem:[%s2679 + $0x80] sm:$0xff]
        %v2697 = vld [vmem:[%s2679 + $0x88] sm:$0xff]
        %v2698 = vld [vmem:[%s2679 + $0x90] sm:$0xff]
        %v2699 = vld [vmem:[%s2679 + $0x98] sm:$0xff]
        %v2700 = vld [vmem:[%s2679 + $0xa0] sm:$0xff]
        %v2701 = vld [vmem:[%s2679 + $0xa8] sm:$0xff]
        %v2702 = vld [vmem:[%s2679 + $0xb0] sm:$0xff]
        %v2703 = vld [vmem:[%s2679 + $0xb8] sm:$0xff]
        %v2704 = vld [vmem:[%s2679 + $0xc0] sm:$0xff]
        %v2705 = vld [vmem:[%s2679 + $0xc8] sm:$0xff]
        %v2706 = vld [vmem:[%s2679 + $0xd0] sm:$0xff]
        %v2707 = vld [vmem:[%s2679 + $0xd8] sm:$0xff]
        %v2708 = vld [vmem:[%s2679 + $0xe0] sm:$0xff]
        %v2709 = vld [vmem:[%s2679 + $0xe8] sm:$0xff]
        %v2710 = vld [vmem:[%s2679 + $0xf0] sm:$0xff]
        %v2711 = vld [vmem:[%s2679 + $0xf8] sm:$0xff]
        %v2712 = vld [vmem:[%s2679 + $0x100] sm:$0xff]
        %v2713 = vld [vmem:[%s2679 + $0x108] sm:$0xff]
        %v2714 = vld [vmem:[%s2679 + $0x110] sm:$0xff]
        %v2715 = vld [vmem:[%s2679 + $0x118] sm:$0xff]
        %v2716 = vld [vmem:[%s2679 + $0x120] sm:$0xff]
        %v2717 = vld [vmem:[%s2679 + $0x128] sm:$0xff]
        %v2718 = vld [vmem:[%s2679 + $0x130] sm:$0xff]
        %v2719 = vld [vmem:[%s2679 + $0x138] sm:$0xff]
        %v2720 = vld [vmem:[%s2679 + $0x140] sm:$0xff]
        %v2721 = vld [vmem:[%s2679 + $0x148] sm:$0xff]
        %v2722 = vld [vmem:[%s2679 + $0x150] sm:$0xff]
        %v2723 = vld [vmem:[%s2679 + $0x158] sm:$0xff]
        %v2724 = vld [vmem:[%s2679 + $0x160] sm:$0xff]
        %v2725 = vld [vmem:[%s2679 + $0x168] sm:$0xff]
        %v2726 = vld [vmem:[%s2679 + $0x170] sm:$0xff]
        %v2727 = vld [vmem:[%s2679 + $0x178] sm:$0xff]
        %v2728 = vld [vmem:[%s2679 + $0x180] sm:$0xff]
        %v2729 = vld [vmem:[%s2679 + $0x188] sm:$0xff]
        %v2730 = vld [vmem:[%s2679 + $0x190] sm:$0xff]
        %v2731 = vld [vmem:[%s2679 + $0x198] sm:$0xff]
        %v2732 = vld [vmem:[%s2679 + $0x1a0] sm:$0xff]
        %v2733 = vld [vmem:[%s2679 + $0x1a8] sm:$0xff]
        %v2734 = vld [vmem:[%s2679 + $0x1b0] sm:$0xff]
        %v2735 = vld [vmem:[%s2679 + $0x1b8] sm:$0xff]
        %v2736 = vld [vmem:[%s2679 + $0x1c0] sm:$0xff]
        %v2737 = vld [vmem:[%s2679 + $0x1c8] sm:$0xff]
        %v2738 = vld [vmem:[%s2679 + $0x1d0] sm:$0xff]
        %v2739 = vld [vmem:[%s2679 + $0x1d8] sm:$0xff]
        %v2740 = vld [vmem:[%s2679 + $0x1e0] sm:$0xff]
        %v2741 = vld [vmem:[%s2679 + $0x1e8] sm:$0xff]
        %v2742 = vld [vmem:[%s2679 + $0x1f0] sm:$0xff]
        %v2743 = vld [vmem:[%s2679 + $0x1f8] sm:$0xff]
        %v2744 = vld [vmem:[%s2679 + $0x200] sm:$0xff]
        %v2745 = vld [vmem:[%s2679 + $0x208] sm:$0xff]
        %v2746 = vld [vmem:[%s2679 + $0x210] sm:$0xff]
        %v2747 = vld [vmem:[%s2679 + $0x218] sm:$0xff]
        %v2748 = vld [vmem:[%s2679 + $0x220] sm:$0xff]
        %v2749 = vld [vmem:[%s2679 + $0x228] sm:$0xff]
        %v2750 = vld [vmem:[%s2679 + $0x230] sm:$0xff]
        %v2751 = vld [vmem:[%s2679 + $0x238] sm:$0xff]
        %v2752 = vld [vmem:[%s2679 + $0x240] sm:$0xff]
        %v2753 = vld [vmem:[%s2679 + $0x248] sm:$0xff]
        %v2754 = vld [vmem:[%s2679 + $0x250] sm:$0xff]
        %v2755 = vld [vmem:[%s2679 + $0x258] sm:$0xff]
        %v2756 = vld [vmem:[%s2679 + $0x260] sm:$0xff]
        %v2757 = vld [vmem:[%s2679 + $0x268] sm:$0xff]
        %v2758 = vld [vmem:[%s2679 + $0x270] sm:$0xff]
        %v2759 = vld [vmem:[%s2679 + $0x278] sm:$0xff]
        %v2760 = vld [vmem:[%s2679 + $0x280] sm:$0xff]
        %v2761 = vld [vmem:[%s2679 + $0x288] sm:$0xff]
        %v2762 = vld [vmem:[%s2679 + $0x290] sm:$0xff]
        %v2763 = vld [vmem:[%s2679 + $0x298] sm:$0xff]
        %v2764 = vld [vmem:[%s2679 + $0x2a0] sm:$0xff]
        %v2765 = vld [vmem:[%s2679 + $0x2a8] sm:$0xff]
        %v2766 = vld [vmem:[%s2679 + $0x2b0] sm:$0xff]
        %v2767 = vld [vmem:[%s2679 + $0x2b8] sm:$0xff]
        %v2768 = vld [vmem:[%s2679 + $0x2c0] sm:$0xff]
        %v2769 = vld [vmem:[%s2679 + $0x2c8] sm:$0xff]
        %v2770 = vld [vmem:[%s2679 + $0x2d0] sm:$0xff]
        %v2771 = vld [vmem:[%s2679 + $0x2d8] sm:$0xff]
        %v2772 = vld [vmem:[%s2679 + $0x2e0] sm:$0xff]
        %v2773 = vld [vmem:[%s2679 + $0x2e8] sm:$0xff]
        %v2774 = vld [vmem:[%s2679 + $0x2f0] sm:$0xff]
        %v2775 = vld [vmem:[%s2679 + $0x2f8] sm:$0xff]
        %v2776 = vld [vmem:[%s2679 + $0x300] sm:$0xff]
        %v2777 = vld [vmem:[%s2679 + $0x308] sm:$0xff]
        %v2778 = vld [vmem:[%s2679 + $0x310] sm:$0xff]
        %v2779 = vld [vmem:[%s2679 + $0x318] sm:$0xff]
        %v2780 = vld [vmem:[%s2679 + $0x320] sm:$0xff]
        %v2781 = vld [vmem:[%s2679 + $0x328] sm:$0xff]
        %v2782 = vld [vmem:[%s2679 + $0x330] sm:$0xff]
        %v2783 = vld [vmem:[%s2679 + $0x338] sm:$0xff]
        %v2784 = vld [vmem:[%s2679 + $0x340] sm:$0xff]
        %v2785 = vld [vmem:[%s2679 + $0x348] sm:$0xff]
        %v2786 = vld [vmem:[%s2679 + $0x350] sm:$0xff]
        %v2787 = vld [vmem:[%s2679 + $0x358] sm:$0xff]
        %v2788 = vld [vmem:[%s2679 + $0x360] sm:$0xff]
        %v2789 = vld [vmem:[%s2679 + $0x368] sm:$0xff]
        %v2790 = vld [vmem:[%s2679 + $0x370] sm:$0xff]
        %v2791 = vld [vmem:[%s2679 + $0x378] sm:$0xff]
        %v2796 = vrot.slane %v2561, 1
        %v2797 = vrot.slane %v2563, 1
        %v2798 = vsel %vm838, %v2796, %v2797
        %v2799 = vrot.slane %v2562, 1
        %v2800 = vrot.slane %v2564, 1
        %v2801 = vsel %vm838, %v2799, %v2800
        %vm2804 = vcmask 785408
        %v2805 = vsel %vm2804, %v2801, 0
        %v2807 = vsel %vm2804, %v2800, 0
        %2809 = vmatpush.msra.mxu0 %v2740
        %2810 = vmatpush.msra.mxu0 %v2736
        %2811 = vmatpush.msra.mxu0 %v2732
        %2812 = vmatpush.msra.mxu0 %v2728
        %2813 = vmatpush.msra.mxu0 %v2724
        %2814 = vmatpush.msra.mxu0 %v2720
        %2815 = vmatpush.msra.mxu0 %v2716
        %2816 = vmatpush.msra.mxu0 %v2712
        %2817 = vmatpush.msra.mxu0 %v2708
        %2818 = vmatpush.msra.mxu0 %v2704
        %2819 = vmatpush.msra.mxu0 %v2700
        %2820 = vmatpush.msra.mxu0 %v2696
        %2821 = vmatpush.msra.mxu0 %v2692
        %2822 = vmatpush.msra.mxu0 %v2688
        %2823 = vmatpush.msra.mxu0 %v2684
        %2824 = vmatpush.msra.mxu0 %v2680
        %2825 = vmatmul.f32.gmra.mxu0 %v2798
        %v2826 = vpop.f32.mrf.mxu0
        %v2827 = vadd.f32 0.0, %v2826
        %2828 = vmatmul.f32.gmra.mxu0 %v2797
        %v2829 = vpop.f32.mrf.mxu0
        %v2830 = vadd.f32 0.0, %v2829
        %2831 = vdwg.mxu0
        %2832 = vmatpush.msra.mxu0 0.0
        %2833 = vmatpush.msra.mxu0 0.0
        %2834 = vmatpush.msra.mxu0 0.0
        %2835 = vmatpush.msra.mxu0 0.0
        %2836 = vmatpush.msra.mxu0 %v2788
        %2837 = vmatpush.msra.mxu0 %v2784
        %2838 = vmatpush.msra.mxu0 %v2780
        %2839 = vmatpush.msra.mxu0 %v2776
        %2840 = vmatpush.msra.mxu0 %v2772
        %2841 = vmatpush.msra.mxu0 %v2768
        %2842 = vmatpush.msra.mxu0 %v2764
        %2843 = vmatpush.msra.mxu0 %v2760
        %2844 = vmatpush.msra.mxu0 %v2756
        %2845 = vmatpush.msra.mxu0 %v2752
        %2846 = vmatpush.msra.mxu0 %v2748
        %2847 = vmatpush.msra.mxu0 %v2744
        %2848 = vmatmul.f32.gmra.mxu0 %v2805
        %v2849 = vpop.f32.mrf.mxu0
        %v2850 = vadd.f32 %v2827, %v2849
        %2851 = vmatmul.f32.gmra.mxu0 %v2807
        %v2852 = vpop.f32.mrf.mxu0
        %v2853 = vadd.f32 %v2830, %v2852
        %2854 = vdwg.mxu0
        %2855 = vmatpush.msra.mxu0 %v2741
        %2856 = vmatpush.msra.mxu0 %v2737
        %2857 = vmatpush.msra.mxu0 %v2733
        %2858 = vmatpush.msra.mxu0 %v2729
        %2859 = vmatpush.msra.mxu0 %v2725
        %2860 = vmatpush.msra.mxu0 %v2721
        %2861 = vmatpush.msra.mxu0 %v2717
        %2862 = vmatpush.msra.mxu0 %v2713
        %2863 = vmatpush.msra.mxu0 %v2709
        %2864 = vmatpush.msra.mxu0 %v2705
        %2865 = vmatpush.msra.mxu0 %v2701
        %2866 = vmatpush.msra.mxu0 %v2697
        %2867 = vmatpush.msra.mxu0 %v2693
        %2868 = vmatpush.msra.mxu0 %v2689
        %2869 = vmatpush.msra.mxu0 %v2685
        %2870 = vmatpush.msra.mxu0 %v2681
        %2871 = vmatmul.f32.gmra.mxu0 %v2798
        %v2872 = vpop.f32.mrf.mxu0
        %v2873 = vadd.f32 0.0, %v2872
        %2874 = vmatmul.f32.gmra.mxu0 %v2797
        %v2875 = vpop.f32.mrf.mxu0
        %v2876 = vadd.f32 0.0, %v2875
        %2877 = vdwg.mxu0
        %2878 = vmatpush.msra.mxu0 0.0
        %2879 = vmatpush.msra.mxu0 0.0
        %2880 = vmatpush.msra.mxu0 0.0
        %2881 = vmatpush.msra.mxu0 0.0
        %2882 = vmatpush.msra.mxu0 %v2789
        %2883 = vmatpush.msra.mxu0 %v2785
        %2884 = vmatpush.msra.mxu0 %v2781
        %2885 = vmatpush.msra.mxu0 %v2777
        %2886 = vmatpush.msra.mxu0 %v2773
        %2887 = vmatpush.msra.mxu0 %v2769
        %2888 = vmatpush.msra.mxu0 %v2765
        %2889 = vmatpush.msra.mxu0 %v2761
        %2890 = vmatpush.msra.mxu0 %v2757
        %2891 = vmatpush.msra.mxu0 %v2753
        %2892 = vmatpush.msra.mxu0 %v2749
        %2893 = vmatpush.msra.mxu0 %v2745
        %2894 = vmatmul.f32.gmra.mxu0 %v2805
        %v2895 = vpop.f32.mrf.mxu0
        %v2896 = vadd.f32 %v2873, %v2895
        %2897 = vmatmul.f32.gmra.mxu0 %v2807
        %v2898 = vpop.f32.mrf.mxu0
        %v2899 = vadd.f32 %v2876, %v2898
        %2900 = vdwg.mxu0
        %2901 = vmatpush.msra.mxu0 %v2742
        %2902 = vmatpush.msra.mxu0 %v2738
        %2903 = vmatpush.msra.mxu0 %v2734
        %2904 = vmatpush.msra.mxu0 %v2730
        %2905 = vmatpush.msra.mxu0 %v2726
        %2906 = vmatpush.msra.mxu0 %v2722
        %2907 = vmatpush.msra.mxu0 %v2718
        %2908 = vmatpush.msra.mxu0 %v2714
        %2909 = vmatpush.msra.mxu0 %v2710
        %2910 = vmatpush.msra.mxu0 %v2706
        %2911 = vmatpush.msra.mxu0 %v2702
        %2912 = vmatpush.msra.mxu0 %v2698
        %2913 = vmatpush.msra.mxu0 %v2694
        %2914 = vmatpush.msra.mxu0 %v2690
        %2915 = vmatpush.msra.mxu0 %v2686
        %2916 = vmatpush.msra.mxu0 %v2682
        %2917 = vmatmul.f32.gmra.mxu0 %v2798
        %v2918 = vpop.f32.mrf.mxu0
        %v2919 = vadd.f32 0.0, %v2918
        %2920 = vmatmul.f32.gmra.mxu0 %v2797
        %v2921 = vpop.f32.mrf.mxu0
        %v2922 = vadd.f32 0.0, %v2921
        %2923 = vdwg.mxu0
        %2924 = vmatpush.msra.mxu0 0.0
        %2925 = vmatpush.msra.mxu0 0.0
        %2926 = vmatpush.msra.mxu0 0.0
        %2927 = vmatpush.msra.mxu0 0.0
        %2928 = vmatpush.msra.mxu0 %v2790
        %2929 = vmatpush.msra.mxu0 %v2786
        %2930 = vmatpush.msra.mxu0 %v2782
        %2931 = vmatpush.msra.mxu0 %v2778
        %2932 = vmatpush.msra.mxu0 %v2774
        %2933 = vmatpush.msra.mxu0 %v2770
        %2934 = vmatpush.msra.mxu0 %v2766
        %2935 = vmatpush.msra.mxu0 %v2762
        %2936 = vmatpush.msra.mxu0 %v2758
        %2937 = vmatpush.msra.mxu0 %v2754
        %2938 = vmatpush.msra.mxu0 %v2750
        %2939 = vmatpush.msra.mxu0 %v2746
        %2940 = vmatmul.f32.gmra.mxu0 %v2805
        %v2941 = vpop.f32.mrf.mxu0
        %v2942 = vadd.f32 %v2919, %v2941
        %2943 = vmatmul.f32.gmra.mxu0 %v2807
        %v2944 = vpop.f32.mrf.mxu0
        %v2945 = vadd.f32 %v2922, %v2944
        %2946 = vdwg.mxu0
        %2947 = vmatpush.msra.mxu0 %v2743
        %2948 = vmatpush.msra.mxu0 %v2739
        %2949 = vmatpush.msra.mxu0 %v2735
        %2950 = vmatpush.msra.mxu0 %v2731
        %2951 = vmatpush.msra.mxu0 %v2727
        %2952 = vmatpush.msra.mxu0 %v2723
        %2953 = vmatpush.msra.mxu0 %v2719
        %2954 = vmatpush.msra.mxu0 %v2715
        %2955 = vmatpush.msra.mxu0 %v2711
        %2956 = vmatpush.msra.mxu0 %v2707
        %2957 = vmatpush.msra.mxu0 %v2703
        %2958 = vmatpush.msra.mxu0 %v2699
        %2959 = vmatpush.msra.mxu0 %v2695
        %2960 = vmatpush.msra.mxu0 %v2691
        %2961 = vmatpush.msra.mxu0 %v2687
        %2962 = vmatpush.msra.mxu0 %v2683
        %2963 = vmatmul.f32.gmra.mxu0 %v2798
        %v2964 = vpop.f32.mrf.mxu0
        %v2965 = vadd.f32 0.0, %v2964
        %2966 = vmatmul.f32.gmra.mxu0 %v2797
        %v2967 = vpop.f32.mrf.mxu0
        %v2968 = vadd.f32 0.0, %v2967
        %2969 = vdwg.mxu0
        %2970 = vmatpush.msra.mxu0 0.0
        %2971 = vmatpush.msra.mxu0 0.0
        %2972 = vmatpush.msra.mxu0 0.0
        %2973 = vmatpush.msra.mxu0 0.0
        %2974 = vmatpush.msra.mxu0 %v2791
        %2975 = vmatpush.msra.mxu0 %v2787
        %2976 = vmatpush.msra.mxu0 %v2783
        %2977 = vmatpush.msra.mxu0 %v2779
        %2978 = vmatpush.msra.mxu0 %v2775
        %2979 = vmatpush.msra.mxu0 %v2771
        %2980 = vmatpush.msra.mxu0 %v2767
        %2981 = vmatpush.msra.mxu0 %v2763
        %2982 = vmatpush.msra.mxu0 %v2759
        %2983 = vmatpush.msra.mxu0 %v2755
        %2984 = vmatpush.msra.mxu0 %v2751
        %2985 = vmatpush.msra.mxu0 %v2747
        %2986 = vmatmul.f32.gmra.mxu0 %v2805
        %v2987 = vpop.f32.mrf.mxu0
        %v2988 = vadd.f32 %v2965, %v2987
        %2989 = vmatmul.f32.gmra.mxu0 %v2807
        %v2990 = vpop.f32.mrf.mxu0
        %v2991 = vadd.f32 %v2968, %v2990
        %2992 = vdwg.mxu0
        %v2993 = vsel %vm2804, %v2562, 0
        %v2995 = vsel %vm2804, %v2564, 0
        %2997 = vmatpush.msra.mxu0 %v2627
        %2998 = vmatpush.msra.mxu0 %v2623
        %2999 = vmatpush.msra.mxu0 %v2619
        %3000 = vmatpush.msra.mxu0 %v2615
        %3001 = vmatpush.msra.mxu0 %v2611
        %3002 = vmatpush.msra.mxu0 %v2607
        %3003 = vmatpush.msra.mxu0 %v2603
        %3004 = vmatpush.msra.mxu0 %v2599
        %3005 = vmatpush.msra.mxu0 %v2595
        %3006 = vmatpush.msra.mxu0 %v2591
        %3007 = vmatpush.msra.mxu0 %v2587
        %3008 = vmatpush.msra.mxu0 %v2583
        %3009 = vmatpush.msra.mxu0 %v2579
        %3010 = vmatpush.msra.mxu0 %v2575
        %3011 = vmatpush.msra.mxu0 %v2571
        %3012 = vmatpush.msra.mxu0 %v2567
        %3013 = vmatmul.f32.gmra.mxu0 %v2561
        %v3014 = vpop.f32.mrf.mxu0
        %v3015 = vadd.f32 %v2850, %v3014
        %3016 = vmatmul.f32.gmra.mxu0 %v2563
        %v3017 = vpop.f32.mrf.mxu0
        %v3018 = vadd.f32 %v2853, %v3017
        %3019 = vdwg.mxu0
        %3020 = vmatpush.msra.mxu0 0.0
        %3021 = vmatpush.msra.mxu0 0.0
        %3022 = vmatpush.msra.mxu0 0.0
        %3023 = vmatpush.msra.mxu0 0.0
        %3024 = vmatpush.msra.mxu0 %v2675
        %3025 = vmatpush.msra.mxu0 %v2671
        %3026 = vmatpush.msra.mxu0 %v2667
        %3027 = vmatpush.msra.mxu0 %v2663
        %3028 = vmatpush.msra.mxu0 %v2659
        %3029 = vmatpush.msra.mxu0 %v2655
        %3030 = vmatpush.msra.mxu0 %v2651
        %3031 = vmatpush.msra.mxu0 %v2647
        %3032 = vmatpush.msra.mxu0 %v2643
        %3033 = vmatpush.msra.mxu0 %v2639
        %3034 = vmatpush.msra.mxu0 %v2635
        %3035 = vmatpush.msra.mxu0 %v2631
        %3036 = vmatmul.f32.gmra.mxu0 %v2993
        %v3037 = vpop.f32.mrf.mxu0
        %v3038 = vadd.f32 %v3015, %v3037
        %3039 = vmatmul.f32.gmra.mxu0 %v2995
        %v3040 = vpop.f32.mrf.mxu0
        %v3041 = vadd.f32 %v3018, %v3040
        %3042 = vdwg.mxu0
        %3043 = vmatpush.msra.mxu0 %v2628
        %3044 = vmatpush.msra.mxu0 %v2624
        %3045 = vmatpush.msra.mxu0 %v2620
        %3046 = vmatpush.msra.mxu0 %v2616
        %3047 = vmatpush.msra.mxu0 %v2612
        %3048 = vmatpush.msra.mxu0 %v2608
        %3049 = vmatpush.msra.mxu0 %v2604
        %3050 = vmatpush.msra.mxu0 %v2600
        %3051 = vmatpush.msra.mxu0 %v2596
        %3052 = vmatpush.msra.mxu0 %v2592
        %3053 = vmatpush.msra.mxu0 %v2588
        %3054 = vmatpush.msra.mxu0 %v2584
        %3055 = vmatpush.msra.mxu0 %v2580
        %3056 = vmatpush.msra.mxu0 %v2576
        %3057 = vmatpush.msra.mxu0 %v2572
        %3058 = vmatpush.msra.mxu0 %v2568
        %3059 = vmatmul.f32.gmra.mxu0 %v2561
        %v3060 = vpop.f32.mrf.mxu0
        %v3061 = vadd.f32 %v2896, %v3060
        %3062 = vmatmul.f32.gmra.mxu0 %v2563
        %v3063 = vpop.f32.mrf.mxu0
        %v3064 = vadd.f32 %v2899, %v3063
        %3065 = vdwg.mxu0
        %3066 = vmatpush.msra.mxu0 0.0
        %3067 = vmatpush.msra.mxu0 0.0
        %3068 = vmatpush.msra.mxu0 0.0
        %3069 = vmatpush.msra.mxu0 0.0
        %3070 = vmatpush.msra.mxu0 %v2676
        %3071 = vmatpush.msra.mxu0 %v2672
        %3072 = vmatpush.msra.mxu0 %v2668
        %3073 = vmatpush.msra.mxu0 %v2664
        %3074 = vmatpush.msra.mxu0 %v2660
        %3075 = vmatpush.msra.mxu0 %v2656
        %3076 = vmatpush.msra.mxu0 %v2652
        %3077 = vmatpush.msra.mxu0 %v2648
        %3078 = vmatpush.msra.mxu0 %v2644
        %3079 = vmatpush.msra.mxu0 %v2640
        %3080 = vmatpush.msra.mxu0 %v2636
        %3081 = vmatpush.msra.mxu0 %v2632
        %3082 = vmatmul.f32.gmra.mxu0 %v2993
        %v3083 = vpop.f32.mrf.mxu0
        %v3084 = vadd.f32 %v3061, %v3083
        %3085 = vmatmul.f32.gmra.mxu0 %v2995
        %v3086 = vpop.f32.mrf.mxu0
        %v3087 = vadd.f32 %v3064, %v3086
        %3088 = vdwg.mxu0
        %3089 = vmatpush.msra.mxu0 %v2629
        %3090 = vmatpush.msra.mxu0 %v2625
        %3091 = vmatpush.msra.mxu0 %v2621
        %3092 = vmatpush.msra.mxu0 %v2617
        %3093 = vmatpush.msra.mxu0 %v2613
        %3094 = vmatpush.msra.mxu0 %v2609
        %3095 = vmatpush.msra.mxu0 %v2605
        %3096 = vmatpush.msra.mxu0 %v2601
        %3097 = vmatpush.msra.mxu0 %v2597
        %3098 = vmatpush.msra.mxu0 %v2593
        %3099 = vmatpush.msra.mxu0 %v2589
        %3100 = vmatpush.msra.mxu0 %v2585
        %3101 = vmatpush.msra.mxu0 %v2581
        %3102 = vmatpush.msra.mxu0 %v2577
        %3103 = vmatpush.msra.mxu0 %v2573
        %3104 = vmatpush.msra.mxu0 %v2569
        %3105 = vmatmul.f32.gmra.mxu0 %v2561
        %v3106 = vpop.f32.mrf.mxu0
        %v3107 = vadd.f32 %v2942, %v3106
        %3108 = vmatmul.f32.gmra.mxu0 %v2563
        %v3109 = vpop.f32.mrf.mxu0
        %v3110 = vadd.f32 %v2945, %v3109
        %3111 = vdwg.mxu0
        %3112 = vmatpush.msra.mxu0 0.0
        %3113 = vmatpush.msra.mxu0 0.0
        %3114 = vmatpush.msra.mxu0 0.0
        %3115 = vmatpush.msra.mxu0 0.0
        %3116 = vmatpush.msra.mxu0 %v2677
        %3117 = vmatpush.msra.mxu0 %v2673
        %3118 = vmatpush.msra.mxu0 %v2669
        %3119 = vmatpush.msra.mxu0 %v2665
        %3120 = vmatpush.msra.mxu0 %v2661
        %3121 = vmatpush.msra.mxu0 %v2657
        %3122 = vmatpush.msra.mxu0 %v2653
        %3123 = vmatpush.msra.mxu0 %v2649
        %3124 = vmatpush.msra.mxu0 %v2645
        %3125 = vmatpush.msra.mxu0 %v2641
        %3126 = vmatpush.msra.mxu0 %v2637
        %3127 = vmatpush.msra.mxu0 %v2633
        %3128 = vmatmul.f32.gmra.mxu0 %v2993
        %v3129 = vpop.f32.mrf.mxu0
        %v3130 = vadd.f32 %v3107, %v3129
        %3131 = vmatmul.f32.gmra.mxu0 %v2995
        %v3132 = vpop.f32.mrf.mxu0
        %v3133 = vadd.f32 %v3110, %v3132
        %3134 = vdwg.mxu0
        %3135 = vmatpush.msra.mxu0 %v2630
        %3136 = vmatpush.msra.mxu0 %v2626
        %3137 = vmatpush.msra.mxu0 %v2622
        %3138 = vmatpush.msra.mxu0 %v2618
        %3139 = vmatpush.msra.mxu0 %v2614
        %3140 = vmatpush.msra.mxu0 %v2610
        %3141 = vmatpush.msra.mxu0 %v2606
        %3142 = vmatpush.msra.mxu0 %v2602
        %3143 = vmatpush.msra.mxu0 %v2598
        %3144 = vmatpush.msra.mxu0 %v2594
        %3145 = vmatpush.msra.mxu0 %v2590
        %3146 = vmatpush.msra.mxu0 %v2586
        %3147 = vmatpush.msra.mxu0 %v2582
        %3148 = vmatpush.msra.mxu0 %v2578
        %3149 = vmatpush.msra.mxu0 %v2574
        %3150 = vmatpush.msra.mxu0 %v2570
        %3151 = vmatmul.f32.gmra.mxu0 %v2561
        %v3152 = vpop.f32.mrf.mxu0
        %v3153 = vadd.f32 %v2988, %v3152
        %3154 = vmatmul.f32.gmra.mxu0 %v2563
        %v3155 = vpop.f32.mrf.mxu0
        %v3156 = vadd.f32 %v2991, %v3155
        %3157 = vdwg.mxu0
        %3158 = vmatpush.msra.mxu0 0.0
        %3159 = vmatpush.msra.mxu0 0.0
        %3160 = vmatpush.msra.mxu0 0.0
        %3161 = vmatpush.msra.mxu0 0.0
        %3162 = vmatpush.msra.mxu0 %v2678
        %3163 = vmatpush.msra.mxu0 %v2674
        %3164 = vmatpush.msra.mxu0 %v2670
        %3165 = vmatpush.msra.mxu0 %v2666
        %3166 = vmatpush.msra.mxu0 %v2662
        %3167 = vmatpush.msra.mxu0 %v2658
        %3168 = vmatpush.msra.mxu0 %v2654
        %3169 = vmatpush.msra.mxu0 %v2650
        %3170 = vmatpush.msra.mxu0 %v2646
        %3171 = vmatpush.msra.mxu0 %v2642
        %3172 = vmatpush.msra.mxu0 %v2638
        %3173 = vmatpush.msra.mxu0 %v2634
        %3174 = vmatmul.f32.gmra.mxu0 %v2993
        %v3175 = vpop.f32.mrf.mxu0
        %v3176 = vadd.f32 %v3153, %v3175
        %3177 = vmatmul.f32.gmra.mxu0 %v2995
        %v3178 = vpop.f32.mrf.mxu0
        %v3179 = vadd.f32 %v3156, %v3178
        %3180 = vdwg.mxu0
        %s3181 = scalar_lea.vmem [#allocation14], 1792
        %v3182 = vld [vmem:[%s3181] sm:$0xff]
        %v3183 = vld [vmem:[%s3181 + $0x8] sm:$0xff]
        %v3184 = vld [vmem:[%s3181 + $0x10] sm:$0xff]
        %v3185 = vld [vmem:[%s3181 + $0x18] sm:$0xff]
        %v3186 = vld [vmem:[%s3181 + $0x20] sm:$0xff]
        %v3187 = vld [vmem:[%s3181 + $0x28] sm:$0xff]
        %v3188 = vld [vmem:[%s3181 + $0x30] sm:$0xff]
        %v3189 = vld [vmem:[%s3181 + $0x38] sm:$0xff]
        %v3190 = vld [vmem:[%s3181 + $0x40] sm:$0xff]
        %v3191 = vld [vmem:[%s3181 + $0x48] sm:$0xff]
        %v3192 = vld [vmem:[%s3181 + $0x50] sm:$0xff]
        %v3193 = vld [vmem:[%s3181 + $0x58] sm:$0xff]
        %v3194 = vld [vmem:[%s3181 + $0x60] sm:$0xff]
        %v3195 = vld [vmem:[%s3181 + $0x68] sm:$0xff]
        %v3196 = vld [vmem:[%s3181 + $0x70] sm:$0xff]
        %v3197 = vld [vmem:[%s3181 + $0x78] sm:$0xff]
        %v3198 = vld [vmem:[%s3181 + $0x80] sm:$0xff]
        %v3199 = vld [vmem:[%s3181 + $0x88] sm:$0xff]
        %v3200 = vld [vmem:[%s3181 + $0x90] sm:$0xff]
        %v3201 = vld [vmem:[%s3181 + $0x98] sm:$0xff]
        %v3202 = vld [vmem:[%s3181 + $0xa0] sm:$0xff]
        %v3203 = vld [vmem:[%s3181 + $0xa8] sm:$0xff]
        %v3204 = vld [vmem:[%s3181 + $0xb0] sm:$0xff]
        %v3205 = vld [vmem:[%s3181 + $0xb8] sm:$0xff]
        %v3206 = vld [vmem:[%s3181 + $0xc0] sm:$0xff]
        %v3207 = vld [vmem:[%s3181 + $0xc8] sm:$0xff]
        %v3208 = vld [vmem:[%s3181 + $0xd0] sm:$0xff]
        %v3209 = vld [vmem:[%s3181 + $0xd8] sm:$0xff]
        %v3210 = vld [vmem:[%s3181 + $0xe0] sm:$0xff]
        %v3211 = vld [vmem:[%s3181 + $0xe8] sm:$0xff]
        %v3212 = vld [vmem:[%s3181 + $0xf0] sm:$0xff]
        %v3213 = vld [vmem:[%s3181 + $0xf8] sm:$0xff]
        %v3214 = vld [vmem:[%s3181 + $0x100] sm:$0xff]
        %v3215 = vld [vmem:[%s3181 + $0x108] sm:$0xff]
        %v3216 = vld [vmem:[%s3181 + $0x110] sm:$0xff]
        %v3217 = vld [vmem:[%s3181 + $0x118] sm:$0xff]
        %v3218 = vld [vmem:[%s3181 + $0x120] sm:$0xff]
        %v3219 = vld [vmem:[%s3181 + $0x128] sm:$0xff]
        %v3220 = vld [vmem:[%s3181 + $0x130] sm:$0xff]
        %v3221 = vld [vmem:[%s3181 + $0x138] sm:$0xff]
        %v3222 = vld [vmem:[%s3181 + $0x140] sm:$0xff]
        %v3223 = vld [vmem:[%s3181 + $0x148] sm:$0xff]
        %v3224 = vld [vmem:[%s3181 + $0x150] sm:$0xff]
        %v3225 = vld [vmem:[%s3181 + $0x158] sm:$0xff]
        %v3226 = vld [vmem:[%s3181 + $0x160] sm:$0xff]
        %v3227 = vld [vmem:[%s3181 + $0x168] sm:$0xff]
        %v3228 = vld [vmem:[%s3181 + $0x170] sm:$0xff]
        %v3229 = vld [vmem:[%s3181 + $0x178] sm:$0xff]
        %v3230 = vld [vmem:[%s3181 + $0x180] sm:$0xff]
        %v3231 = vld [vmem:[%s3181 + $0x188] sm:$0xff]
        %v3232 = vld [vmem:[%s3181 + $0x190] sm:$0xff]
        %v3233 = vld [vmem:[%s3181 + $0x198] sm:$0xff]
        %v3234 = vld [vmem:[%s3181 + $0x1a0] sm:$0xff]
        %v3235 = vld [vmem:[%s3181 + $0x1a8] sm:$0xff]
        %v3236 = vld [vmem:[%s3181 + $0x1b0] sm:$0xff]
        %v3237 = vld [vmem:[%s3181 + $0x1b8] sm:$0xff]
        %v3238 = vld [vmem:[%s3181 + $0x1c0] sm:$0xff]
        %v3239 = vld [vmem:[%s3181 + $0x1c8] sm:$0xff]
        %v3240 = vld [vmem:[%s3181 + $0x1d0] sm:$0xff]
        %v3241 = vld [vmem:[%s3181 + $0x1d8] sm:$0xff]
        %v3242 = vld [vmem:[%s3181 + $0x1e0] sm:$0xff]
        %v3243 = vld [vmem:[%s3181 + $0x1e8] sm:$0xff]
        %v3244 = vld [vmem:[%s3181 + $0x1f0] sm:$0xff]
        %v3245 = vld [vmem:[%s3181 + $0x1f8] sm:$0xff]
        %v3246 = vld [vmem:[%s3181 + $0x200] sm:$0xff]
        %v3247 = vld [vmem:[%s3181 + $0x208] sm:$0xff]
        %v3248 = vld [vmem:[%s3181 + $0x210] sm:$0xff]
        %v3249 = vld [vmem:[%s3181 + $0x218] sm:$0xff]
        %v3250 = vld [vmem:[%s3181 + $0x220] sm:$0xff]
        %v3251 = vld [vmem:[%s3181 + $0x228] sm:$0xff]
        %v3252 = vld [vmem:[%s3181 + $0x230] sm:$0xff]
        %v3253 = vld [vmem:[%s3181 + $0x238] sm:$0xff]
        %v3254 = vld [vmem:[%s3181 + $0x240] sm:$0xff]
        %v3255 = vld [vmem:[%s3181 + $0x248] sm:$0xff]
        %v3256 = vld [vmem:[%s3181 + $0x250] sm:$0xff]
        %v3257 = vld [vmem:[%s3181 + $0x258] sm:$0xff]
        %v3258 = vld [vmem:[%s3181 + $0x260] sm:$0xff]
        %v3259 = vld [vmem:[%s3181 + $0x268] sm:$0xff]
        %v3260 = vld [vmem:[%s3181 + $0x270] sm:$0xff]
        %v3261 = vld [vmem:[%s3181 + $0x278] sm:$0xff]
        %v3262 = vld [vmem:[%s3181 + $0x280] sm:$0xff]
        %v3263 = vld [vmem:[%s3181 + $0x288] sm:$0xff]
        %v3264 = vld [vmem:[%s3181 + $0x290] sm:$0xff]
        %v3265 = vld [vmem:[%s3181 + $0x298] sm:$0xff]
        %v3266 = vld [vmem:[%s3181 + $0x2a0] sm:$0xff]
        %v3267 = vld [vmem:[%s3181 + $0x2a8] sm:$0xff]
        %v3268 = vld [vmem:[%s3181 + $0x2b0] sm:$0xff]
        %v3269 = vld [vmem:[%s3181 + $0x2b8] sm:$0xff]
        %v3270 = vld [vmem:[%s3181 + $0x2c0] sm:$0xff]
        %v3271 = vld [vmem:[%s3181 + $0x2c8] sm:$0xff]
        %v3272 = vld [vmem:[%s3181 + $0x2d0] sm:$0xff]
        %v3273 = vld [vmem:[%s3181 + $0x2d8] sm:$0xff]
        %v3274 = vld [vmem:[%s3181 + $0x2e0] sm:$0xff]
        %v3275 = vld [vmem:[%s3181 + $0x2e8] sm:$0xff]
        %v3276 = vld [vmem:[%s3181 + $0x2f0] sm:$0xff]
        %v3277 = vld [vmem:[%s3181 + $0x2f8] sm:$0xff]
        %v3278 = vld [vmem:[%s3181 + $0x300] sm:$0xff]
        %v3279 = vld [vmem:[%s3181 + $0x308] sm:$0xff]
        %v3280 = vld [vmem:[%s3181 + $0x310] sm:$0xff]
        %v3281 = vld [vmem:[%s3181 + $0x318] sm:$0xff]
        %v3282 = vld [vmem:[%s3181 + $0x320] sm:$0xff]
        %v3283 = vld [vmem:[%s3181 + $0x328] sm:$0xff]
        %v3284 = vld [vmem:[%s3181 + $0x330] sm:$0xff]
        %v3285 = vld [vmem:[%s3181 + $0x338] sm:$0xff]
        %v3286 = vld [vmem:[%s3181 + $0x340] sm:$0xff]
        %v3287 = vld [vmem:[%s3181 + $0x348] sm:$0xff]
        %v3288 = vld [vmem:[%s3181 + $0x350] sm:$0xff]
        %v3289 = vld [vmem:[%s3181 + $0x358] sm:$0xff]
        %v3290 = vld [vmem:[%s3181 + $0x360] sm:$0xff]
        %v3291 = vld [vmem:[%s3181 + $0x368] sm:$0xff]
        %v3292 = vld [vmem:[%s3181 + $0x370] sm:$0xff]
        %v3293 = vld [vmem:[%s3181 + $0x378] sm:$0xff]
        %v3294 = vrot.slane %v2561, 2
        %v3295 = vrot.slane %v2563, 2
        %v3296 = vsel %vm1137, %v3294, %v3295
        %v3297 = vrot.slane %v2562, 2
        %v3298 = vrot.slane %v2564, 2
        %v3299 = vsel %vm1137, %v3297, %v3298
        %v3302 = vsel %vm2804, %v3299, 0
        %v3304 = vsel %vm2804, %v3298, 0
        %3306 = vmatpush.msra.mxu0 %v3242
        %3307 = vmatpush.msra.mxu0 %v3238
        %3308 = vmatpush.msra.mxu0 %v3234
        %3309 = vmatpush.msra.mxu0 %v3230
        %3310 = vmatpush.msra.mxu0 %v3226
        %3311 = vmatpush.msra.mxu0 %v3222
        %3312 = vmatpush.msra.mxu0 %v3218
        %3313 = vmatpush.msra.mxu0 %v3214
        %3314 = vmatpush.msra.mxu0 %v3210
        %3315 = vmatpush.msra.mxu0 %v3206
        %3316 = vmatpush.msra.mxu0 %v3202
        %3317 = vmatpush.msra.mxu0 %v3198
        %3318 = vmatpush.msra.mxu0 %v3194
        %3319 = vmatpush.msra.mxu0 %v3190
        %3320 = vmatpush.msra.mxu0 %v3186
        %3321 = vmatpush.msra.mxu0 %v3182
        %3322 = vmatmul.f32.gmra.mxu0 %v3296
        %v3323 = vpop.f32.mrf.mxu0
        %v3324 = vadd.f32 0.0, %v3323
        %3325 = vmatmul.f32.gmra.mxu0 %v3295
        %v3326 = vpop.f32.mrf.mxu0
        %v3327 = vadd.f32 0.0, %v3326
        %3328 = vdwg.mxu0
        %3329 = vmatpush.msra.mxu0 0.0
        %3330 = vmatpush.msra.mxu0 0.0
        %3331 = vmatpush.msra.mxu0 0.0
        %3332 = vmatpush.msra.mxu0 0.0
        %3333 = vmatpush.msra.mxu0 %v3290
        %3334 = vmatpush.msra.mxu0 %v3286
        %3335 = vmatpush.msra.mxu0 %v3282
        %3336 = vmatpush.msra.mxu0 %v3278
        %3337 = vmatpush.msra.mxu0 %v3274
        %3338 = vmatpush.msra.mxu0 %v3270
        %3339 = vmatpush.msra.mxu0 %v3266
        %3340 = vmatpush.msra.mxu0 %v3262
        %3341 = vmatpush.msra.mxu0 %v3258
        %3342 = vmatpush.msra.mxu0 %v3254
        %3343 = vmatpush.msra.mxu0 %v3250
        %3344 = vmatpush.msra.mxu0 %v3246
        %3345 = vmatmul.f32.gmra.mxu0 %v3302
        %v3346 = vpop.f32.mrf.mxu0
        %v3347 = vadd.f32 %v3324, %v3346
        %3348 = vmatmul.f32.gmra.mxu0 %v3304
        %v3349 = vpop.f32.mrf.mxu0
        %v3350 = vadd.f32 %v3327, %v3349
        %3351 = vdwg.mxu0
        %3352 = vmatpush.msra.mxu0 %v3243
        %3353 = vmatpush.msra.mxu0 %v3239
        %3354 = vmatpush.msra.mxu0 %v3235
        %3355 = vmatpush.msra.mxu0 %v3231
        %3356 = vmatpush.msra.mxu0 %v3227
        %3357 = vmatpush.msra.mxu0 %v3223
        %3358 = vmatpush.msra.mxu0 %v3219
        %3359 = vmatpush.msra.mxu0 %v3215
        %3360 = vmatpush.msra.mxu0 %v3211
        %3361 = vmatpush.msra.mxu0 %v3207
        %3362 = vmatpush.msra.mxu0 %v3203
        %3363 = vmatpush.msra.mxu0 %v3199
        %3364 = vmatpush.msra.mxu0 %v3195
        %3365 = vmatpush.msra.mxu0 %v3191
        %3366 = vmatpush.msra.mxu0 %v3187
        %3367 = vmatpush.msra.mxu0 %v3183
        %3368 = vmatmul.f32.gmra.mxu0 %v3296
        %v3369 = vpop.f32.mrf.mxu0
        %v3370 = vadd.f32 0.0, %v3369
        %3371 = vmatmul.f32.gmra.mxu0 %v3295
        %v3372 = vpop.f32.mrf.mxu0
        %v3373 = vadd.f32 0.0, %v3372
        %3374 = vdwg.mxu0
        %3375 = vmatpush.msra.mxu0 0.0
        %3376 = vmatpush.msra.mxu0 0.0
        %3377 = vmatpush.msra.mxu0 0.0
        %3378 = vmatpush.msra.mxu0 0.0
        %3379 = vmatpush.msra.mxu0 %v3291
        %3380 = vmatpush.msra.mxu0 %v3287
        %3381 = vmatpush.msra.mxu0 %v3283
        %3382 = vmatpush.msra.mxu0 %v3279
        %3383 = vmatpush.msra.mxu0 %v3275
        %3384 = vmatpush.msra.mxu0 %v3271
        %3385 = vmatpush.msra.mxu0 %v3267
        %3386 = vmatpush.msra.mxu0 %v3263
        %3387 = vmatpush.msra.mxu0 %v3259
        %3388 = vmatpush.msra.mxu0 %v3255
        %3389 = vmatpush.msra.mxu0 %v3251
        %3390 = vmatpush.msra.mxu0 %v3247
        %3391 = vmatmul.f32.gmra.mxu0 %v3302
        %v3392 = vpop.f32.mrf.mxu0
        %v3393 = vadd.f32 %v3370, %v3392
        %3394 = vmatmul.f32.gmra.mxu0 %v3304
        %v3395 = vpop.f32.mrf.mxu0
        %v3396 = vadd.f32 %v3373, %v3395
        %3397 = vdwg.mxu0
        %3398 = vmatpush.msra.mxu0 %v3244
        %3399 = vmatpush.msra.mxu0 %v3240
        %3400 = vmatpush.msra.mxu0 %v3236
        %3401 = vmatpush.msra.mxu0 %v3232
        %3402 = vmatpush.msra.mxu0 %v3228
        %3403 = vmatpush.msra.mxu0 %v3224
        %3404 = vmatpush.msra.mxu0 %v3220
        %3405 = vmatpush.msra.mxu0 %v3216
        %3406 = vmatpush.msra.mxu0 %v3212
        %3407 = vmatpush.msra.mxu0 %v3208
        %3408 = vmatpush.msra.mxu0 %v3204
        %3409 = vmatpush.msra.mxu0 %v3200
        %3410 = vmatpush.msra.mxu0 %v3196
        %3411 = vmatpush.msra.mxu0 %v3192
        %3412 = vmatpush.msra.mxu0 %v3188
        %3413 = vmatpush.msra.mxu0 %v3184
        %3414 = vmatmul.f32.gmra.mxu0 %v3296
        %v3415 = vpop.f32.mrf.mxu0
        %v3416 = vadd.f32 0.0, %v3415
        %3417 = vmatmul.f32.gmra.mxu0 %v3295
        %v3418 = vpop.f32.mrf.mxu0
        %v3419 = vadd.f32 0.0, %v3418
        %3420 = vdwg.mxu0
        %3421 = vmatpush.msra.mxu0 0.0
        %3422 = vmatpush.msra.mxu0 0.0
        %3423 = vmatpush.msra.mxu0 0.0
        %3424 = vmatpush.msra.mxu0 0.0
        %3425 = vmatpush.msra.mxu0 %v3292
        %3426 = vmatpush.msra.mxu0 %v3288
        %3427 = vmatpush.msra.mxu0 %v3284
        %3428 = vmatpush.msra.mxu0 %v3280
        %3429 = vmatpush.msra.mxu0 %v3276
        %3430 = vmatpush.msra.mxu0 %v3272
        %3431 = vmatpush.msra.mxu0 %v3268
        %3432 = vmatpush.msra.mxu0 %v3264
        %3433 = vmatpush.msra.mxu0 %v3260
        %3434 = vmatpush.msra.mxu0 %v3256
        %3435 = vmatpush.msra.mxu0 %v3252
        %3436 = vmatpush.msra.mxu0 %v3248
        %3437 = vmatmul.f32.gmra.mxu0 %v3302
        %v3438 = vpop.f32.mrf.mxu0
        %v3439 = vadd.f32 %v3416, %v3438
        %3440 = vmatmul.f32.gmra.mxu0 %v3304
        %v3441 = vpop.f32.mrf.mxu0
        %v3442 = vadd.f32 %v3419, %v3441
        %3443 = vdwg.mxu0
        %3444 = vmatpush.msra.mxu0 %v3245
        %3445 = vmatpush.msra.mxu0 %v3241
        %3446 = vmatpush.msra.mxu0 %v3237
        %3447 = vmatpush.msra.mxu0 %v3233
        %3448 = vmatpush.msra.mxu0 %v3229
        %3449 = vmatpush.msra.mxu0 %v3225
        %3450 = vmatpush.msra.mxu0 %v3221
        %3451 = vmatpush.msra.mxu0 %v3217
        %3452 = vmatpush.msra.mxu0 %v3213
        %3453 = vmatpush.msra.mxu0 %v3209
        %3454 = vmatpush.msra.mxu0 %v3205
        %3455 = vmatpush.msra.mxu0 %v3201
        %3456 = vmatpush.msra.mxu0 %v3197
        %3457 = vmatpush.msra.mxu0 %v3193
        %3458 = vmatpush.msra.mxu0 %v3189
        %3459 = vmatpush.msra.mxu0 %v3185
        %3460 = vmatmul.f32.gmra.mxu0 %v3296
        %v3461 = vpop.f32.mrf.mxu0
        %v3462 = vadd.f32 0.0, %v3461
        %3463 = vmatmul.f32.gmra.mxu0 %v3295
        %v3464 = vpop.f32.mrf.mxu0
        %v3465 = vadd.f32 0.0, %v3464
        %3466 = vdwg.mxu0
        %3467 = vmatpush.msra.mxu0 0.0
        %3468 = vmatpush.msra.mxu0 0.0
        %3469 = vmatpush.msra.mxu0 0.0
        %3470 = vmatpush.msra.mxu0 0.0
        %3471 = vmatpush.msra.mxu0 %v3293
        %3472 = vmatpush.msra.mxu0 %v3289
        %3473 = vmatpush.msra.mxu0 %v3285
        %3474 = vmatpush.msra.mxu0 %v3281
        %3475 = vmatpush.msra.mxu0 %v3277
        %3476 = vmatpush.msra.mxu0 %v3273
        %3477 = vmatpush.msra.mxu0 %v3269
        %3478 = vmatpush.msra.mxu0 %v3265
        %3479 = vmatpush.msra.mxu0 %v3261
        %3480 = vmatpush.msra.mxu0 %v3257
        %3481 = vmatpush.msra.mxu0 %v3253
        %3482 = vmatpush.msra.mxu0 %v3249
        %3483 = vmatmul.f32.gmra.mxu0 %v3302
        %v3484 = vpop.f32.mrf.mxu0
        %v3485 = vadd.f32 %v3462, %v3484
        %3486 = vmatmul.f32.gmra.mxu0 %v3304
        %v3487 = vpop.f32.mrf.mxu0
        %v3488 = vadd.f32 %v3465, %v3487
        %3489 = vdwg.mxu0
        %v3490 = vadd.f32 %v3038, %v3347
        %v3491 = vadd.f32 %v3084, %v3393
        %v3492 = vadd.f32 %v3130, %v3439
        %v3493 = vadd.f32 %v3176, %v3485
        %v3494 = vadd.f32 %v3041, %v3350
        %v3495 = vadd.f32 %v3087, %v3396
        %v3496 = vadd.f32 %v3133, %v3442
        %v3497 = vadd.f32 %v3179, %v3488
        %s3498 = scalar_lea.vmem [#allocation14], 2688
        %v3499 = vld [vmem:[%s3498] sm:$0xff]
        %v3500 = vld [vmem:[%s3498 + $0x8] sm:$0xff]
        %v3501 = vld [vmem:[%s3498 + $0x10] sm:$0xff]
        %v3502 = vld [vmem:[%s3498 + $0x18] sm:$0xff]
        %v3503 = vld [vmem:[%s3498 + $0x20] sm:$0xff]
        %v3504 = vld [vmem:[%s3498 + $0x28] sm:$0xff]
        %v3505 = vld [vmem:[%s3498 + $0x30] sm:$0xff]
        %v3506 = vld [vmem:[%s3498 + $0x38] sm:$0xff]
        %v3507 = vld [vmem:[%s3498 + $0x40] sm:$0xff]
        %v3508 = vld [vmem:[%s3498 + $0x48] sm:$0xff]
        %v3509 = vld [vmem:[%s3498 + $0x50] sm:$0xff]
        %v3510 = vld [vmem:[%s3498 + $0x58] sm:$0xff]
        %v3511 = vld [vmem:[%s3498 + $0x60] sm:$0xff]
        %v3512 = vld [vmem:[%s3498 + $0x68] sm:$0xff]
        %v3513 = vld [vmem:[%s3498 + $0x70] sm:$0xff]
        %v3514 = vld [vmem:[%s3498 + $0x78] sm:$0xff]
        %v3515 = vld [vmem:[%s3498 + $0x80] sm:$0xff]
        %v3516 = vld [vmem:[%s3498 + $0x88] sm:$0xff]
        %v3517 = vld [vmem:[%s3498 + $0x90] sm:$0xff]
        %v3518 = vld [vmem:[%s3498 + $0x98] sm:$0xff]
        %v3519 = vld [vmem:[%s3498 + $0xa0] sm:$0xff]
        %v3520 = vld [vmem:[%s3498 + $0xa8] sm:$0xff]
        %v3521 = vld [vmem:[%s3498 + $0xb0] sm:$0xff]
        %v3522 = vld [vmem:[%s3498 + $0xb8] sm:$0xff]
        %v3523 = vld [vmem:[%s3498 + $0xc0] sm:$0xff]
        %v3524 = vld [vmem:[%s3498 + $0xc8] sm:$0xff]
        %v3525 = vld [vmem:[%s3498 + $0xd0] sm:$0xff]
        %v3526 = vld [vmem:[%s3498 + $0xd8] sm:$0xff]
        %v3527 = vld [vmem:[%s3498 + $0xe0] sm:$0xff]
        %v3528 = vld [vmem:[%s3498 + $0xe8] sm:$0xff]
        %v3529 = vld [vmem:[%s3498 + $0xf0] sm:$0xff]
        %v3530 = vld [vmem:[%s3498 + $0xf8] sm:$0xff]
        %v3531 = vld [vmem:[%s3498 + $0x100] sm:$0xff]
        %v3532 = vld [vmem:[%s3498 + $0x108] sm:$0xff]
        %v3533 = vld [vmem:[%s3498 + $0x110] sm:$0xff]
        %v3534 = vld [vmem:[%s3498 + $0x118] sm:$0xff]
        %v3535 = vld [vmem:[%s3498 + $0x120] sm:$0xff]
        %v3536 = vld [vmem:[%s3498 + $0x128] sm:$0xff]
        %v3537 = vld [vmem:[%s3498 + $0x130] sm:$0xff]
        %v3538 = vld [vmem:[%s3498 + $0x138] sm:$0xff]
        %v3539 = vld [vmem:[%s3498 + $0x140] sm:$0xff]
        %v3540 = vld [vmem:[%s3498 + $0x148] sm:$0xff]
        %v3541 = vld [vmem:[%s3498 + $0x150] sm:$0xff]
        %v3542 = vld [vmem:[%s3498 + $0x158] sm:$0xff]
        %v3543 = vld [vmem:[%s3498 + $0x160] sm:$0xff]
        %v3544 = vld [vmem:[%s3498 + $0x168] sm:$0xff]
        %v3545 = vld [vmem:[%s3498 + $0x170] sm:$0xff]
        %v3546 = vld [vmem:[%s3498 + $0x178] sm:$0xff]
        %v3547 = vld [vmem:[%s3498 + $0x180] sm:$0xff]
        %v3548 = vld [vmem:[%s3498 + $0x188] sm:$0xff]
        %v3549 = vld [vmem:[%s3498 + $0x190] sm:$0xff]
        %v3550 = vld [vmem:[%s3498 + $0x198] sm:$0xff]
        %v3551 = vld [vmem:[%s3498 + $0x1a0] sm:$0xff]
        %v3552 = vld [vmem:[%s3498 + $0x1a8] sm:$0xff]
        %v3553 = vld [vmem:[%s3498 + $0x1b0] sm:$0xff]
        %v3554 = vld [vmem:[%s3498 + $0x1b8] sm:$0xff]
        %v3555 = vld [vmem:[%s3498 + $0x1c0] sm:$0xff]
        %v3556 = vld [vmem:[%s3498 + $0x1c8] sm:$0xff]
        %v3557 = vld [vmem:[%s3498 + $0x1d0] sm:$0xff]
        %v3558 = vld [vmem:[%s3498 + $0x1d8] sm:$0xff]
        %v3559 = vld [vmem:[%s3498 + $0x1e0] sm:$0xff]
        %v3560 = vld [vmem:[%s3498 + $0x1e8] sm:$0xff]
        %v3561 = vld [vmem:[%s3498 + $0x1f0] sm:$0xff]
        %v3562 = vld [vmem:[%s3498 + $0x1f8] sm:$0xff]
        %v3563 = vld [vmem:[%s3498 + $0x200] sm:$0xff]
        %v3564 = vld [vmem:[%s3498 + $0x208] sm:$0xff]
        %v3565 = vld [vmem:[%s3498 + $0x210] sm:$0xff]
        %v3566 = vld [vmem:[%s3498 + $0x218] sm:$0xff]
        %v3567 = vld [vmem:[%s3498 + $0x220] sm:$0xff]
        %v3568 = vld [vmem:[%s3498 + $0x228] sm:$0xff]
        %v3569 = vld [vmem:[%s3498 + $0x230] sm:$0xff]
        %v3570 = vld [vmem:[%s3498 + $0x238] sm:$0xff]
        %v3571 = vld [vmem:[%s3498 + $0x240] sm:$0xff]
        %v3572 = vld [vmem:[%s3498 + $0x248] sm:$0xff]
        %v3573 = vld [vmem:[%s3498 + $0x250] sm:$0xff]
        %v3574 = vld [vmem:[%s3498 + $0x258] sm:$0xff]
        %v3575 = vld [vmem:[%s3498 + $0x260] sm:$0xff]
        %v3576 = vld [vmem:[%s3498 + $0x268] sm:$0xff]
        %v3577 = vld [vmem:[%s3498 + $0x270] sm:$0xff]
        %v3578 = vld [vmem:[%s3498 + $0x278] sm:$0xff]
        %v3579 = vld [vmem:[%s3498 + $0x280] sm:$0xff]
        %v3580 = vld [vmem:[%s3498 + $0x288] sm:$0xff]
        %v3581 = vld [vmem:[%s3498 + $0x290] sm:$0xff]
        %v3582 = vld [vmem:[%s3498 + $0x298] sm:$0xff]
        %v3583 = vld [vmem:[%s3498 + $0x2a0] sm:$0xff]
        %v3584 = vld [vmem:[%s3498 + $0x2a8] sm:$0xff]
        %v3585 = vld [vmem:[%s3498 + $0x2b0] sm:$0xff]
        %v3586 = vld [vmem:[%s3498 + $0x2b8] sm:$0xff]
        %v3587 = vld [vmem:[%s3498 + $0x2c0] sm:$0xff]
        %v3588 = vld [vmem:[%s3498 + $0x2c8] sm:$0xff]
        %v3589 = vld [vmem:[%s3498 + $0x2d0] sm:$0xff]
        %v3590 = vld [vmem:[%s3498 + $0x2d8] sm:$0xff]
        %v3591 = vld [vmem:[%s3498 + $0x2e0] sm:$0xff]
        %v3592 = vld [vmem:[%s3498 + $0x2e8] sm:$0xff]
        %v3593 = vld [vmem:[%s3498 + $0x2f0] sm:$0xff]
        %v3594 = vld [vmem:[%s3498 + $0x2f8] sm:$0xff]
        %v3595 = vld [vmem:[%s3498 + $0x300] sm:$0xff]
        %v3596 = vld [vmem:[%s3498 + $0x308] sm:$0xff]
        %v3597 = vld [vmem:[%s3498 + $0x310] sm:$0xff]
        %v3598 = vld [vmem:[%s3498 + $0x318] sm:$0xff]
        %v3599 = vld [vmem:[%s3498 + $0x320] sm:$0xff]
        %v3600 = vld [vmem:[%s3498 + $0x328] sm:$0xff]
        %v3601 = vld [vmem:[%s3498 + $0x330] sm:$0xff]
        %v3602 = vld [vmem:[%s3498 + $0x338] sm:$0xff]
        %v3603 = vld [vmem:[%s3498 + $0x340] sm:$0xff]
        %v3604 = vld [vmem:[%s3498 + $0x348] sm:$0xff]
        %v3605 = vld [vmem:[%s3498 + $0x350] sm:$0xff]
        %v3606 = vld [vmem:[%s3498 + $0x358] sm:$0xff]
        %v3607 = vld [vmem:[%s3498 + $0x360] sm:$0xff]
        %v3608 = vld [vmem:[%s3498 + $0x368] sm:$0xff]
        %v3609 = vld [vmem:[%s3498 + $0x370] sm:$0xff]
        %v3610 = vld [vmem:[%s3498 + $0x378] sm:$0xff]
        %v3613 = vrot.slane %v2561, 3
        %v3614 = vrot.slane %v2563, 3
        %v3615 = vsel %vm1314, %v3613, %v3614
        %v3616 = vrot.slane %v2562, 3
        %v3617 = vrot.slane %v2564, 3
        %v3618 = vsel %vm1314, %v3616, %v3617
        %v3619 = vrot.slane %v2565, 3
        %v3620 = vsel %vm1314, %v3614, %v3619
        %v3621 = vrot.slane %v2566, 3
        %v3622 = vsel %vm1314, %v3617, %v3621
        %v3625 = vsel %vm2804, %v3618, 0
        %v3627 = vsel %vm2804, %v3622, 0
        %3629 = vmatpush.msra.mxu0 %v3559
        %3630 = vmatpush.msra.mxu0 %v3555
        %3631 = vmatpush.msra.mxu0 %v3551
        %3632 = vmatpush.msra.mxu0 %v3547
        %3633 = vmatpush.msra.mxu0 %v3543
        %3634 = vmatpush.msra.mxu0 %v3539
        %3635 = vmatpush.msra.mxu0 %v3535
        %3636 = vmatpush.msra.mxu0 %v3531
        %3637 = vmatpush.msra.mxu0 %v3527
        %3638 = vmatpush.msra.mxu0 %v3523
        %3639 = vmatpush.msra.mxu0 %v3519
        %3640 = vmatpush.msra.mxu0 %v3515
        %3641 = vmatpush.msra.mxu0 %v3511
        %3642 = vmatpush.msra.mxu0 %v3507
        %3643 = vmatpush.msra.mxu0 %v3503
        %3644 = vmatpush.msra.mxu0 %v3499
        %3645 = vmatmul.f32.gmra.mxu0 %v3615
        %v3646 = vpop.f32.mrf.mxu0
        %v3647 = vadd.f32 0.0, %v3646
        %3648 = vmatmul.f32.gmra.mxu0 %v3620
        %v3649 = vpop.f32.mrf.mxu0
        %v3650 = vadd.f32 0.0, %v3649
        %3651 = vdwg.mxu0
        %3652 = vmatpush.msra.mxu0 0.0
        %3653 = vmatpush.msra.mxu0 0.0
        %3654 = vmatpush.msra.mxu0 0.0
        %3655 = vmatpush.msra.mxu0 0.0
        %3656 = vmatpush.msra.mxu0 %v3607
        %3657 = vmatpush.msra.mxu0 %v3603
        %3658 = vmatpush.msra.mxu0 %v3599
        %3659 = vmatpush.msra.mxu0 %v3595
        %3660 = vmatpush.msra.mxu0 %v3591
        %3661 = vmatpush.msra.mxu0 %v3587
        %3662 = vmatpush.msra.mxu0 %v3583
        %3663 = vmatpush.msra.mxu0 %v3579
        %3664 = vmatpush.msra.mxu0 %v3575
        %3665 = vmatpush.msra.mxu0 %v3571
        %3666 = vmatpush.msra.mxu0 %v3567
        %3667 = vmatpush.msra.mxu0 %v3563
        %3668 = vmatmul.f32.gmra.mxu0 %v3625
        %v3669 = vpop.f32.mrf.mxu0
        %v3670 = vadd.f32 %v3647, %v3669
        %3671 = vmatmul.f32.gmra.mxu0 %v3627
        %v3672 = vpop.f32.mrf.mxu0
        %v3673 = vadd.f32 %v3650, %v3672
        %3674 = vdwg.mxu0
        %3675 = vmatpush.msra.mxu0 %v3560
        %3676 = vmatpush.msra.mxu0 %v3556
        %3677 = vmatpush.msra.mxu0 %v3552
        %3678 = vmatpush.msra.mxu0 %v3548
        %3679 = vmatpush.msra.mxu0 %v3544
        %3680 = vmatpush.msra.mxu0 %v3540
        %3681 = vmatpush.msra.mxu0 %v3536
        %3682 = vmatpush.msra.mxu0 %v3532
        %3683 = vmatpush.msra.mxu0 %v3528
        %3684 = vmatpush.msra.mxu0 %v3524
        %3685 = vmatpush.msra.mxu0 %v3520
        %3686 = vmatpush.msra.mxu0 %v3516
        %3687 = vmatpush.msra.mxu0 %v3512
        %3688 = vmatpush.msra.mxu0 %v3508
        %3689 = vmatpush.msra.mxu0 %v3504
        %3690 = vmatpush.msra.mxu0 %v3500
        %3691 = vmatmul.f32.gmra.mxu0 %v3615
        %v3692 = vpop.f32.mrf.mxu0
        %v3693 = vadd.f32 0.0, %v3692
        %3694 = vmatmul.f32.gmra.mxu0 %v3620
        %v3695 = vpop.f32.mrf.mxu0
        %v3696 = vadd.f32 0.0, %v3695
        %3697 = vdwg.mxu0
        %3698 = vmatpush.msra.mxu0 0.0
        %3699 = vmatpush.msra.mxu0 0.0
        %3700 = vmatpush.msra.mxu0 0.0
        %3701 = vmatpush.msra.mxu0 0.0
        %3702 = vmatpush.msra.mxu0 %v3608
        %3703 = vmatpush.msra.mxu0 %v3604
        %3704 = vmatpush.msra.mxu0 %v3600
        %3705 = vmatpush.msra.mxu0 %v3596
        %3706 = vmatpush.msra.mxu0 %v3592
        %3707 = vmatpush.msra.mxu0 %v3588
        %3708 = vmatpush.msra.mxu0 %v3584
        %3709 = vmatpush.msra.mxu0 %v3580
        %3710 = vmatpush.msra.mxu0 %v3576
        %3711 = vmatpush.msra.mxu0 %v3572
        %3712 = vmatpush.msra.mxu0 %v3568
        %3713 = vmatpush.msra.mxu0 %v3564
        %3714 = vmatmul.f32.gmra.mxu0 %v3625
        %v3715 = vpop.f32.mrf.mxu0
        %v3716 = vadd.f32 %v3693, %v3715
        %3717 = vmatmul.f32.gmra.mxu0 %v3627
        %v3718 = vpop.f32.mrf.mxu0
        %v3719 = vadd.f32 %v3696, %v3718
        %3720 = vdwg.mxu0
        %3721 = vmatpush.msra.mxu0 %v3561
        %3722 = vmatpush.msra.mxu0 %v3557
        %3723 = vmatpush.msra.mxu0 %v3553
        %3724 = vmatpush.msra.mxu0 %v3549
        %3725 = vmatpush.msra.mxu0 %v3545
        %3726 = vmatpush.msra.mxu0 %v3541
        %3727 = vmatpush.msra.mxu0 %v3537
        %3728 = vmatpush.msra.mxu0 %v3533
        %3729 = vmatpush.msra.mxu0 %v3529
        %3730 = vmatpush.msra.mxu0 %v3525
        %3731 = vmatpush.msra.mxu0 %v3521
        %3732 = vmatpush.msra.mxu0 %v3517
        %3733 = vmatpush.msra.mxu0 %v3513
        %3734 = vmatpush.msra.mxu0 %v3509
        %3735 = vmatpush.msra.mxu0 %v3505
        %3736 = vmatpush.msra.mxu0 %v3501
        %3737 = vmatmul.f32.gmra.mxu0 %v3615
        %v3738 = vpop.f32.mrf.mxu0
        %v3739 = vadd.f32 0.0, %v3738
        %3740 = vmatmul.f32.gmra.mxu0 %v3620
        %v3741 = vpop.f32.mrf.mxu0
        %v3742 = vadd.f32 0.0, %v3741
        %3743 = vdwg.mxu0
        %3744 = vmatpush.msra.mxu0 0.0
        %3745 = vmatpush.msra.mxu0 0.0
        %3746 = vmatpush.msra.mxu0 0.0
        %3747 = vmatpush.msra.mxu0 0.0
        %3748 = vmatpush.msra.mxu0 %v3609
        %3749 = vmatpush.msra.mxu0 %v3605
        %3750 = vmatpush.msra.mxu0 %v3601
        %3751 = vmatpush.msra.mxu0 %v3597
        %3752 = vmatpush.msra.mxu0 %v3593
        %3753 = vmatpush.msra.mxu0 %v3589
        %3754 = vmatpush.msra.mxu0 %v3585
        %3755 = vmatpush.msra.mxu0 %v3581
        %3756 = vmatpush.msra.mxu0 %v3577
        %3757 = vmatpush.msra.mxu0 %v3573
        %3758 = vmatpush.msra.mxu0 %v3569
        %3759 = vmatpush.msra.mxu0 %v3565
        %3760 = vmatmul.f32.gmra.mxu0 %v3625
        %v3761 = vpop.f32.mrf.mxu0
        %v3762 = vadd.f32 %v3739, %v3761
        %3763 = vmatmul.f32.gmra.mxu0 %v3627
        %v3764 = vpop.f32.mrf.mxu0
        %v3765 = vadd.f32 %v3742, %v3764
        %3766 = vdwg.mxu0
        %3767 = vmatpush.msra.mxu0 %v3562
        %3768 = vmatpush.msra.mxu0 %v3558
        %3769 = vmatpush.msra.mxu0 %v3554
        %3770 = vmatpush.msra.mxu0 %v3550
        %3771 = vmatpush.msra.mxu0 %v3546
        %3772 = vmatpush.msra.mxu0 %v3542
        %3773 = vmatpush.msra.mxu0 %v3538
        %3774 = vmatpush.msra.mxu0 %v3534
        %3775 = vmatpush.msra.mxu0 %v3530
        %3776 = vmatpush.msra.mxu0 %v3526
        %3777 = vmatpush.msra.mxu0 %v3522
        %3778 = vmatpush.msra.mxu0 %v3518
        %3779 = vmatpush.msra.mxu0 %v3514
        %3780 = vmatpush.msra.mxu0 %v3510
        %3781 = vmatpush.msra.mxu0 %v3506
        %3782 = vmatpush.msra.mxu0 %v3502
        %3783 = vmatmul.f32.gmra.mxu0 %v3615
        %v3784 = vpop.f32.mrf.mxu0
        %v3785 = vadd.f32 0.0, %v3784
        %3786 = vmatmul.f32.gmra.mxu0 %v3620
        %v3787 = vpop.f32.mrf.mxu0
        %v3788 = vadd.f32 0.0, %v3787
        %3789 = vdwg.mxu0
        %3790 = vmatpush.msra.mxu0 0.0
        %3791 = vmatpush.msra.mxu0 0.0
        %3792 = vmatpush.msra.mxu0 0.0
        %3793 = vmatpush.msra.mxu0 0.0
        %3794 = vmatpush.msra.mxu0 %v3610
        %3795 = vmatpush.msra.mxu0 %v3606
        %3796 = vmatpush.msra.mxu0 %v3602
        %3797 = vmatpush.msra.mxu0 %v3598
        %3798 = vmatpush.msra.mxu0 %v3594
        %3799 = vmatpush.msra.mxu0 %v3590
        %3800 = vmatpush.msra.mxu0 %v3586
        %3801 = vmatpush.msra.mxu0 %v3582
        %3802 = vmatpush.msra.mxu0 %v3578
        %3803 = vmatpush.msra.mxu0 %v3574
        %3804 = vmatpush.msra.mxu0 %v3570
        %3805 = vmatpush.msra.mxu0 %v3566
        %3806 = vmatmul.f32.gmra.mxu0 %v3625
        %v3807 = vpop.f32.mrf.mxu0
        %v3808 = vadd.f32 %v3785, %v3807
        %3809 = vmatmul.f32.gmra.mxu0 %v3627
        %v3810 = vpop.f32.mrf.mxu0
        %v3811 = vadd.f32 %v3788, %v3810
        %3812 = vdwg.mxu0
        %v3813 = vadd.f32 %v3490, %v3670
        %v3814 = vadd.f32 %v3491, %v3716
        %v3815 = vadd.f32 %v3492, %v3762
        %v3816 = vadd.f32 %v3493, %v3808
        %v3817 = vadd.f32 %v3494, %v3673
        %v3818 = vadd.f32 %v3495, %v3719
        %v3819 = vadd.f32 %v3496, %v3765
        %v3820 = vadd.f32 %v3497, %v3811
        %s3821 = scalar_lea.vmem [#allocation14], 3584
        %v3822 = vld [vmem:[%s3821] sm:$0xff]
        %v3823 = vld [vmem:[%s3821 + $0x8] sm:$0xff]
        %v3824 = vld [vmem:[%s3821 + $0x10] sm:$0xff]
        %v3825 = vld [vmem:[%s3821 + $0x18] sm:$0xff]
        %v3826 = vld [vmem:[%s3821 + $0x20] sm:$0xff]
        %v3827 = vld [vmem:[%s3821 + $0x28] sm:$0xff]
        %v3828 = vld [vmem:[%s3821 + $0x30] sm:$0xff]
        %v3829 = vld [vmem:[%s3821 + $0x38] sm:$0xff]
        %v3830 = vld [vmem:[%s3821 + $0x40] sm:$0xff]
        %v3831 = vld [vmem:[%s3821 + $0x48] sm:$0xff]
        %v3832 = vld [vmem:[%s3821 + $0x50] sm:$0xff]
        %v3833 = vld [vmem:[%s3821 + $0x58] sm:$0xff]
        %v3834 = vld [vmem:[%s3821 + $0x60] sm:$0xff]
        %v3835 = vld [vmem:[%s3821 + $0x68] sm:$0xff]
        %v3836 = vld [vmem:[%s3821 + $0x70] sm:$0xff]
        %v3837 = vld [vmem:[%s3821 + $0x78] sm:$0xff]
        %v3838 = vld [vmem:[%s3821 + $0x80] sm:$0xff]
        %v3839 = vld [vmem:[%s3821 + $0x88] sm:$0xff]
        %v3840 = vld [vmem:[%s3821 + $0x90] sm:$0xff]
        %v3841 = vld [vmem:[%s3821 + $0x98] sm:$0xff]
        %v3842 = vld [vmem:[%s3821 + $0xa0] sm:$0xff]
        %v3843 = vld [vmem:[%s3821 + $0xa8] sm:$0xff]
        %v3844 = vld [vmem:[%s3821 + $0xb0] sm:$0xff]
        %v3845 = vld [vmem:[%s3821 + $0xb8] sm:$0xff]
        %v3846 = vld [vmem:[%s3821 + $0xc0] sm:$0xff]
        %v3847 = vld [vmem:[%s3821 + $0xc8] sm:$0xff]
        %v3848 = vld [vmem:[%s3821 + $0xd0] sm:$0xff]
        %v3849 = vld [vmem:[%s3821 + $0xd8] sm:$0xff]
        %v3850 = vld [vmem:[%s3821 + $0xe0] sm:$0xff]
        %v3851 = vld [vmem:[%s3821 + $0xe8] sm:$0xff]
        %v3852 = vld [vmem:[%s3821 + $0xf0] sm:$0xff]
        %v3853 = vld [vmem:[%s3821 + $0xf8] sm:$0xff]
        %v3854 = vld [vmem:[%s3821 + $0x100] sm:$0xff]
        %v3855 = vld [vmem:[%s3821 + $0x108] sm:$0xff]
        %v3856 = vld [vmem:[%s3821 + $0x110] sm:$0xff]
        %v3857 = vld [vmem:[%s3821 + $0x118] sm:$0xff]
        %v3858 = vld [vmem:[%s3821 + $0x120] sm:$0xff]
        %v3859 = vld [vmem:[%s3821 + $0x128] sm:$0xff]
        %v3860 = vld [vmem:[%s3821 + $0x130] sm:$0xff]
        %v3861 = vld [vmem:[%s3821 + $0x138] sm:$0xff]
        %v3862 = vld [vmem:[%s3821 + $0x140] sm:$0xff]
        %v3863 = vld [vmem:[%s3821 + $0x148] sm:$0xff]
        %v3864 = vld [vmem:[%s3821 + $0x150] sm:$0xff]
        %v3865 = vld [vmem:[%s3821 + $0x158] sm:$0xff]
        %v3866 = vld [vmem:[%s3821 + $0x160] sm:$0xff]
        %v3867 = vld [vmem:[%s3821 + $0x168] sm:$0xff]
        %v3868 = vld [vmem:[%s3821 + $0x170] sm:$0xff]
        %v3869 = vld [vmem:[%s3821 + $0x178] sm:$0xff]
        %v3870 = vld [vmem:[%s3821 + $0x180] sm:$0xff]
        %v3871 = vld [vmem:[%s3821 + $0x188] sm:$0xff]
        %v3872 = vld [vmem:[%s3821 + $0x190] sm:$0xff]
        %v3873 = vld [vmem:[%s3821 + $0x198] sm:$0xff]
        %v3874 = vld [vmem:[%s3821 + $0x1a0] sm:$0xff]
        %v3875 = vld [vmem:[%s3821 + $0x1a8] sm:$0xff]
        %v3876 = vld [vmem:[%s3821 + $0x1b0] sm:$0xff]
        %v3877 = vld [vmem:[%s3821 + $0x1b8] sm:$0xff]
        %v3878 = vld [vmem:[%s3821 + $0x1c0] sm:$0xff]
        %v3879 = vld [vmem:[%s3821 + $0x1c8] sm:$0xff]
        %v3880 = vld [vmem:[%s3821 + $0x1d0] sm:$0xff]
        %v3881 = vld [vmem:[%s3821 + $0x1d8] sm:$0xff]
        %v3882 = vld [vmem:[%s3821 + $0x1e0] sm:$0xff]
        %v3883 = vld [vmem:[%s3821 + $0x1e8] sm:$0xff]
        %v3884 = vld [vmem:[%s3821 + $0x1f0] sm:$0xff]
        %v3885 = vld [vmem:[%s3821 + $0x1f8] sm:$0xff]
        %v3886 = vld [vmem:[%s3821 + $0x200] sm:$0xff]
        %v3887 = vld [vmem:[%s3821 + $0x208] sm:$0xff]
        %v3888 = vld [vmem:[%s3821 + $0x210] sm:$0xff]
        %v3889 = vld [vmem:[%s3821 + $0x218] sm:$0xff]
        %v3890 = vld [vmem:[%s3821 + $0x220] sm:$0xff]
        %v3891 = vld [vmem:[%s3821 + $0x228] sm:$0xff]
        %v3892 = vld [vmem:[%s3821 + $0x230] sm:$0xff]
        %v3893 = vld [vmem:[%s3821 + $0x238] sm:$0xff]
        %v3894 = vld [vmem:[%s3821 + $0x240] sm:$0xff]
        %v3895 = vld [vmem:[%s3821 + $0x248] sm:$0xff]
        %v3896 = vld [vmem:[%s3821 + $0x250] sm:$0xff]
        %v3897 = vld [vmem:[%s3821 + $0x258] sm:$0xff]
        %v3898 = vld [vmem:[%s3821 + $0x260] sm:$0xff]
        %v3899 = vld [vmem:[%s3821 + $0x268] sm:$0xff]
        %v3900 = vld [vmem:[%s3821 + $0x270] sm:$0xff]
        %v3901 = vld [vmem:[%s3821 + $0x278] sm:$0xff]
        %v3902 = vld [vmem:[%s3821 + $0x280] sm:$0xff]
        %v3903 = vld [vmem:[%s3821 + $0x288] sm:$0xff]
        %v3904 = vld [vmem:[%s3821 + $0x290] sm:$0xff]
        %v3905 = vld [vmem:[%s3821 + $0x298] sm:$0xff]
        %v3906 = vld [vmem:[%s3821 + $0x2a0] sm:$0xff]
        %v3907 = vld [vmem:[%s3821 + $0x2a8] sm:$0xff]
        %v3908 = vld [vmem:[%s3821 + $0x2b0] sm:$0xff]
        %v3909 = vld [vmem:[%s3821 + $0x2b8] sm:$0xff]
        %v3910 = vld [vmem:[%s3821 + $0x2c0] sm:$0xff]
        %v3911 = vld [vmem:[%s3821 + $0x2c8] sm:$0xff]
        %v3912 = vld [vmem:[%s3821 + $0x2d0] sm:$0xff]
        %v3913 = vld [vmem:[%s3821 + $0x2d8] sm:$0xff]
        %v3914 = vld [vmem:[%s3821 + $0x2e0] sm:$0xff]
        %v3915 = vld [vmem:[%s3821 + $0x2e8] sm:$0xff]
        %v3916 = vld [vmem:[%s3821 + $0x2f0] sm:$0xff]
        %v3917 = vld [vmem:[%s3821 + $0x2f8] sm:$0xff]
        %v3918 = vld [vmem:[%s3821 + $0x300] sm:$0xff]
        %v3919 = vld [vmem:[%s3821 + $0x308] sm:$0xff]
        %v3920 = vld [vmem:[%s3821 + $0x310] sm:$0xff]
        %v3921 = vld [vmem:[%s3821 + $0x318] sm:$0xff]
        %v3922 = vld [vmem:[%s3821 + $0x320] sm:$0xff]
        %v3923 = vld [vmem:[%s3821 + $0x328] sm:$0xff]
        %v3924 = vld [vmem:[%s3821 + $0x330] sm:$0xff]
        %v3925 = vld [vmem:[%s3821 + $0x338] sm:$0xff]
        %v3926 = vld [vmem:[%s3821 + $0x340] sm:$0xff]
        %v3927 = vld [vmem:[%s3821 + $0x348] sm:$0xff]
        %v3928 = vld [vmem:[%s3821 + $0x350] sm:$0xff]
        %v3929 = vld [vmem:[%s3821 + $0x358] sm:$0xff]
        %v3930 = vld [vmem:[%s3821 + $0x360] sm:$0xff]
        %v3931 = vld [vmem:[%s3821 + $0x368] sm:$0xff]
        %v3932 = vld [vmem:[%s3821 + $0x370] sm:$0xff]
        %v3933 = vld [vmem:[%s3821 + $0x378] sm:$0xff]
        %v3934 = vrot.slane %v2561, 4
        %v3935 = vrot.slane %v2563, 4
        %v3936 = vsel %vm855, %v3934, %v3935
        %v3937 = vrot.slane %v2562, 4
        %v3938 = vrot.slane %v2564, 4
        %v3939 = vsel %vm855, %v3937, %v3938
        %v3940 = vrot.slane %v2565, 4
        %v3941 = vsel %vm855, %v3935, %v3940
        %v3942 = vrot.slane %v2566, 4
        %v3943 = vsel %vm855, %v3938, %v3942
        %v3946 = vsel %vm2804, %v3939, 0
        %v3948 = vsel %vm2804, %v3943, 0
        %3950 = vmatpush.msra.mxu0 %v3882
        %3951 = vmatpush.msra.mxu0 %v3878
        %3952 = vmatpush.msra.mxu0 %v3874
        %3953 = vmatpush.msra.mxu0 %v3870
        %3954 = vmatpush.msra.mxu0 %v3866
        %3955 = vmatpush.msra.mxu0 %v3862
        %3956 = vmatpush.msra.mxu0 %v3858
        %3957 = vmatpush.msra.mxu0 %v3854
        %3958 = vmatpush.msra.mxu0 %v3850
        %3959 = vmatpush.msra.mxu0 %v3846
        %3960 = vmatpush.msra.mxu0 %v3842
        %3961 = vmatpush.msra.mxu0 %v3838
        %3962 = vmatpush.msra.mxu0 %v3834
        %3963 = vmatpush.msra.mxu0 %v3830
        %3964 = vmatpush.msra.mxu0 %v3826
        %3965 = vmatpush.msra.mxu0 %v3822
        %3966 = vmatmul.f32.gmra.mxu0 %v3936
        %v3967 = vpop.f32.mrf.mxu0
        %v3968 = vadd.f32 0.0, %v3967
        %3969 = vmatmul.f32.gmra.mxu0 %v3941
        %v3970 = vpop.f32.mrf.mxu0
        %v3971 = vadd.f32 0.0, %v3970
        %3972 = vdwg.mxu0
        %3973 = vmatpush.msra.mxu0 0.0
        %3974 = vmatpush.msra.mxu0 0.0
        %3975 = vmatpush.msra.mxu0 0.0
        %3976 = vmatpush.msra.mxu0 0.0
        %3977 = vmatpush.msra.mxu0 %v3930
        %3978 = vmatpush.msra.mxu0 %v3926
        %3979 = vmatpush.msra.mxu0 %v3922
        %3980 = vmatpush.msra.mxu0 %v3918
        %3981 = vmatpush.msra.mxu0 %v3914
        %3982 = vmatpush.msra.mxu0 %v3910
        %3983 = vmatpush.msra.mxu0 %v3906
        %3984 = vmatpush.msra.mxu0 %v3902
        %3985 = vmatpush.msra.mxu0 %v3898
        %3986 = vmatpush.msra.mxu0 %v3894
        %3987 = vmatpush.msra.mxu0 %v3890
        %3988 = vmatpush.msra.mxu0 %v3886
        %3989 = vmatmul.f32.gmra.mxu0 %v3946
        %v3990 = vpop.f32.mrf.mxu0
        %v3991 = vadd.f32 %v3968, %v3990
        %3992 = vmatmul.f32.gmra.mxu0 %v3948
        %v3993 = vpop.f32.mrf.mxu0
        %v3994 = vadd.f32 %v3971, %v3993
        %3995 = vdwg.mxu0
        %3996 = vmatpush.msra.mxu0 %v3883
        %3997 = vmatpush.msra.mxu0 %v3879
        %3998 = vmatpush.msra.mxu0 %v3875
        %3999 = vmatpush.msra.mxu0 %v3871
        %4000 = vmatpush.msra.mxu0 %v3867
        %4001 = vmatpush.msra.mxu0 %v3863
        %4002 = vmatpush.msra.mxu0 %v3859
        %4003 = vmatpush.msra.mxu0 %v3855
        %4004 = vmatpush.msra.mxu0 %v3851
        %4005 = vmatpush.msra.mxu0 %v3847
        %4006 = vmatpush.msra.mxu0 %v3843
        %4007 = vmatpush.msra.mxu0 %v3839
        %4008 = vmatpush.msra.mxu0 %v3835
        %4009 = vmatpush.msra.mxu0 %v3831
        %4010 = vmatpush.msra.mxu0 %v3827
        %4011 = vmatpush.msra.mxu0 %v3823
        %4012 = vmatmul.f32.gmra.mxu0 %v3936
        %v4013 = vpop.f32.mrf.mxu0
        %v4014 = vadd.f32 0.0, %v4013
        %4015 = vmatmul.f32.gmra.mxu0 %v3941
        %v4016 = vpop.f32.mrf.mxu0
        %v4017 = vadd.f32 0.0, %v4016
        %4018 = vdwg.mxu0
        %4019 = vmatpush.msra.mxu0 0.0
        %4020 = vmatpush.msra.mxu0 0.0
        %4021 = vmatpush.msra.mxu0 0.0
        %4022 = vmatpush.msra.mxu0 0.0
        %4023 = vmatpush.msra.mxu0 %v3931
        %4024 = vmatpush.msra.mxu0 %v3927
        %4025 = vmatpush.msra.mxu0 %v3923
        %4026 = vmatpush.msra.mxu0 %v3919
        %4027 = vmatpush.msra.mxu0 %v3915
        %4028 = vmatpush.msra.mxu0 %v3911
        %4029 = vmatpush.msra.mxu0 %v3907
        %4030 = vmatpush.msra.mxu0 %v3903
        %4031 = vmatpush.msra.mxu0 %v3899
        %4032 = vmatpush.msra.mxu0 %v3895
        %4033 = vmatpush.msra.mxu0 %v3891
        %4034 = vmatpush.msra.mxu0 %v3887
        %4035 = vmatmul.f32.gmra.mxu0 %v3946
        %v4036 = vpop.f32.mrf.mxu0
        %v4037 = vadd.f32 %v4014, %v4036
        %4038 = vmatmul.f32.gmra.mxu0 %v3948
        %v4039 = vpop.f32.mrf.mxu0
        %v4040 = vadd.f32 %v4017, %v4039
        %4041 = vdwg.mxu0
        %4042 = vmatpush.msra.mxu0 %v3884
        %4043 = vmatpush.msra.mxu0 %v3880
        %4044 = vmatpush.msra.mxu0 %v3876
        %4045 = vmatpush.msra.mxu0 %v3872
        %4046 = vmatpush.msra.mxu0 %v3868
        %4047 = vmatpush.msra.mxu0 %v3864
        %4048 = vmatpush.msra.mxu0 %v3860
        %4049 = vmatpush.msra.mxu0 %v3856
        %4050 = vmatpush.msra.mxu0 %v3852
        %4051 = vmatpush.msra.mxu0 %v3848
        %4052 = vmatpush.msra.mxu0 %v3844
        %4053 = vmatpush.msra.mxu0 %v3840
        %4054 = vmatpush.msra.mxu0 %v3836
        %4055 = vmatpush.msra.mxu0 %v3832
        %4056 = vmatpush.msra.mxu0 %v3828
        %4057 = vmatpush.msra.mxu0 %v3824
        %4058 = vmatmul.f32.gmra.mxu0 %v3936
        %v4059 = vpop.f32.mrf.mxu0
        %v4060 = vadd.f32 0.0, %v4059
        %4061 = vmatmul.f32.gmra.mxu0 %v3941
        %v4062 = vpop.f32.mrf.mxu0
        %v4063 = vadd.f32 0.0, %v4062
        %4064 = vdwg.mxu0
        %4065 = vmatpush.msra.mxu0 0.0
        %4066 = vmatpush.msra.mxu0 0.0
        %4067 = vmatpush.msra.mxu0 0.0
        %4068 = vmatpush.msra.mxu0 0.0
        %4069 = vmatpush.msra.mxu0 %v3932
        %4070 = vmatpush.msra.mxu0 %v3928
        %4071 = vmatpush.msra.mxu0 %v3924
        %4072 = vmatpush.msra.mxu0 %v3920
        %4073 = vmatpush.msra.mxu0 %v3916
        %4074 = vmatpush.msra.mxu0 %v3912
        %4075 = vmatpush.msra.mxu0 %v3908
        %4076 = vmatpush.msra.mxu0 %v3904
        %4077 = vmatpush.msra.mxu0 %v3900
        %4078 = vmatpush.msra.mxu0 %v3896
        %4079 = vmatpush.msra.mxu0 %v3892
        %4080 = vmatpush.msra.mxu0 %v3888
        %4081 = vmatmul.f32.gmra.mxu0 %v3946
        %v4082 = vpop.f32.mrf.mxu0
        %v4083 = vadd.f32 %v4060, %v4082
        %4084 = vmatmul.f32.gmra.mxu0 %v3948
        %v4085 = vpop.f32.mrf.mxu0
        %v4086 = vadd.f32 %v4063, %v4085
        %4087 = vdwg.mxu0
        %4088 = vmatpush.msra.mxu0 %v3885
        %4089 = vmatpush.msra.mxu0 %v3881
        %4090 = vmatpush.msra.mxu0 %v3877
        %4091 = vmatpush.msra.mxu0 %v3873
        %4092 = vmatpush.msra.mxu0 %v3869
        %4093 = vmatpush.msra.mxu0 %v3865
        %4094 = vmatpush.msra.mxu0 %v3861
        %4095 = vmatpush.msra.mxu0 %v3857
        %4096 = vmatpush.msra.mxu0 %v3853
        %4097 = vmatpush.msra.mxu0 %v3849
        %4098 = vmatpush.msra.mxu0 %v3845
        %4099 = vmatpush.msra.mxu0 %v3841
        %4100 = vmatpush.msra.mxu0 %v3837
        %4101 = vmatpush.msra.mxu0 %v3833
        %4102 = vmatpush.msra.mxu0 %v3829
        %4103 = vmatpush.msra.mxu0 %v3825
        %4104 = vmatmul.f32.gmra.mxu0 %v3936
        %v4105 = vpop.f32.mrf.mxu0
        %v4106 = vadd.f32 0.0, %v4105
        %4107 = vmatmul.f32.gmra.mxu0 %v3941
        %v4108 = vpop.f32.mrf.mxu0
        %v4109 = vadd.f32 0.0, %v4108
        %4110 = vdwg.mxu0
        %4111 = vmatpush.msra.mxu0 0.0
        %4112 = vmatpush.msra.mxu0 0.0
        %4113 = vmatpush.msra.mxu0 0.0
        %4114 = vmatpush.msra.mxu0 0.0
        %4115 = vmatpush.msra.mxu0 %v3933
        %4116 = vmatpush.msra.mxu0 %v3929
        %4117 = vmatpush.msra.mxu0 %v3925
        %4118 = vmatpush.msra.mxu0 %v3921
        %4119 = vmatpush.msra.mxu0 %v3917
        %4120 = vmatpush.msra.mxu0 %v3913
        %4121 = vmatpush.msra.mxu0 %v3909
        %4122 = vmatpush.msra.mxu0 %v3905
        %4123 = vmatpush.msra.mxu0 %v3901
        %4124 = vmatpush.msra.mxu0 %v3897
        %4125 = vmatpush.msra.mxu0 %v3893
        %4126 = vmatpush.msra.mxu0 %v3889
        %4127 = vmatmul.f32.gmra.mxu0 %v3946
        %v4128 = vpop.f32.mrf.mxu0
        %v4129 = vadd.f32 %v4106, %v4128
        %4130 = vmatmul.f32.gmra.mxu0 %v3948
        %v4131 = vpop.f32.mrf.mxu0
        %v4132 = vadd.f32 %v4109, %v4131
        %4133 = vdwg.mxu0
        %v4134 = vadd.f32 %v3813, %v3991
        %v4135 = vadd.f32 %v3814, %v4037
        %v4136 = vadd.f32 %v3815, %v4083
        %v4137 = vadd.f32 %v3816, %v4129
        %v4138 = vadd.f32 %v3817, %v3994
        %v4139 = vadd.f32 %v3818, %v4040
        %v4140 = vadd.f32 %v3819, %v4086
        %v4141 = vadd.f32 %v3820, %v4132
        %v4142 = vld [vmem:[#allocation16] sm:$0xf]
        %v4144 = vperm.slane %v4142, 0
        %v4145 = vperm.slane %v4142, 1
        %v4146 = vperm.slane %v4142, 2
        %v4147 = vperm.slane %v4142, 3
        %v4152 = vmul.f32 %v4134, %v4144
        %v4153 = vmul.f32 %v4135, %v4145
        %v4154 = vmul.f32 %v4136, %v4146
        %v4155 = vmul.f32 %v4137, %v4147
        %v4156 = vmul.f32 %v4138, %v4144
        %v4157 = vmul.f32 %v4139, %v4145
        %v4158 = vmul.f32 %v4140, %v4146
        %v4159 = vmul.f32 %v4141, %v4147
        %v4160 = vld [vmem:[#allocation17] sm:$0xf]
        %v4162 = vperm.slane %v4160, 0
        %v4163 = vperm.slane %v4160, 1
        %v4164 = vperm.slane %v4160, 2
        %v4165 = vperm.slane %v4160, 3
        %v4170 = vadd.f32 %v4152, %v4162
        %v4171 = vadd.f32 %v4153, %v4163
        %v4172 = vadd.f32 %v4154, %v4164
        %v4173 = vadd.f32 %v4155, %v4165
        %v4174 = vadd.f32 %v4156, %v4162
        %v4175 = vadd.f32 %v4157, %v4163
        %v4176 = vadd.f32 %v4158, %v4164
        %v4177 = vadd.f32 %v4159, %v4165
        %v4178 = vmax.f32 %v4170, 0.0
        %v4179 = vmax.f32 %v4171, 0.0
        %v4180 = vmax.f32 %v4172, 0.0
        %v4181 = vmax.f32 %v4173, 0.0
        %v4182 = vmax.f32 %v4174, 0.0
        %v4183 = vmax.f32 %v4175, 0.0
        %v4184 = vmax.f32 %v4176, 0.0
        %v4185 = vmax.f32 %v4177, 0.0
        %v4186 = vld [vmem:[#allocation19] sm:$0xff]
        %v4187 = vld [vmem:[#allocation19 + $0x8] sm:$0xff]
        %v4188 = vld [vmem:[#allocation19 + $0x10] sm:$0xff]
        %v4189 = vld [vmem:[#allocation19 + $0x18] sm:$0xff]
        %v4190 = vld [vmem:[#allocation19 + $0x20] sm:$0xff]
        %v4191 = vld [vmem:[#allocation19 + $0x28] sm:$0xff]
        %v4192 = vld [vmem:[#allocation19 + $0x30] sm:$0xff]
        %v4193 = vld [vmem:[#allocation19 + $0x38] sm:$0xff]
        %v4194 = vld [vmem:[#allocation19 + $0x40] sm:$0xff]
        %v4195 = vld [vmem:[#allocation19 + $0x48] sm:$0xff]
        %v4196 = vld [vmem:[#allocation19 + $0x50] sm:$0xff]
        %v4197 = vld [vmem:[#allocation19 + $0x58] sm:$0xff]
        %v4198 = vld [vmem:[#allocation19 + $0x60] sm:$0xff]
        %v4199 = vld [vmem:[#allocation19 + $0x68] sm:$0xff]
        %v4200 = vld [vmem:[#allocation19 + $0x70] sm:$0xff]
        %v4201 = vld [vmem:[#allocation19 + $0x78] sm:$0xff]
        %v4202 = vld [vmem:[#allocation19 + $0x80] sm:$0xff]
        %v4203 = vld [vmem:[#allocation19 + $0x88] sm:$0xff]
        %v4204 = vld [vmem:[#allocation19 + $0x90] sm:$0xff]
        %v4205 = vld [vmem:[#allocation19 + $0x98] sm:$0xff]
        %v4206 = vld [vmem:[#allocation19 + $0xa0] sm:$0xff]
        %v4207 = vld [vmem:[#allocation19 + $0xa8] sm:$0xff]
        %v4208 = vld [vmem:[#allocation19 + $0xb0] sm:$0xff]
        %v4209 = vld [vmem:[#allocation19 + $0xb8] sm:$0xff]
        %v4210 = vld [vmem:[#allocation19 + $0xc0] sm:$0xff]
        %v4211 = vld [vmem:[#allocation19 + $0xc8] sm:$0xff]
        %v4212 = vld [vmem:[#allocation19 + $0xd0] sm:$0xff]
        %v4213 = vld [vmem:[#allocation19 + $0xd8] sm:$0xff]
        %v4214 = vld [vmem:[#allocation19 + $0xe0] sm:$0xff]
        %v4215 = vld [vmem:[#allocation19 + $0xe8] sm:$0xff]
        %v4216 = vld [vmem:[#allocation19 + $0xf0] sm:$0xff]
        %v4217 = vld [vmem:[#allocation19 + $0xf8] sm:$0xff]
        %v4218 = vld [vmem:[#allocation19 + $0x100] sm:$0xff]
        %v4219 = vld [vmem:[#allocation19 + $0x108] sm:$0xff]
        %v4220 = vld [vmem:[#allocation19 + $0x110] sm:$0xff]
        %v4221 = vld [vmem:[#allocation19 + $0x118] sm:$0xff]
        %v4222 = vld [vmem:[#allocation19 + $0x120] sm:$0xff]
        %v4223 = vld [vmem:[#allocation19 + $0x128] sm:$0xff]
        %v4224 = vld [vmem:[#allocation19 + $0x130] sm:$0xff]
        %v4225 = vld [vmem:[#allocation19 + $0x138] sm:$0xff]
        %v4226 = vld [vmem:[#allocation19 + $0x140] sm:$0xff]
        %v4227 = vld [vmem:[#allocation19 + $0x148] sm:$0xff]
        %v4228 = vld [vmem:[#allocation19 + $0x150] sm:$0xff]
        %v4229 = vld [vmem:[#allocation19 + $0x158] sm:$0xff]
        %v4230 = vld [vmem:[#allocation19 + $0x160] sm:$0xff]
        %v4231 = vld [vmem:[#allocation19 + $0x168] sm:$0xff]
        %v4232 = vld [vmem:[#allocation19 + $0x170] sm:$0xff]
        %v4233 = vld [vmem:[#allocation19 + $0x178] sm:$0xff]
        %v4234 = vld [vmem:[#allocation19 + $0x180] sm:$0xff]
        %v4235 = vld [vmem:[#allocation19 + $0x188] sm:$0xff]
        %v4236 = vld [vmem:[#allocation19 + $0x190] sm:$0xff]
        %v4237 = vld [vmem:[#allocation19 + $0x198] sm:$0xff]
        %v4238 = vld [vmem:[#allocation19 + $0x1a0] sm:$0xff]
        %v4239 = vld [vmem:[#allocation19 + $0x1a8] sm:$0xff]
        %v4240 = vld [vmem:[#allocation19 + $0x1b0] sm:$0xff]
        %v4241 = vld [vmem:[#allocation19 + $0x1b8] sm:$0xff]
        %v4242 = vld [vmem:[#allocation19 + $0x1c0] sm:$0xff]
        %v4243 = vld [vmem:[#allocation19 + $0x1c8] sm:$0xff]
        %v4244 = vld [vmem:[#allocation19 + $0x1d0] sm:$0xff]
        %v4245 = vld [vmem:[#allocation19 + $0x1d8] sm:$0xff]
        %v4246 = vld [vmem:[#allocation19 + $0x1e0] sm:$0xff]
        %v4247 = vld [vmem:[#allocation19 + $0x1e8] sm:$0xff]
        %v4248 = vld [vmem:[#allocation19 + $0x1f0] sm:$0xff]
        %v4249 = vld [vmem:[#allocation19 + $0x1f8] sm:$0xff]
        %v4250 = vld [vmem:[#allocation19 + $0x200] sm:$0xff]
        %v4251 = vld [vmem:[#allocation19 + $0x208] sm:$0xff]
        %v4252 = vld [vmem:[#allocation19 + $0x210] sm:$0xff]
        %v4253 = vld [vmem:[#allocation19 + $0x218] sm:$0xff]
        %v4254 = vld [vmem:[#allocation19 + $0x220] sm:$0xff]
        %v4255 = vld [vmem:[#allocation19 + $0x228] sm:$0xff]
        %v4256 = vld [vmem:[#allocation19 + $0x230] sm:$0xff]
        %v4257 = vld [vmem:[#allocation19 + $0x238] sm:$0xff]
        %v4258 = vld [vmem:[#allocation19 + $0x240] sm:$0xff]
        %v4259 = vld [vmem:[#allocation19 + $0x248] sm:$0xff]
        %v4260 = vld [vmem:[#allocation19 + $0x250] sm:$0xff]
        %v4261 = vld [vmem:[#allocation19 + $0x258] sm:$0xff]
        %v4262 = vld [vmem:[#allocation19 + $0x260] sm:$0xff]
        %v4263 = vld [vmem:[#allocation19 + $0x268] sm:$0xff]
        %v4264 = vld [vmem:[#allocation19 + $0x270] sm:$0xff]
        %v4265 = vld [vmem:[#allocation19 + $0x278] sm:$0xff]
        %v4266 = vld [vmem:[#allocation19 + $0x280] sm:$0xff]
        %v4267 = vld [vmem:[#allocation19 + $0x288] sm:$0xff]
        %v4268 = vld [vmem:[#allocation19 + $0x290] sm:$0xff]
        %v4269 = vld [vmem:[#allocation19 + $0x298] sm:$0xff]
        %v4270 = vld [vmem:[#allocation19 + $0x2a0] sm:$0xff]
        %v4271 = vld [vmem:[#allocation19 + $0x2a8] sm:$0xff]
        %v4272 = vld [vmem:[#allocation19 + $0x2b0] sm:$0xff]
        %v4273 = vld [vmem:[#allocation19 + $0x2b8] sm:$0xff]
        %v4274 = vld [vmem:[#allocation19 + $0x2c0] sm:$0xff]
        %v4275 = vld [vmem:[#allocation19 + $0x2c8] sm:$0xff]
        %v4276 = vld [vmem:[#allocation19 + $0x2d0] sm:$0xff]
        %v4277 = vld [vmem:[#allocation19 + $0x2d8] sm:$0xff]
        %v4278 = vld [vmem:[#allocation19 + $0x2e0] sm:$0xff]
        %v4279 = vld [vmem:[#allocation19 + $0x2e8] sm:$0xff]
        %v4280 = vld [vmem:[#allocation19 + $0x2f0] sm:$0xff]
        %v4281 = vld [vmem:[#allocation19 + $0x2f8] sm:$0xff]
        %v4282 = vld [vmem:[#allocation19 + $0x300] sm:$0xff]
        %v4283 = vld [vmem:[#allocation19 + $0x308] sm:$0xff]
        %v4284 = vld [vmem:[#allocation19 + $0x310] sm:$0xff]
        %v4285 = vld [vmem:[#allocation19 + $0x318] sm:$0xff]
        %v4286 = vld [vmem:[#allocation19 + $0x320] sm:$0xff]
        %v4287 = vld [vmem:[#allocation19 + $0x328] sm:$0xff]
        %v4288 = vld [vmem:[#allocation19 + $0x330] sm:$0xff]
        %v4289 = vld [vmem:[#allocation19 + $0x338] sm:$0xff]
        %v4290 = vld [vmem:[#allocation19 + $0x340] sm:$0xff]
        %v4291 = vld [vmem:[#allocation19 + $0x348] sm:$0xff]
        %v4292 = vld [vmem:[#allocation19 + $0x350] sm:$0xff]
        %v4293 = vld [vmem:[#allocation19 + $0x358] sm:$0xff]
        %v4294 = vld [vmem:[#allocation19 + $0x360] sm:$0xff]
        %v4295 = vld [vmem:[#allocation19 + $0x368] sm:$0xff]
        %v4296 = vld [vmem:[#allocation19 + $0x370] sm:$0xff]
        %v4297 = vld [vmem:[#allocation19 + $0x378] sm:$0xff]
        %v4299 = vsel %vm1830, %v4181, 0
        %v4302 = vsel %vm1830, %v4185, 0
        %4304 = vmatpush.msra.mxu0 %v4216
        %4305 = vmatpush.msra.mxu0 %v4214
        %4306 = vmatpush.msra.mxu0 %v4212
        %4307 = vmatpush.msra.mxu0 %v4210
        %4308 = vmatpush.msra.mxu0 %v4208
        %4309 = vmatpush.msra.mxu0 %v4206
        %4310 = vmatpush.msra.mxu0 %v4204
        %4311 = vmatpush.msra.mxu0 %v4202
        %4312 = vmatpush.msra.mxu0 %v4200
        %4313 = vmatpush.msra.mxu0 %v4198
        %4314 = vmatpush.msra.mxu0 %v4196
        %4315 = vmatpush.msra.mxu0 %v4194
        %4316 = vmatpush.msra.mxu0 %v4192
        %4317 = vmatpush.msra.mxu0 %v4190
        %4318 = vmatpush.msra.mxu0 %v4188
        %4319 = vmatpush.msra.mxu0 %v4186
        %4320 = vmatmul.f32.gmra.mxu0 %v4178
        %v4321 = vpop.f32.mrf.mxu0
        %v4322 = vadd.f32 0.0, %v4321
        %4323 = vmatmul.f32.gmra.mxu0 %v4182
        %v4324 = vpop.f32.mrf.mxu0
        %v4325 = vadd.f32 0.0, %v4324
        %4326 = vdwg.mxu0
        %4327 = vmatpush.msra.mxu0 %v4248
        %4328 = vmatpush.msra.mxu0 %v4246
        %4329 = vmatpush.msra.mxu0 %v4244
        %4330 = vmatpush.msra.mxu0 %v4242
        %4331 = vmatpush.msra.mxu0 %v4240
        %4332 = vmatpush.msra.mxu0 %v4238
        %4333 = vmatpush.msra.mxu0 %v4236
        %4334 = vmatpush.msra.mxu0 %v4234
        %4335 = vmatpush.msra.mxu0 %v4232
        %4336 = vmatpush.msra.mxu0 %v4230
        %4337 = vmatpush.msra.mxu0 %v4228
        %4338 = vmatpush.msra.mxu0 %v4226
        %4339 = vmatpush.msra.mxu0 %v4224
        %4340 = vmatpush.msra.mxu0 %v4222
        %4341 = vmatpush.msra.mxu0 %v4220
        %4342 = vmatpush.msra.mxu0 %v4218
        %4343 = vmatmul.f32.gmra.mxu0 %v4179
        %v4344 = vpop.f32.mrf.mxu0
        %v4345 = vadd.f32 %v4322, %v4344
        %4346 = vmatmul.f32.gmra.mxu0 %v4183
        %v4347 = vpop.f32.mrf.mxu0
        %v4348 = vadd.f32 %v4325, %v4347
        %4349 = vdwg.mxu0
        %4350 = vmatpush.msra.mxu0 %v4280
        %4351 = vmatpush.msra.mxu0 %v4278
        %4352 = vmatpush.msra.mxu0 %v4276
        %4353 = vmatpush.msra.mxu0 %v4274
        %4354 = vmatpush.msra.mxu0 %v4272
        %4355 = vmatpush.msra.mxu0 %v4270
        %4356 = vmatpush.msra.mxu0 %v4268
        %4357 = vmatpush.msra.mxu0 %v4266
        %4358 = vmatpush.msra.mxu0 %v4264
        %4359 = vmatpush.msra.mxu0 %v4262
        %4360 = vmatpush.msra.mxu0 %v4260
        %4361 = vmatpush.msra.mxu0 %v4258
        %4362 = vmatpush.msra.mxu0 %v4256
        %4363 = vmatpush.msra.mxu0 %v4254
        %4364 = vmatpush.msra.mxu0 %v4252
        %4365 = vmatpush.msra.mxu0 %v4250
        %4366 = vmatmul.f32.gmra.mxu0 %v4180
        %v4367 = vpop.f32.mrf.mxu0
        %v4368 = vadd.f32 %v4345, %v4367
        %4369 = vmatmul.f32.gmra.mxu0 %v4184
        %v4370 = vpop.f32.mrf.mxu0
        %v4371 = vadd.f32 %v4348, %v4370
        %4372 = vdwg.mxu0
        %4373 = vmatpush.msra.mxu0 0.0
        %4374 = vmatpush.msra.mxu0 0.0
        %4375 = vmatpush.msra.mxu0 0.0
        %4376 = vmatpush.msra.mxu0 0.0
        %4377 = vmatpush.msra.mxu0 0.0
        %4378 = vmatpush.msra.mxu0 0.0
        %4379 = vmatpush.msra.mxu0 0.0
        %4380 = vmatpush.msra.mxu0 0.0
        %4381 = vmatpush.msra.mxu0 %v4296
        %4382 = vmatpush.msra.mxu0 %v4294
        %4383 = vmatpush.msra.mxu0 %v4292
        %4384 = vmatpush.msra.mxu0 %v4290
        %4385 = vmatpush.msra.mxu0 %v4288
        %4386 = vmatpush.msra.mxu0 %v4286
        %4387 = vmatpush.msra.mxu0 %v4284
        %4388 = vmatpush.msra.mxu0 %v4282
        %4389 = vmatmul.f32.gmra.mxu0 %v4299
        %v4390 = vpop.f32.mrf.mxu0
        %v4391 = vadd.f32 %v4368, %v4390
        %4392 = vmatmul.f32.gmra.mxu0 %v4302
        %v4393 = vpop.f32.mrf.mxu0
        %v4394 = vadd.f32 %v4371, %v4393
        %4395 = vdwg.mxu0
        %4396 = vmatpush.msra.mxu0 %v4217
        %4397 = vmatpush.msra.mxu0 %v4215
        %4398 = vmatpush.msra.mxu0 %v4213
        %4399 = vmatpush.msra.mxu0 %v4211
        %4400 = vmatpush.msra.mxu0 %v4209
        %4401 = vmatpush.msra.mxu0 %v4207
        %4402 = vmatpush.msra.mxu0 %v4205
        %4403 = vmatpush.msra.mxu0 %v4203
        %4404 = vmatpush.msra.mxu0 %v4201
        %4405 = vmatpush.msra.mxu0 %v4199
        %4406 = vmatpush.msra.mxu0 %v4197
        %4407 = vmatpush.msra.mxu0 %v4195
        %4408 = vmatpush.msra.mxu0 %v4193
        %4409 = vmatpush.msra.mxu0 %v4191
        %4410 = vmatpush.msra.mxu0 %v4189
        %4411 = vmatpush.msra.mxu0 %v4187
        %4412 = vmatmul.f32.gmra.mxu0 %v4178
        %v4413 = vpop.f32.mrf.mxu0
        %v4414 = vadd.f32 0.0, %v4413
        %4415 = vmatmul.f32.gmra.mxu0 %v4182
        %v4416 = vpop.f32.mrf.mxu0
        %v4417 = vadd.f32 0.0, %v4416
        %4418 = vdwg.mxu0
        %4419 = vmatpush.msra.mxu0 %v4249
        %4420 = vmatpush.msra.mxu0 %v4247
        %4421 = vmatpush.msra.mxu0 %v4245
        %4422 = vmatpush.msra.mxu0 %v4243
        %4423 = vmatpush.msra.mxu0 %v4241
        %4424 = vmatpush.msra.mxu0 %v4239
        %4425 = vmatpush.msra.mxu0 %v4237
        %4426 = vmatpush.msra.mxu0 %v4235
        %4427 = vmatpush.msra.mxu0 %v4233
        %4428 = vmatpush.msra.mxu0 %v4231
        %4429 = vmatpush.msra.mxu0 %v4229
        %4430 = vmatpush.msra.mxu0 %v4227
        %4431 = vmatpush.msra.mxu0 %v4225
        %4432 = vmatpush.msra.mxu0 %v4223
        %4433 = vmatpush.msra.mxu0 %v4221
        %4434 = vmatpush.msra.mxu0 %v4219
        %4435 = vmatmul.f32.gmra.mxu0 %v4179
        %v4436 = vpop.f32.mrf.mxu0
        %v4437 = vadd.f32 %v4414, %v4436
        %4438 = vmatmul.f32.gmra.mxu0 %v4183
        %v4439 = vpop.f32.mrf.mxu0
        %v4440 = vadd.f32 %v4417, %v4439
        %4441 = vdwg.mxu0
        %4442 = vmatpush.msra.mxu0 %v4281
        %4443 = vmatpush.msra.mxu0 %v4279
        %4444 = vmatpush.msra.mxu0 %v4277
        %4445 = vmatpush.msra.mxu0 %v4275
        %4446 = vmatpush.msra.mxu0 %v4273
        %4447 = vmatpush.msra.mxu0 %v4271
        %4448 = vmatpush.msra.mxu0 %v4269
        %4449 = vmatpush.msra.mxu0 %v4267
        %4450 = vmatpush.msra.mxu0 %v4265
        %4451 = vmatpush.msra.mxu0 %v4263
        %4452 = vmatpush.msra.mxu0 %v4261
        %4453 = vmatpush.msra.mxu0 %v4259
        %4454 = vmatpush.msra.mxu0 %v4257
        %4455 = vmatpush.msra.mxu0 %v4255
        %4456 = vmatpush.msra.mxu0 %v4253
        %4457 = vmatpush.msra.mxu0 %v4251
        %4458 = vmatmul.f32.gmra.mxu0 %v4180
        %v4459 = vpop.f32.mrf.mxu0
        %v4460 = vadd.f32 %v4437, %v4459
        %4461 = vmatmul.f32.gmra.mxu0 %v4184
        %v4462 = vpop.f32.mrf.mxu0
        %v4463 = vadd.f32 %v4440, %v4462
        %4464 = vdwg.mxu0
        %4465 = vmatpush.msra.mxu0 0.0
        %4466 = vmatpush.msra.mxu0 0.0
        %4467 = vmatpush.msra.mxu0 0.0
        %4468 = vmatpush.msra.mxu0 0.0
        %4469 = vmatpush.msra.mxu0 0.0
        %4470 = vmatpush.msra.mxu0 0.0
        %4471 = vmatpush.msra.mxu0 0.0
        %4472 = vmatpush.msra.mxu0 0.0
        %4473 = vmatpush.msra.mxu0 %v4297
        %4474 = vmatpush.msra.mxu0 %v4295
        %4475 = vmatpush.msra.mxu0 %v4293
        %4476 = vmatpush.msra.mxu0 %v4291
        %4477 = vmatpush.msra.mxu0 %v4289
        %4478 = vmatpush.msra.mxu0 %v4287
        %4479 = vmatpush.msra.mxu0 %v4285
        %4480 = vmatpush.msra.mxu0 %v4283
        %4481 = vmatmul.f32.gmra.mxu0 %v4299
        %v4482 = vpop.f32.mrf.mxu0
        %v4483 = vadd.f32 %v4460, %v4482
        %4484 = vmatmul.f32.gmra.mxu0 %v4302
        %v4485 = vpop.f32.mrf.mxu0
        %v4486 = vadd.f32 %v4463, %v4485
        %4487 = vdwg.mxu0
        %v4488 = vld [vmem:[#allocation20] sm:$0xff]
        %v4489 = vld [vmem:[#allocation20 + $0x8] sm:$0xff]
        %v4490 = vld [vmem:[#allocation20 + $0x10] sm:$0xff]
        %v4491 = vld [vmem:[#allocation20 + $0x18] sm:$0xff]
        %v4492 = vld [vmem:[#allocation20 + $0x20] sm:$0xff]
        %v4493 = vld [vmem:[#allocation20 + $0x28] sm:$0xff]
        %v4494 = vld [vmem:[#allocation20 + $0x30] sm:$0xff]
        %v4495 = vld [vmem:[#allocation20 + $0x38] sm:$0xff]
        %v4496 = vld [vmem:[#allocation20 + $0x40] sm:$0xff]
        %v4497 = vld [vmem:[#allocation20 + $0x48] sm:$0xff]
        %v4498 = vld [vmem:[#allocation20 + $0x50] sm:$0xff]
        %v4499 = vld [vmem:[#allocation20 + $0x58] sm:$0xff]
        %v4500 = vld [vmem:[#allocation20 + $0x60] sm:$0xff]
        %v4501 = vld [vmem:[#allocation20 + $0x68] sm:$0xff]
        %v4502 = vld [vmem:[#allocation20 + $0x70] sm:$0xff]
        %v4503 = vld [vmem:[#allocation20 + $0x78] sm:$0xff]
        %v4504 = vld [vmem:[#allocation20 + $0x80] sm:$0xff]
        %v4505 = vld [vmem:[#allocation20 + $0x88] sm:$0xff]
        %v4506 = vld [vmem:[#allocation20 + $0x90] sm:$0xff]
        %v4507 = vld [vmem:[#allocation20 + $0x98] sm:$0xff]
        %v4508 = vld [vmem:[#allocation20 + $0xa0] sm:$0xff]
        %v4509 = vld [vmem:[#allocation20 + $0xa8] sm:$0xff]
        %v4510 = vld [vmem:[#allocation20 + $0xb0] sm:$0xff]
        %v4511 = vld [vmem:[#allocation20 + $0xb8] sm:$0xff]
        %v4512 = vld [vmem:[#allocation20 + $0xc0] sm:$0xff]
        %v4513 = vld [vmem:[#allocation20 + $0xc8] sm:$0xff]
        %v4514 = vld [vmem:[#allocation20 + $0xd0] sm:$0xff]
        %v4515 = vld [vmem:[#allocation20 + $0xd8] sm:$0xff]
        %v4516 = vld [vmem:[#allocation20 + $0xe0] sm:$0xff]
        %v4517 = vld [vmem:[#allocation20 + $0xe8] sm:$0xff]
        %v4518 = vld [vmem:[#allocation20 + $0xf0] sm:$0xff]
        %v4519 = vld [vmem:[#allocation20 + $0xf8] sm:$0xff]
        %v4520 = vld [vmem:[#allocation20 + $0x100] sm:$0xff]
        %v4521 = vld [vmem:[#allocation20 + $0x108] sm:$0xff]
        %v4522 = vld [vmem:[#allocation20 + $0x110] sm:$0xff]
        %v4523 = vld [vmem:[#allocation20 + $0x118] sm:$0xff]
        %v4524 = vld [vmem:[#allocation20 + $0x120] sm:$0xff]
        %v4525 = vld [vmem:[#allocation20 + $0x128] sm:$0xff]
        %v4526 = vld [vmem:[#allocation20 + $0x130] sm:$0xff]
        %v4527 = vld [vmem:[#allocation20 + $0x138] sm:$0xff]
        %v4528 = vld [vmem:[#allocation20 + $0x140] sm:$0xff]
        %v4529 = vld [vmem:[#allocation20 + $0x148] sm:$0xff]
        %v4530 = vld [vmem:[#allocation20 + $0x150] sm:$0xff]
        %v4531 = vld [vmem:[#allocation20 + $0x158] sm:$0xff]
        %v4532 = vld [vmem:[#allocation20 + $0x160] sm:$0xff]
        %v4533 = vld [vmem:[#allocation20 + $0x168] sm:$0xff]
        %v4534 = vld [vmem:[#allocation20 + $0x170] sm:$0xff]
        %v4535 = vld [vmem:[#allocation20 + $0x178] sm:$0xff]
        %v4536 = vld [vmem:[#allocation20 + $0x180] sm:$0xff]
        %v4537 = vld [vmem:[#allocation20 + $0x188] sm:$0xff]
        %v4538 = vld [vmem:[#allocation20 + $0x190] sm:$0xff]
        %v4539 = vld [vmem:[#allocation20 + $0x198] sm:$0xff]
        %v4540 = vld [vmem:[#allocation20 + $0x1a0] sm:$0xff]
        %v4541 = vld [vmem:[#allocation20 + $0x1a8] sm:$0xff]
        %v4542 = vld [vmem:[#allocation20 + $0x1b0] sm:$0xff]
        %v4543 = vld [vmem:[#allocation20 + $0x1b8] sm:$0xff]
        %v4544 = vld [vmem:[#allocation20 + $0x1c0] sm:$0xff]
        %v4545 = vld [vmem:[#allocation20 + $0x1c8] sm:$0xff]
        %v4546 = vld [vmem:[#allocation20 + $0x1d0] sm:$0xff]
        %v4547 = vld [vmem:[#allocation20 + $0x1d8] sm:$0xff]
        %v4548 = vld [vmem:[#allocation20 + $0x1e0] sm:$0xff]
        %v4549 = vld [vmem:[#allocation20 + $0x1e8] sm:$0xff]
        %v4550 = vld [vmem:[#allocation20 + $0x1f0] sm:$0xff]
        %v4551 = vld [vmem:[#allocation20 + $0x1f8] sm:$0xff]
        %v4552 = vld [vmem:[#allocation20 + $0x200] sm:$0xff]
        %v4553 = vld [vmem:[#allocation20 + $0x208] sm:$0xff]
        %v4554 = vld [vmem:[#allocation20 + $0x210] sm:$0xff]
        %v4555 = vld [vmem:[#allocation20 + $0x218] sm:$0xff]
        %v4556 = vld [vmem:[#allocation20 + $0x220] sm:$0xff]
        %v4557 = vld [vmem:[#allocation20 + $0x228] sm:$0xff]
        %v4558 = vld [vmem:[#allocation20 + $0x230] sm:$0xff]
        %v4559 = vld [vmem:[#allocation20 + $0x238] sm:$0xff]
        %v4560 = vld [vmem:[#allocation20 + $0x240] sm:$0xff]
        %v4561 = vld [vmem:[#allocation20 + $0x248] sm:$0xff]
        %v4562 = vld [vmem:[#allocation20 + $0x250] sm:$0xff]
        %v4563 = vld [vmem:[#allocation20 + $0x258] sm:$0xff]
        %v4564 = vld [vmem:[#allocation20 + $0x260] sm:$0xff]
        %v4565 = vld [vmem:[#allocation20 + $0x268] sm:$0xff]
        %v4566 = vld [vmem:[#allocation20 + $0x270] sm:$0xff]
        %v4567 = vld [vmem:[#allocation20 + $0x278] sm:$0xff]
        %v4568 = vld [vmem:[#allocation20 + $0x280] sm:$0xff]
        %v4569 = vld [vmem:[#allocation20 + $0x288] sm:$0xff]
        %v4570 = vld [vmem:[#allocation20 + $0x290] sm:$0xff]
        %v4571 = vld [vmem:[#allocation20 + $0x298] sm:$0xff]
        %v4572 = vld [vmem:[#allocation20 + $0x2a0] sm:$0xff]
        %v4573 = vld [vmem:[#allocation20 + $0x2a8] sm:$0xff]
        %v4574 = vld [vmem:[#allocation20 + $0x2b0] sm:$0xff]
        %v4575 = vld [vmem:[#allocation20 + $0x2b8] sm:$0xff]
        %v4576 = vld [vmem:[#allocation20 + $0x2c0] sm:$0xff]
        %v4577 = vld [vmem:[#allocation20 + $0x2c8] sm:$0xff]
        %v4578 = vld [vmem:[#allocation20 + $0x2d0] sm:$0xff]
        %v4579 = vld [vmem:[#allocation20 + $0x2d8] sm:$0xff]
        %v4580 = vld [vmem:[#allocation20 + $0x2e0] sm:$0xff]
        %v4581 = vld [vmem:[#allocation20 + $0x2e8] sm:$0xff]
        %v4582 = vld [vmem:[#allocation20 + $0x2f0] sm:$0xff]
        %v4583 = vld [vmem:[#allocation20 + $0x2f8] sm:$0xff]
        %v4584 = vld [vmem:[#allocation20 + $0x300] sm:$0xff]
        %v4585 = vld [vmem:[#allocation20 + $0x308] sm:$0xff]
        %v4586 = vld [vmem:[#allocation20 + $0x310] sm:$0xff]
        %v4587 = vld [vmem:[#allocation20 + $0x318] sm:$0xff]
        %v4588 = vld [vmem:[#allocation20 + $0x320] sm:$0xff]
        %v4589 = vld [vmem:[#allocation20 + $0x328] sm:$0xff]
        %v4590 = vld [vmem:[#allocation20 + $0x330] sm:$0xff]
        %v4591 = vld [vmem:[#allocation20 + $0x338] sm:$0xff]
        %v4592 = vld [vmem:[#allocation20 + $0x340] sm:$0xff]
        %v4593 = vld [vmem:[#allocation20 + $0x348] sm:$0xff]
        %v4594 = vld [vmem:[#allocation20 + $0x350] sm:$0xff]
        %v4595 = vld [vmem:[#allocation20 + $0x358] sm:$0xff]
        %v4596 = vld [vmem:[#allocation20 + $0x360] sm:$0xff]
        %v4597 = vld [vmem:[#allocation20 + $0x368] sm:$0xff]
        %v4598 = vld [vmem:[#allocation20 + $0x370] sm:$0xff]
        %v4599 = vld [vmem:[#allocation20 + $0x378] sm:$0xff]
        %4600 = vmatpush.msra.mxu0 %v4518
        %4601 = vmatpush.msra.mxu0 %v4516
        %4602 = vmatpush.msra.mxu0 %v4514
        %4603 = vmatpush.msra.mxu0 %v4512
        %4604 = vmatpush.msra.mxu0 %v4510
        %4605 = vmatpush.msra.mxu0 %v4508
        %4606 = vmatpush.msra.mxu0 %v4506
        %4607 = vmatpush.msra.mxu0 %v4504
        %4608 = vmatpush.msra.mxu0 %v4502
        %4609 = vmatpush.msra.mxu0 %v4500
        %4610 = vmatpush.msra.mxu0 %v4498
        %4611 = vmatpush.msra.mxu0 %v4496
        %4612 = vmatpush.msra.mxu0 %v4494
        %4613 = vmatpush.msra.mxu0 %v4492
        %4614 = vmatpush.msra.mxu0 %v4490
        %4615 = vmatpush.msra.mxu0 %v4488
        %4616 = vmatmul.f32.gmra.mxu0 %v4178
        %v4617 = vpop.f32.mrf.mxu0
        %v4618 = vadd.f32 0.0, %v4617
        %4619 = vmatmul.f32.gmra.mxu0 %v4182
        %v4620 = vpop.f32.mrf.mxu0
        %v4621 = vadd.f32 0.0, %v4620
        %4622 = vdwg.mxu0
        %4623 = vmatpush.msra.mxu0 %v4550
        %4624 = vmatpush.msra.mxu0 %v4548
        %4625 = vmatpush.msra.mxu0 %v4546
        %4626 = vmatpush.msra.mxu0 %v4544
        %4627 = vmatpush.msra.mxu0 %v4542
        %4628 = vmatpush.msra.mxu0 %v4540
        %4629 = vmatpush.msra.mxu0 %v4538
        %4630 = vmatpush.msra.mxu0 %v4536
        %4631 = vmatpush.msra.mxu0 %v4534
        %4632 = vmatpush.msra.mxu0 %v4532
        %4633 = vmatpush.msra.mxu0 %v4530
        %4634 = vmatpush.msra.mxu0 %v4528
        %4635 = vmatpush.msra.mxu0 %v4526
        %4636 = vmatpush.msra.mxu0 %v4524
        %4637 = vmatpush.msra.mxu0 %v4522
        %4638 = vmatpush.msra.mxu0 %v4520
        %4639 = vmatmul.f32.gmra.mxu0 %v4179
        %v4640 = vpop.f32.mrf.mxu0
        %v4641 = vadd.f32 %v4618, %v4640
        %4642 = vmatmul.f32.gmra.mxu0 %v4183
        %v4643 = vpop.f32.mrf.mxu0
        %v4644 = vadd.f32 %v4621, %v4643
        %4645 = vdwg.mxu0
        %4646 = vmatpush.msra.mxu0 %v4582
        %4647 = vmatpush.msra.mxu0 %v4580
        %4648 = vmatpush.msra.mxu0 %v4578
        %4649 = vmatpush.msra.mxu0 %v4576
        %4650 = vmatpush.msra.mxu0 %v4574
        %4651 = vmatpush.msra.mxu0 %v4572
        %4652 = vmatpush.msra.mxu0 %v4570
        %4653 = vmatpush.msra.mxu0 %v4568
        %4654 = vmatpush.msra.mxu0 %v4566
        %4655 = vmatpush.msra.mxu0 %v4564
        %4656 = vmatpush.msra.mxu0 %v4562
        %4657 = vmatpush.msra.mxu0 %v4560
        %4658 = vmatpush.msra.mxu0 %v4558
        %4659 = vmatpush.msra.mxu0 %v4556
        %4660 = vmatpush.msra.mxu0 %v4554
        %4661 = vmatpush.msra.mxu0 %v4552
        %4662 = vmatmul.f32.gmra.mxu0 %v4180
        %v4663 = vpop.f32.mrf.mxu0
        %v4664 = vadd.f32 %v4641, %v4663
        %4665 = vmatmul.f32.gmra.mxu0 %v4184
        %v4666 = vpop.f32.mrf.mxu0
        %v4667 = vadd.f32 %v4644, %v4666
        %4668 = vdwg.mxu0
        %4669 = vmatpush.msra.mxu0 0.0
        %4670 = vmatpush.msra.mxu0 0.0
        %4671 = vmatpush.msra.mxu0 0.0
        %4672 = vmatpush.msra.mxu0 0.0
        %4673 = vmatpush.msra.mxu0 0.0
        %4674 = vmatpush.msra.mxu0 0.0
        %4675 = vmatpush.msra.mxu0 0.0
        %4676 = vmatpush.msra.mxu0 0.0
        %4677 = vmatpush.msra.mxu0 %v4598
        %4678 = vmatpush.msra.mxu0 %v4596
        %4679 = vmatpush.msra.mxu0 %v4594
        %4680 = vmatpush.msra.mxu0 %v4592
        %4681 = vmatpush.msra.mxu0 %v4590
        %4682 = vmatpush.msra.mxu0 %v4588
        %4683 = vmatpush.msra.mxu0 %v4586
        %4684 = vmatpush.msra.mxu0 %v4584
        %4685 = vmatmul.f32.gmra.mxu0 %v4299
        %v4686 = vpop.f32.mrf.mxu0
        %v4687 = vadd.f32 %v4664, %v4686
        %4688 = vmatmul.f32.gmra.mxu0 %v4302
        %v4689 = vpop.f32.mrf.mxu0
        %v4690 = vadd.f32 %v4667, %v4689
        %4691 = vdwg.mxu0
        %4692 = vmatpush.msra.mxu0 %v4519
        %4693 = vmatpush.msra.mxu0 %v4517
        %4694 = vmatpush.msra.mxu0 %v4515
        %4695 = vmatpush.msra.mxu0 %v4513
        %4696 = vmatpush.msra.mxu0 %v4511
        %4697 = vmatpush.msra.mxu0 %v4509
        %4698 = vmatpush.msra.mxu0 %v4507
        %4699 = vmatpush.msra.mxu0 %v4505
        %4700 = vmatpush.msra.mxu0 %v4503
        %4701 = vmatpush.msra.mxu0 %v4501
        %4702 = vmatpush.msra.mxu0 %v4499
        %4703 = vmatpush.msra.mxu0 %v4497
        %4704 = vmatpush.msra.mxu0 %v4495
        %4705 = vmatpush.msra.mxu0 %v4493
        %4706 = vmatpush.msra.mxu0 %v4491
        %4707 = vmatpush.msra.mxu0 %v4489
        %4708 = vmatmul.f32.gmra.mxu0 %v4178
        %v4709 = vpop.f32.mrf.mxu0
        %v4710 = vadd.f32 0.0, %v4709
        %4711 = vmatmul.f32.gmra.mxu0 %v4182
        %v4712 = vpop.f32.mrf.mxu0
        %v4713 = vadd.f32 0.0, %v4712
        %4714 = vdwg.mxu0
        %4715 = vmatpush.msra.mxu0 %v4551
        %4716 = vmatpush.msra.mxu0 %v4549
        %4717 = vmatpush.msra.mxu0 %v4547
        %4718 = vmatpush.msra.mxu0 %v4545
        %4719 = vmatpush.msra.mxu0 %v4543
        %4720 = vmatpush.msra.mxu0 %v4541
        %4721 = vmatpush.msra.mxu0 %v4539
        %4722 = vmatpush.msra.mxu0 %v4537
        %4723 = vmatpush.msra.mxu0 %v4535
        %4724 = vmatpush.msra.mxu0 %v4533
        %4725 = vmatpush.msra.mxu0 %v4531
        %4726 = vmatpush.msra.mxu0 %v4529
        %4727 = vmatpush.msra.mxu0 %v4527
        %4728 = vmatpush.msra.mxu0 %v4525
        %4729 = vmatpush.msra.mxu0 %v4523
        %4730 = vmatpush.msra.mxu0 %v4521
        %4731 = vmatmul.f32.gmra.mxu0 %v4179
        %v4732 = vpop.f32.mrf.mxu0
        %v4733 = vadd.f32 %v4710, %v4732
        %4734 = vmatmul.f32.gmra.mxu0 %v4183
        %v4735 = vpop.f32.mrf.mxu0
        %v4736 = vadd.f32 %v4713, %v4735
        %4737 = vdwg.mxu0
        %4738 = vmatpush.msra.mxu0 %v4583
        %4739 = vmatpush.msra.mxu0 %v4581
        %4740 = vmatpush.msra.mxu0 %v4579
        %4741 = vmatpush.msra.mxu0 %v4577
        %4742 = vmatpush.msra.mxu0 %v4575
        %4743 = vmatpush.msra.mxu0 %v4573
        %4744 = vmatpush.msra.mxu0 %v4571
        %4745 = vmatpush.msra.mxu0 %v4569
        %4746 = vmatpush.msra.mxu0 %v4567
        %4747 = vmatpush.msra.mxu0 %v4565
        %4748 = vmatpush.msra.mxu0 %v4563
        %4749 = vmatpush.msra.mxu0 %v4561
        %4750 = vmatpush.msra.mxu0 %v4559
        %4751 = vmatpush.msra.mxu0 %v4557
        %4752 = vmatpush.msra.mxu0 %v4555
        %4753 = vmatpush.msra.mxu0 %v4553
        %4754 = vmatmul.f32.gmra.mxu0 %v4180
        %v4755 = vpop.f32.mrf.mxu0
        %v4756 = vadd.f32 %v4733, %v4755
        %4757 = vmatmul.f32.gmra.mxu0 %v4184
        %v4758 = vpop.f32.mrf.mxu0
        %v4759 = vadd.f32 %v4736, %v4758
        %4760 = vdwg.mxu0
        %4761 = vmatpush.msra.mxu0 0.0
        %4762 = vmatpush.msra.mxu0 0.0
        %4763 = vmatpush.msra.mxu0 0.0
        %4764 = vmatpush.msra.mxu0 0.0
        %4765 = vmatpush.msra.mxu0 0.0
        %4766 = vmatpush.msra.mxu0 0.0
        %4767 = vmatpush.msra.mxu0 0.0
        %4768 = vmatpush.msra.mxu0 0.0
        %4769 = vmatpush.msra.mxu0 %v4599
        %4770 = vmatpush.msra.mxu0 %v4597
        %4771 = vmatpush.msra.mxu0 %v4595
        %4772 = vmatpush.msra.mxu0 %v4593
        %4773 = vmatpush.msra.mxu0 %v4591
        %4774 = vmatpush.msra.mxu0 %v4589
        %4775 = vmatpush.msra.mxu0 %v4587
        %4776 = vmatpush.msra.mxu0 %v4585
        %4777 = vmatmul.f32.gmra.mxu0 %v4299
        %v4778 = vpop.f32.mrf.mxu0
        %v4779 = vadd.f32 %v4756, %v4778
        %4780 = vmatmul.f32.gmra.mxu0 %v4302
        %v4781 = vpop.f32.mrf.mxu0
        %v4782 = vadd.f32 %v4759, %v4781
        %4783 = vdwg.mxu0
        %v4784 = vmax.f32 %v4391, %v4687
        %v4785 = vmax.f32 %v4483, %v4779
        %v4786 = vmax.f32 %v4394, %v4690
        %v4787 = vmax.f32 %v4486, %v4782
        %v4788 = vld [vmem:[#allocation22] sm:$0x7f]
        %vm4789 = vcmask 113664
        %v4791 = vsel %vm4789, %v4788, 0
        %v4794 = vsel %vm1137, %v4786, 0
        %v4797 = vsel %vm1137, %v4787, 0
        %4799 = vmatpush.msra.mxu0 0.0
        %4800 = vmatpush.msra.mxu0 0.0
        %4801 = vmatpush.msra.mxu0 0.0
        %4802 = vmatpush.msra.mxu0 0.0
        %4803 = vmatpush.msra.mxu0 0.0
        %4804 = vmatpush.msra.mxu0 0.0
        %4805 = vmatpush.msra.mxu0 0.0
        %4806 = vmatpush.msra.mxu0 0.0
        %4807 = vmatpush.msra.mxu0 0.0
        %4808 = vmatpush.msra.mxu0 0.0
        %4809 = vmatpush.msra.mxu0 0.0
        %4810 = vmatpush.msra.mxu0 0.0
        %4811 = vmatpush.msra.mxu0 0.0
        %4812 = vmatpush.msra.mxu0 0.0
        %4813 = vmatpush.msra.mxu0 %v4794
        %4814 = vmatpush.msra.mxu0 %v4784
        %4815 = vmatmul.f32.gmra.mxu0 %v4791
        %v4816 = vpop.f32.mrf.mxu0
        %v4817 = vadd.f32 0.0, %v4816
        %4818 = vdwg.mxu0
        %4819 = vmatpush.msra.mxu0 0.0
        %4820 = vmatpush.msra.mxu0 0.0
        %4821 = vmatpush.msra.mxu0 0.0
        %4822 = vmatpush.msra.mxu0 0.0
        %4823 = vmatpush.msra.mxu0 0.0
        %4824 = vmatpush.msra.mxu0 0.0
        %4825 = vmatpush.msra.mxu0 0.0
        %4826 = vmatpush.msra.mxu0 0.0
        %4827 = vmatpush.msra.mxu0 0.0
        %4828 = vmatpush.msra.mxu0 0.0
        %4829 = vmatpush.msra.mxu0 0.0
        %4830 = vmatpush.msra.mxu0 0.0
        %4831 = vmatpush.msra.mxu0 0.0
        %4832 = vmatpush.msra.mxu0 0.0
        %4833 = vmatpush.msra.mxu0 %v4797
        %4834 = vmatpush.msra.mxu0 %v4785
        %4835 = vmatmul.f32.gmra.mxu0 %v4791
        %v4836 = vpop.f32.mrf.mxu0
        %v4837 = vadd.f32 0.0, %v4836
        %4838 = vdwg.mxu0
        %v4839 = vld [vmem:[#allocation23] sm:$0x7f]
        %v4841 = vsel %vm4789, %v4839, 0
        %4843 = vmatpush.msra.mxu0 0.0
        %4844 = vmatpush.msra.mxu0 0.0
        %4845 = vmatpush.msra.mxu0 0.0
        %4846 = vmatpush.msra.mxu0 0.0
        %4847 = vmatpush.msra.mxu0 0.0
        %4848 = vmatpush.msra.mxu0 0.0
        %4849 = vmatpush.msra.mxu0 0.0
        %4850 = vmatpush.msra.mxu0 0.0
        %4851 = vmatpush.msra.mxu0 0.0
        %4852 = vmatpush.msra.mxu0 0.0
        %4853 = vmatpush.msra.mxu0 0.0
        %4854 = vmatpush.msra.mxu0 0.0
        %4855 = vmatpush.msra.mxu0 0.0
        %4856 = vmatpush.msra.mxu0 0.0
        %4857 = vmatpush.msra.mxu0 %v4794
        %4858 = vmatpush.msra.mxu0 %v4784
        %4859 = vmatmul.f32.gmra.mxu0 %v4841
        %v4860 = vpop.f32.mrf.mxu0
        %v4861 = vadd.f32 0.0, %v4860
        %4862 = vdwg.mxu0
        %4863 = vmatpush.msra.mxu0 0.0
        %4864 = vmatpush.msra.mxu0 0.0
        %4865 = vmatpush.msra.mxu0 0.0
        %4866 = vmatpush.msra.mxu0 0.0
        %4867 = vmatpush.msra.mxu0 0.0
        %4868 = vmatpush.msra.mxu0 0.0
        %4869 = vmatpush.msra.mxu0 0.0
        %4870 = vmatpush.msra.mxu0 0.0
        %4871 = vmatpush.msra.mxu0 0.0
        %4872 = vmatpush.msra.mxu0 0.0
        %4873 = vmatpush.msra.mxu0 0.0
        %4874 = vmatpush.msra.mxu0 0.0
        %4875 = vmatpush.msra.mxu0 0.0
        %4876 = vmatpush.msra.mxu0 0.0
        %4877 = vmatpush.msra.mxu0 %v4797
        %4878 = vmatpush.msra.mxu0 %v4785
        %4879 = vmatmul.f32.gmra.mxu0 %v4841
        %v4880 = vpop.f32.mrf.mxu0
        %v4881 = vadd.f32 0.0, %v4880
        %4882 = vdwg.mxu0
        %v4883 = vmax.f32 %v4817, %v4861
        %v4884 = vmax.f32 %v4837, %v4881
        %v4885 = vld [vmem:[#allocation26] sm:$0x1]
        %v4886 = vld [vmem:[#allocation25] sm:$0xff]
        %v4887 = vld [vmem:[#allocation25 + $0x8] sm:$0xff]
        %v4888 = vld [vmem:[#allocation25 + $0x10] sm:$0xff]
        %v4889 = vld [vmem:[#allocation25 + $0x18] sm:$0xff]
        %v4890 = vld [vmem:[#allocation25 + $0x20] sm:$0xff]
        %v4891 = vld [vmem:[#allocation25 + $0x28] sm:$0xff]
        %v4892 = vld [vmem:[#allocation25 + $0x30] sm:$0xff]
        %v4893 = vld [vmem:[#allocation25 + $0x38] sm:$0xff]
        %v4894 = vld [vmem:[#allocation25 + $0x40] sm:$0xff]
        %v4895 = vld [vmem:[#allocation25 + $0x48] sm:$0xff]
        %v4896 = vld [vmem:[#allocation25 + $0x50] sm:$0xff]
        %v4897 = vld [vmem:[#allocation25 + $0x58] sm:$0xff]
        %v4898 = vld [vmem:[#allocation25 + $0x60] sm:$0xff]
        %v4899 = vld [vmem:[#allocation25 + $0x68] sm:$0xff]
        %v4900 = vld [vmem:[#allocation25 + $0x70] sm:$0xff]
        %v4901 = vld [vmem:[#allocation25 + $0x78] sm:$0xff]
        %v4902 = vld [vmem:[#allocation25 + $0x80] sm:$0xff]
        %v4903 = vld [vmem:[#allocation25 + $0x88] sm:$0xff]
        %v4904 = vld [vmem:[#allocation25 + $0x90] sm:$0xff]
        %v4905 = vld [vmem:[#allocation25 + $0x98] sm:$0xff]
        %v4906 = vld [vmem:[#allocation25 + $0xa0] sm:$0xff]
        %v4907 = vld [vmem:[#allocation25 + $0xa8] sm:$0xff]
        %v4908 = vld [vmem:[#allocation25 + $0xb0] sm:$0xff]
        %v4909 = vld [vmem:[#allocation25 + $0xb8] sm:$0xff]
        %v4910 = vld [vmem:[#allocation25 + $0xc0] sm:$0xff]
        %v4911 = vld [vmem:[#allocation25 + $0xc8] sm:$0xff]
        %v4912 = vld [vmem:[#allocation25 + $0xd0] sm:$0xff]
        %v4913 = vld [vmem:[#allocation25 + $0xd8] sm:$0xff]
        %v4915 = vsel %vm2804, %v4884, 0
        %4917 = vmatpush.msra.mxu0 %v4901
        %4918 = vmatpush.msra.mxu0 %v4900
        %4919 = vmatpush.msra.mxu0 %v4899
        %4920 = vmatpush.msra.mxu0 %v4898
        %4921 = vmatpush.msra.mxu0 %v4897
        %4922 = vmatpush.msra.mxu0 %v4896
        %4923 = vmatpush.msra.mxu0 %v4895
        %4924 = vmatpush.msra.mxu0 %v4894
        %4925 = vmatpush.msra.mxu0 %v4893
        %4926 = vmatpush.msra.mxu0 %v4892
        %4927 = vmatpush.msra.mxu0 %v4891
        %4928 = vmatpush.msra.mxu0 %v4890
        %4929 = vmatpush.msra.mxu0 %v4889
        %4930 = vmatpush.msra.mxu0 %v4888
        %4931 = vmatpush.msra.mxu0 %v4887
        %4932 = vmatpush.msra.mxu0 %v4886
        %4933 = vmatmul.f32.gmra.mxu0 %v4883
        %v4934 = vpop.f32.mrf.mxu0
        %v4935 = vadd.f32 0.0, %v4934
        %4936 = vdwg.mxu0
        %4937 = vmatpush.msra.mxu0 0.0
        %4938 = vmatpush.msra.mxu0 0.0
        %4939 = vmatpush.msra.mxu0 0.0
        %4940 = vmatpush.msra.mxu0 0.0
        %4941 = vmatpush.msra.mxu0 %v4913
        %4942 = vmatpush.msra.mxu0 %v4912
        %4943 = vmatpush.msra.mxu0 %v4911
        %4944 = vmatpush.msra.mxu0 %v4910
        %4945 = vmatpush.msra.mxu0 %v4909
        %4946 = vmatpush.msra.mxu0 %v4908
        %4947 = vmatpush.msra.mxu0 %v4907
        %4948 = vmatpush.msra.mxu0 %v4906
        %4949 = vmatpush.msra.mxu0 %v4905
        %4950 = vmatpush.msra.mxu0 %v4904
        %4951 = vmatpush.msra.mxu0 %v4903
        %4952 = vmatpush.msra.mxu0 %v4902
        %4953 = vmatmul.f32.gmra.mxu0 %v4915
        %v4954 = vpop.f32.mrf.mxu0
        %v4955 = vadd.f32 %v4935, %v4954
        %4956 = vdwg.mxu0
        %v4957 = vadd.f32 %v4885, %v4955
        %s4958 = scalar_lea.vmem [#allocation25], 224
        %v4959 = vld [vmem:[%s4958] sm:$0xff]
        %v4960 = vld [vmem:[%s4958 + $0x8] sm:$0xff]
        %v4961 = vld [vmem:[%s4958 + $0x10] sm:$0xff]
        %v4962 = vld [vmem:[%s4958 + $0x18] sm:$0xff]
        %v4963 = vld [vmem:[%s4958 + $0x20] sm:$0xff]
        %v4964 = vld [vmem:[%s4958 + $0x28] sm:$0xff]
        %v4965 = vld [vmem:[%s4958 + $0x30] sm:$0xff]
        %v4966 = vld [vmem:[%s4958 + $0x38] sm:$0xff]
        %v4967 = vld [vmem:[%s4958 + $0x40] sm:$0xff]
        %v4968 = vld [vmem:[%s4958 + $0x48] sm:$0xff]
        %v4969 = vld [vmem:[%s4958 + $0x50] sm:$0xff]
        %v4970 = vld [vmem:[%s4958 + $0x58] sm:$0xff]
        %v4971 = vld [vmem:[%s4958 + $0x60] sm:$0xff]
        %v4972 = vld [vmem:[%s4958 + $0x68] sm:$0xff]
        %v4973 = vld [vmem:[%s4958 + $0x70] sm:$0xff]
        %v4974 = vld [vmem:[%s4958 + $0x78] sm:$0xff]
        %v4975 = vld [vmem:[%s4958 + $0x80] sm:$0xff]
        %v4976 = vld [vmem:[%s4958 + $0x88] sm:$0xff]
        %v4977 = vld [vmem:[%s4958 + $0x90] sm:$0xff]
        %v4978 = vld [vmem:[%s4958 + $0x98] sm:$0xff]
        %v4979 = vld [vmem:[%s4958 + $0xa0] sm:$0xff]
        %v4980 = vld [vmem:[%s4958 + $0xa8] sm:$0xff]
        %v4981 = vld [vmem:[%s4958 + $0xb0] sm:$0xff]
        %v4982 = vld [vmem:[%s4958 + $0xb8] sm:$0xff]
        %v4983 = vld [vmem:[%s4958 + $0xc0] sm:$0xff]
        %v4984 = vld [vmem:[%s4958 + $0xc8] sm:$0xff]
        %v4985 = vld [vmem:[%s4958 + $0xd0] sm:$0xff]
        %v4986 = vld [vmem:[%s4958 + $0xd8] sm:$0xff]
        %v4988 = vrot.slane %v4883, 1
        %v4989 = vrot.slane %v4884, 1
        %v4991 = vsel %vm2804, %v4989, 0
        %4993 = vmatpush.msra.mxu0 %v4974
        %4994 = vmatpush.msra.mxu0 %v4973
        %4995 = vmatpush.msra.mxu0 %v4972
        %4996 = vmatpush.msra.mxu0 %v4971
        %4997 = vmatpush.msra.mxu0 %v4970
        %4998 = vmatpush.msra.mxu0 %v4969
        %4999 = vmatpush.msra.mxu0 %v4968
        %5000 = vmatpush.msra.mxu0 %v4967
        %5001 = vmatpush.msra.mxu0 %v4966
        %5002 = vmatpush.msra.mxu0 %v4965
        %5003 = vmatpush.msra.mxu0 %v4964
        %5004 = vmatpush.msra.mxu0 %v4963
        %5005 = vmatpush.msra.mxu0 %v4962
        %5006 = vmatpush.msra.mxu0 %v4961
        %5007 = vmatpush.msra.mxu0 %v4960
        %5008 = vmatpush.msra.mxu0 %v4959
        %5009 = vmatmul.f32.gmra.mxu0 %v4988
        %v5010 = vpop.f32.mrf.mxu0
        %v5011 = vadd.f32 0.0, %v5010
        %5012 = vdwg.mxu0
        %5013 = vmatpush.msra.mxu0 0.0
        %5014 = vmatpush.msra.mxu0 0.0
        %5015 = vmatpush.msra.mxu0 0.0
        %5016 = vmatpush.msra.mxu0 0.0
        %5017 = vmatpush.msra.mxu0 %v4986
        %5018 = vmatpush.msra.mxu0 %v4985
        %5019 = vmatpush.msra.mxu0 %v4984
        %5020 = vmatpush.msra.mxu0 %v4983
        %5021 = vmatpush.msra.mxu0 %v4982
        %5022 = vmatpush.msra.mxu0 %v4981
        %5023 = vmatpush.msra.mxu0 %v4980
        %5024 = vmatpush.msra.mxu0 %v4979
        %5025 = vmatpush.msra.mxu0 %v4978
        %5026 = vmatpush.msra.mxu0 %v4977
        %5027 = vmatpush.msra.mxu0 %v4976
        %5028 = vmatpush.msra.mxu0 %v4975
        %5029 = vmatmul.f32.gmra.mxu0 %v4991
        %v5030 = vpop.f32.mrf.mxu0
        %v5031 = vadd.f32 %v5011, %v5030
        %5032 = vdwg.mxu0
        %v5033 = vadd.f32 %v4957, %v5031
        %s5034 = scalar_lea.vmem [#allocation25], 448
        %v5035 = vld [vmem:[%s5034] sm:$0xff]
        %v5036 = vld [vmem:[%s5034 + $0x8] sm:$0xff]
        %v5037 = vld [vmem:[%s5034 + $0x10] sm:$0xff]
        %v5038 = vld [vmem:[%s5034 + $0x18] sm:$0xff]
        %v5039 = vld [vmem:[%s5034 + $0x20] sm:$0xff]
        %v5040 = vld [vmem:[%s5034 + $0x28] sm:$0xff]
        %v5041 = vld [vmem:[%s5034 + $0x30] sm:$0xff]
        %v5042 = vld [vmem:[%s5034 + $0x38] sm:$0xff]
        %v5043 = vld [vmem:[%s5034 + $0x40] sm:$0xff]
        %v5044 = vld [vmem:[%s5034 + $0x48] sm:$0xff]
        %v5045 = vld [vmem:[%s5034 + $0x50] sm:$0xff]
        %v5046 = vld [vmem:[%s5034 + $0x58] sm:$0xff]
        %v5047 = vld [vmem:[%s5034 + $0x60] sm:$0xff]
        %v5048 = vld [vmem:[%s5034 + $0x68] sm:$0xff]
        %v5049 = vld [vmem:[%s5034 + $0x70] sm:$0xff]
        %v5050 = vld [vmem:[%s5034 + $0x78] sm:$0xff]
        %v5051 = vld [vmem:[%s5034 + $0x80] sm:$0xff]
        %v5052 = vld [vmem:[%s5034 + $0x88] sm:$0xff]
        %v5053 = vld [vmem:[%s5034 + $0x90] sm:$0xff]
        %v5054 = vld [vmem:[%s5034 + $0x98] sm:$0xff]
        %v5055 = vld [vmem:[%s5034 + $0xa0] sm:$0xff]
        %v5056 = vld [vmem:[%s5034 + $0xa8] sm:$0xff]
        %v5057 = vld [vmem:[%s5034 + $0xb0] sm:$0xff]
        %v5058 = vld [vmem:[%s5034 + $0xb8] sm:$0xff]
        %v5059 = vld [vmem:[%s5034 + $0xc0] sm:$0xff]
        %v5060 = vld [vmem:[%s5034 + $0xc8] sm:$0xff]
        %v5061 = vld [vmem:[%s5034 + $0xd0] sm:$0xff]
        %v5062 = vld [vmem:[%s5034 + $0xd8] sm:$0xff]
        %v5063 = vrot.slane %v4883, 2
        %v5064 = vrot.slane %v4884, 2
        %v5066 = vsel %vm2804, %v5064, 0
        %5068 = vmatpush.msra.mxu0 %v5050
        %5069 = vmatpush.msra.mxu0 %v5049
        %5070 = vmatpush.msra.mxu0 %v5048
        %5071 = vmatpush.msra.mxu0 %v5047
        %5072 = vmatpush.msra.mxu0 %v5046
        %5073 = vmatpush.msra.mxu0 %v5045
        %5074 = vmatpush.msra.mxu0 %v5044
        %5075 = vmatpush.msra.mxu0 %v5043
        %5076 = vmatpush.msra.mxu0 %v5042
        %5077 = vmatpush.msra.mxu0 %v5041
        %5078 = vmatpush.msra.mxu0 %v5040
        %5079 = vmatpush.msra.mxu0 %v5039
        %5080 = vmatpush.msra.mxu0 %v5038
        %5081 = vmatpush.msra.mxu0 %v5037
        %5082 = vmatpush.msra.mxu0 %v5036
        %5083 = vmatpush.msra.mxu0 %v5035
        %5084 = vmatmul.f32.gmra.mxu0 %v5063
        %v5085 = vpop.f32.mrf.mxu0
        %v5086 = vadd.f32 0.0, %v5085
        %5087 = vdwg.mxu0
        %5088 = vmatpush.msra.mxu0 0.0
        %5089 = vmatpush.msra.mxu0 0.0
        %5090 = vmatpush.msra.mxu0 0.0
        %5091 = vmatpush.msra.mxu0 0.0
        %5092 = vmatpush.msra.mxu0 %v5062
        %5093 = vmatpush.msra.mxu0 %v5061
        %5094 = vmatpush.msra.mxu0 %v5060
        %5095 = vmatpush.msra.mxu0 %v5059
        %5096 = vmatpush.msra.mxu0 %v5058
        %5097 = vmatpush.msra.mxu0 %v5057
        %5098 = vmatpush.msra.mxu0 %v5056
        %5099 = vmatpush.msra.mxu0 %v5055
        %5100 = vmatpush.msra.mxu0 %v5054
        %5101 = vmatpush.msra.mxu0 %v5053
        %5102 = vmatpush.msra.mxu0 %v5052
        %5103 = vmatpush.msra.mxu0 %v5051
        %5104 = vmatmul.f32.gmra.mxu0 %v5066
        %v5105 = vpop.f32.mrf.mxu0
        %v5106 = vadd.f32 %v5086, %v5105
        %5107 = vdwg.mxu0
        %v5108 = vadd.f32 %v5033, %v5106
        %s5109 = scalar_lea.vmem [#allocation25], 672
        %v5110 = vld [vmem:[%s5109] sm:$0xff]
        %v5111 = vld [vmem:[%s5109 + $0x8] sm:$0xff]
        %v5112 = vld [vmem:[%s5109 + $0x10] sm:$0xff]
        %v5113 = vld [vmem:[%s5109 + $0x18] sm:$0xff]
        %v5114 = vld [vmem:[%s5109 + $0x20] sm:$0xff]
        %v5115 = vld [vmem:[%s5109 + $0x28] sm:$0xff]
        %v5116 = vld [vmem:[%s5109 + $0x30] sm:$0xff]
        %v5117 = vld [vmem:[%s5109 + $0x38] sm:$0xff]
        %v5118 = vld [vmem:[%s5109 + $0x40] sm:$0xff]
        %v5119 = vld [vmem:[%s5109 + $0x48] sm:$0xff]
        %v5120 = vld [vmem:[%s5109 + $0x50] sm:$0xff]
        %v5121 = vld [vmem:[%s5109 + $0x58] sm:$0xff]
        %v5122 = vld [vmem:[%s5109 + $0x60] sm:$0xff]
        %v5123 = vld [vmem:[%s5109 + $0x68] sm:$0xff]
        %v5124 = vld [vmem:[%s5109 + $0x70] sm:$0xff]
        %v5125 = vld [vmem:[%s5109 + $0x78] sm:$0xff]
        %v5126 = vld [vmem:[%s5109 + $0x80] sm:$0xff]
        %v5127 = vld [vmem:[%s5109 + $0x88] sm:$0xff]
        %v5128 = vld [vmem:[%s5109 + $0x90] sm:$0xff]
        %v5129 = vld [vmem:[%s5109 + $0x98] sm:$0xff]
        %v5130 = vld [vmem:[%s5109 + $0xa0] sm:$0xff]
        %v5131 = vld [vmem:[%s5109 + $0xa8] sm:$0xff]
        %v5132 = vld [vmem:[%s5109 + $0xb0] sm:$0xff]
        %v5133 = vld [vmem:[%s5109 + $0xb8] sm:$0xff]
        %v5134 = vld [vmem:[%s5109 + $0xc0] sm:$0xff]
        %v5135 = vld [vmem:[%s5109 + $0xc8] sm:$0xff]
        %v5136 = vld [vmem:[%s5109 + $0xd0] sm:$0xff]
        %v5137 = vld [vmem:[%s5109 + $0xd8] sm:$0xff]
        %v5138 = vrot.slane %v4883, 3
        %v5139 = vrot.slane %v4884, 3
        %v5141 = vsel %vm2804, %v5139, 0
        %5143 = vmatpush.msra.mxu0 %v5125
        %5144 = vmatpush.msra.mxu0 %v5124
        %5145 = vmatpush.msra.mxu0 %v5123
        %5146 = vmatpush.msra.mxu0 %v5122
        %5147 = vmatpush.msra.mxu0 %v5121
        %5148 = vmatpush.msra.mxu0 %v5120
        %5149 = vmatpush.msra.mxu0 %v5119
        %5150 = vmatpush.msra.mxu0 %v5118
        %5151 = vmatpush.msra.mxu0 %v5117
        %5152 = vmatpush.msra.mxu0 %v5116
        %5153 = vmatpush.msra.mxu0 %v5115
        %5154 = vmatpush.msra.mxu0 %v5114
        %5155 = vmatpush.msra.mxu0 %v5113
        %5156 = vmatpush.msra.mxu0 %v5112
        %5157 = vmatpush.msra.mxu0 %v5111
        %5158 = vmatpush.msra.mxu0 %v5110
        %5159 = vmatmul.f32.gmra.mxu0 %v5138
        %v5160 = vpop.f32.mrf.mxu0
        %v5161 = vadd.f32 0.0, %v5160
        %5162 = vdwg.mxu0
        %5163 = vmatpush.msra.mxu0 0.0
        %5164 = vmatpush.msra.mxu0 0.0
        %5165 = vmatpush.msra.mxu0 0.0
        %5166 = vmatpush.msra.mxu0 0.0
        %5167 = vmatpush.msra.mxu0 %v5137
        %5168 = vmatpush.msra.mxu0 %v5136
        %5169 = vmatpush.msra.mxu0 %v5135
        %5170 = vmatpush.msra.mxu0 %v5134
        %5171 = vmatpush.msra.mxu0 %v5133
        %5172 = vmatpush.msra.mxu0 %v5132
        %5173 = vmatpush.msra.mxu0 %v5131
        %5174 = vmatpush.msra.mxu0 %v5130
        %5175 = vmatpush.msra.mxu0 %v5129
        %5176 = vmatpush.msra.mxu0 %v5128
        %5177 = vmatpush.msra.mxu0 %v5127
        %5178 = vmatpush.msra.mxu0 %v5126
        %5179 = vmatmul.f32.gmra.mxu0 %v5141
        %v5180 = vpop.f32.mrf.mxu0
        %v5181 = vadd.f32 %v5161, %v5180
        %5182 = vdwg.mxu0
        %v5183 = vadd.f32 %v5108, %v5181
        %s5184 = scalar_lea.vmem [#allocation25], 896
        %v5185 = vld [vmem:[%s5184] sm:$0xff]
        %v5186 = vld [vmem:[%s5184 + $0x8] sm:$0xff]
        %v5187 = vld [vmem:[%s5184 + $0x10] sm:$0xff]
        %v5188 = vld [vmem:[%s5184 + $0x18] sm:$0xff]
        %v5189 = vld [vmem:[%s5184 + $0x20] sm:$0xff]
        %v5190 = vld [vmem:[%s5184 + $0x28] sm:$0xff]
        %v5191 = vld [vmem:[%s5184 + $0x30] sm:$0xff]
        %v5192 = vld [vmem:[%s5184 + $0x38] sm:$0xff]
        %v5193 = vld [vmem:[%s5184 + $0x40] sm:$0xff]
        %v5194 = vld [vmem:[%s5184 + $0x48] sm:$0xff]
        %v5195 = vld [vmem:[%s5184 + $0x50] sm:$0xff]
        %v5196 = vld [vmem:[%s5184 + $0x58] sm:$0xff]
        %v5197 = vld [vmem:[%s5184 + $0x60] sm:$0xff]
        %v5198 = vld [vmem:[%s5184 + $0x68] sm:$0xff]
        %v5199 = vld [vmem:[%s5184 + $0x70] sm:$0xff]
        %v5200 = vld [vmem:[%s5184 + $0x78] sm:$0xff]
        %v5201 = vld [vmem:[%s5184 + $0x80] sm:$0xff]
        %v5202 = vld [vmem:[%s5184 + $0x88] sm:$0xff]
        %v5203 = vld [vmem:[%s5184 + $0x90] sm:$0xff]
        %v5204 = vld [vmem:[%s5184 + $0x98] sm:$0xff]
        %v5205 = vld [vmem:[%s5184 + $0xa0] sm:$0xff]
        %v5206 = vld [vmem:[%s5184 + $0xa8] sm:$0xff]
        %v5207 = vld [vmem:[%s5184 + $0xb0] sm:$0xff]
        %v5208 = vld [vmem:[%s5184 + $0xb8] sm:$0xff]
        %v5209 = vld [vmem:[%s5184 + $0xc0] sm:$0xff]
        %v5210 = vld [vmem:[%s5184 + $0xc8] sm:$0xff]
        %v5211 = vld [vmem:[%s5184 + $0xd0] sm:$0xff]
        %v5212 = vld [vmem:[%s5184 + $0xd8] sm:$0xff]
        %v5213 = vrot.slane %v4883, 4
        %v5214 = vrot.slane %v4884, 4
        %v5216 = vsel %vm2804, %v5214, 0
        %5218 = vmatpush.msra.mxu0 %v5200
        %5219 = vmatpush.msra.mxu0 %v5199
        %5220 = vmatpush.msra.mxu0 %v5198
        %5221 = vmatpush.msra.mxu0 %v5197
        %5222 = vmatpush.msra.mxu0 %v5196
        %5223 = vmatpush.msra.mxu0 %v5195
        %5224 = vmatpush.msra.mxu0 %v5194
        %5225 = vmatpush.msra.mxu0 %v5193
        %5226 = vmatpush.msra.mxu0 %v5192
        %5227 = vmatpush.msra.mxu0 %v5191
        %5228 = vmatpush.msra.mxu0 %v5190
        %5229 = vmatpush.msra.mxu0 %v5189
        %5230 = vmatpush.msra.mxu0 %v5188
        %5231 = vmatpush.msra.mxu0 %v5187
        %5232 = vmatpush.msra.mxu0 %v5186
        %5233 = vmatpush.msra.mxu0 %v5185
        %5234 = vmatmul.f32.gmra.mxu0 %v5213
        %v5235 = vpop.f32.mrf.mxu0
        %v5236 = vadd.f32 0.0, %v5235
        %5237 = vdwg.mxu0
        %5238 = vmatpush.msra.mxu0 0.0
        %5239 = vmatpush.msra.mxu0 0.0
        %5240 = vmatpush.msra.mxu0 0.0
        %5241 = vmatpush.msra.mxu0 0.0
        %5242 = vmatpush.msra.mxu0 %v5212
        %5243 = vmatpush.msra.mxu0 %v5211
        %5244 = vmatpush.msra.mxu0 %v5210
        %5245 = vmatpush.msra.mxu0 %v5209
        %5246 = vmatpush.msra.mxu0 %v5208
        %5247 = vmatpush.msra.mxu0 %v5207
        %5248 = vmatpush.msra.mxu0 %v5206
        %5249 = vmatpush.msra.mxu0 %v5205
        %5250 = vmatpush.msra.mxu0 %v5204
        %5251 = vmatpush.msra.mxu0 %v5203
        %5252 = vmatpush.msra.mxu0 %v5202
        %5253 = vmatpush.msra.mxu0 %v5201
        %5254 = vmatmul.f32.gmra.mxu0 %v5216
        %v5255 = vpop.f32.mrf.mxu0
        %v5256 = vadd.f32 %v5236, %v5255
        %5257 = vdwg.mxu0
        %v5258 = vadd.f32 %v5183, %v5256
        %s5259 = scalar_lea.vmem [#allocation25], 1120
        %v5260 = vld [vmem:[%s5259] sm:$0xff]
        %v5261 = vld [vmem:[%s5259 + $0x8] sm:$0xff]
        %v5262 = vld [vmem:[%s5259 + $0x10] sm:$0xff]
        %v5263 = vld [vmem:[%s5259 + $0x18] sm:$0xff]
        %v5264 = vld [vmem:[%s5259 + $0x20] sm:$0xff]
        %v5265 = vld [vmem:[%s5259 + $0x28] sm:$0xff]
        %v5266 = vld [vmem:[%s5259 + $0x30] sm:$0xff]
        %v5267 = vld [vmem:[%s5259 + $0x38] sm:$0xff]
        %v5268 = vld [vmem:[%s5259 + $0x40] sm:$0xff]
        %v5269 = vld [vmem:[%s5259 + $0x48] sm:$0xff]
        %v5270 = vld [vmem:[%s5259 + $0x50] sm:$0xff]
        %v5271 = vld [vmem:[%s5259 + $0x58] sm:$0xff]
        %v5272 = vld [vmem:[%s5259 + $0x60] sm:$0xff]
        %v5273 = vld [vmem:[%s5259 + $0x68] sm:$0xff]
        %v5274 = vld [vmem:[%s5259 + $0x70] sm:$0xff]
        %v5275 = vld [vmem:[%s5259 + $0x78] sm:$0xff]
        %v5276 = vld [vmem:[%s5259 + $0x80] sm:$0xff]
        %v5277 = vld [vmem:[%s5259 + $0x88] sm:$0xff]
        %v5278 = vld [vmem:[%s5259 + $0x90] sm:$0xff]
        %v5279 = vld [vmem:[%s5259 + $0x98] sm:$0xff]
        %v5280 = vld [vmem:[%s5259 + $0xa0] sm:$0xff]
        %v5281 = vld [vmem:[%s5259 + $0xa8] sm:$0xff]
        %v5282 = vld [vmem:[%s5259 + $0xb0] sm:$0xff]
        %v5283 = vld [vmem:[%s5259 + $0xb8] sm:$0xff]
        %v5284 = vld [vmem:[%s5259 + $0xc0] sm:$0xff]
        %v5285 = vld [vmem:[%s5259 + $0xc8] sm:$0xff]
        %v5286 = vld [vmem:[%s5259 + $0xd0] sm:$0xff]
        %v5287 = vld [vmem:[%s5259 + $0xd8] sm:$0xff]
        %v5288 = vrot.slane %v4883, 5
        %v5289 = vrot.slane %v4884, 5
        %v5291 = vsel %vm2804, %v5289, 0
        %5293 = vmatpush.msra.mxu0 %v5275
        %5294 = vmatpush.msra.mxu0 %v5274
        %5295 = vmatpush.msra.mxu0 %v5273
        %5296 = vmatpush.msra.mxu0 %v5272
        %5297 = vmatpush.msra.mxu0 %v5271
        %5298 = vmatpush.msra.mxu0 %v5270
        %5299 = vmatpush.msra.mxu0 %v5269
        %5300 = vmatpush.msra.mxu0 %v5268
        %5301 = vmatpush.msra.mxu0 %v5267
        %5302 = vmatpush.msra.mxu0 %v5266
        %5303 = vmatpush.msra.mxu0 %v5265
        %5304 = vmatpush.msra.mxu0 %v5264
        %5305 = vmatpush.msra.mxu0 %v5263
        %5306 = vmatpush.msra.mxu0 %v5262
        %5307 = vmatpush.msra.mxu0 %v5261
        %5308 = vmatpush.msra.mxu0 %v5260
        %5309 = vmatmul.f32.gmra.mxu0 %v5288
        %v5310 = vpop.f32.mrf.mxu0
        %v5311 = vadd.f32 0.0, %v5310
        %5312 = vdwg.mxu0
        %5313 = vmatpush.msra.mxu0 0.0
        %5314 = vmatpush.msra.mxu0 0.0
        %5315 = vmatpush.msra.mxu0 0.0
        %5316 = vmatpush.msra.mxu0 0.0
        %5317 = vmatpush.msra.mxu0 %v5287
        %5318 = vmatpush.msra.mxu0 %v5286
        %5319 = vmatpush.msra.mxu0 %v5285
        %5320 = vmatpush.msra.mxu0 %v5284
        %5321 = vmatpush.msra.mxu0 %v5283
        %5322 = vmatpush.msra.mxu0 %v5282
        %5323 = vmatpush.msra.mxu0 %v5281
        %5324 = vmatpush.msra.mxu0 %v5280
        %5325 = vmatpush.msra.mxu0 %v5279
        %5326 = vmatpush.msra.mxu0 %v5278
        %5327 = vmatpush.msra.mxu0 %v5277
        %5328 = vmatpush.msra.mxu0 %v5276
        %5329 = vmatmul.f32.gmra.mxu0 %v5291
        %v5330 = vpop.f32.mrf.mxu0
        %v5331 = vadd.f32 %v5311, %v5330
        %5332 = vdwg.mxu0
        %v5333 = vadd.f32 %v5258, %v5331
        %s5334 = scalar_lea.vmem [#allocation25], 1344
        %v5335 = vld [vmem:[%s5334] sm:$0xff]
        %v5336 = vld [vmem:[%s5334 + $0x8] sm:$0xff]
        %v5337 = vld [vmem:[%s5334 + $0x10] sm:$0xff]
        %v5338 = vld [vmem:[%s5334 + $0x18] sm:$0xff]
        %v5339 = vld [vmem:[%s5334 + $0x20] sm:$0xff]
        %v5340 = vld [vmem:[%s5334 + $0x28] sm:$0xff]
        %v5341 = vld [vmem:[%s5334 + $0x30] sm:$0xff]
        %v5342 = vld [vmem:[%s5334 + $0x38] sm:$0xff]
        %v5343 = vld [vmem:[%s5334 + $0x40] sm:$0xff]
        %v5344 = vld [vmem:[%s5334 + $0x48] sm:$0xff]
        %v5345 = vld [vmem:[%s5334 + $0x50] sm:$0xff]
        %v5346 = vld [vmem:[%s5334 + $0x58] sm:$0xff]
        %v5347 = vld [vmem:[%s5334 + $0x60] sm:$0xff]
        %v5348 = vld [vmem:[%s5334 + $0x68] sm:$0xff]
        %v5349 = vld [vmem:[%s5334 + $0x70] sm:$0xff]
        %v5350 = vld [vmem:[%s5334 + $0x78] sm:$0xff]
        %v5351 = vld [vmem:[%s5334 + $0x80] sm:$0xff]
        %v5352 = vld [vmem:[%s5334 + $0x88] sm:$0xff]
        %v5353 = vld [vmem:[%s5334 + $0x90] sm:$0xff]
        %v5354 = vld [vmem:[%s5334 + $0x98] sm:$0xff]
        %v5355 = vld [vmem:[%s5334 + $0xa0] sm:$0xff]
        %v5356 = vld [vmem:[%s5334 + $0xa8] sm:$0xff]
        %v5357 = vld [vmem:[%s5334 + $0xb0] sm:$0xff]
        %v5358 = vld [vmem:[%s5334 + $0xb8] sm:$0xff]
        %v5359 = vld [vmem:[%s5334 + $0xc0] sm:$0xff]
        %v5360 = vld [vmem:[%s5334 + $0xc8] sm:$0xff]
        %v5361 = vld [vmem:[%s5334 + $0xd0] sm:$0xff]
        %v5362 = vld [vmem:[%s5334 + $0xd8] sm:$0xff]
        %v5363 = vrot.slane %v4883, 6
        %v5364 = vrot.slane %v4884, 6
        %v5366 = vsel %vm2804, %v5364, 0
        %5368 = vmatpush.msra.mxu0 %v5350
        %5369 = vmatpush.msra.mxu0 %v5349
        %5370 = vmatpush.msra.mxu0 %v5348
        %5371 = vmatpush.msra.mxu0 %v5347
        %5372 = vmatpush.msra.mxu0 %v5346
        %5373 = vmatpush.msra.mxu0 %v5345
        %5374 = vmatpush.msra.mxu0 %v5344
        %5375 = vmatpush.msra.mxu0 %v5343
        %5376 = vmatpush.msra.mxu0 %v5342
        %5377 = vmatpush.msra.mxu0 %v5341
        %5378 = vmatpush.msra.mxu0 %v5340
        %5379 = vmatpush.msra.mxu0 %v5339
        %5380 = vmatpush.msra.mxu0 %v5338
        %5381 = vmatpush.msra.mxu0 %v5337
        %5382 = vmatpush.msra.mxu0 %v5336
        %5383 = vmatpush.msra.mxu0 %v5335
        %5384 = vmatmul.f32.gmra.mxu0 %v5363
        %v5385 = vpop.f32.mrf.mxu0
        %v5386 = vadd.f32 0.0, %v5385
        %5387 = vdwg.mxu0
        %5388 = vmatpush.msra.mxu0 0.0
        %5389 = vmatpush.msra.mxu0 0.0
        %5390 = vmatpush.msra.mxu0 0.0
        %5391 = vmatpush.msra.mxu0 0.0
        %5392 = vmatpush.msra.mxu0 %v5362
        %5393 = vmatpush.msra.mxu0 %v5361
        %5394 = vmatpush.msra.mxu0 %v5360
        %5395 = vmatpush.msra.mxu0 %v5359
        %5396 = vmatpush.msra.mxu0 %v5358
        %5397 = vmatpush.msra.mxu0 %v5357
        %5398 = vmatpush.msra.mxu0 %v5356
        %5399 = vmatpush.msra.mxu0 %v5355
        %5400 = vmatpush.msra.mxu0 %v5354
        %5401 = vmatpush.msra.mxu0 %v5353
        %5402 = vmatpush.msra.mxu0 %v5352
        %5403 = vmatpush.msra.mxu0 %v5351
        %5404 = vmatmul.f32.gmra.mxu0 %v5366
        %v5405 = vpop.f32.mrf.mxu0
        %v5406 = vadd.f32 %v5386, %v5405
        %5407 = vdwg.mxu0
        %v5408 = vadd.f32 %v5333, %v5406
        %5409 = vst [vmem:[%s791] sm:$0x1] %v5408
        %s5410 = sand.u32 %s410, 1
        %s5411 = scalar_lea.sflag [#allocation4], %s5410
        %s5412 = sand.u32 %s410, 1
        %s5413 = scalar_lea.vmem [#allocation28], %s5412
        // Predicated region
        $region153: #{cae_forward.1} parent=87 // pred_check
          %p5414 = pneg %p420
        $region154: #{cae_forward.1} parent=87 // pred_check_branch
          %5416 = sbr.rel (%p5414) target = $region156
        $region155: #{cae_forward.1} parent=87 // pred_region
          %5418 = vsyncadd %s5411, 0
          %s5419 = scalar_lea.hbm %s17, %s40
          %s5421 = sshll.u32 %s5413, 4
          %s5422 = int_to_ptr.vmem [resolvable:$true] %s5421
          %s5423 = sshll.u32 %s5419, 4
          %s5424 = int_to_ptr.hbm [resolvable:$true] %s5423
          %5426 = dma.vmem_to_hbm [thread:$0]  %s5422, 16, %s5424, %s5411
        $region156: #{cae_forward.1} parent=87 // pred_fallthru
          _
      $region88: #{cae_forward.1} parent=5 // pred_fallthru
        _
      %p5427 = scmp.le.s32.totalorder 2, %s35
      // Predicated region
      $region157: #{cae_forward.1} parent=5 // pred_check
        %p5428 = pneg %p5427
      $region158: #{cae_forward.1} parent=5 // pred_check_branch
        %5430 = sbr.rel (%p5428) target = $region160
      $region159: #{cae_forward.1} parent=5 // pred_region
        %s5431 = ssub.s32 %s35, 2
        // Predicated region
        $region161: #{cae_forward.1} parent=159 // pred_check
          %p5432 = pneg %p426
        $region162: #{cae_forward.1} parent=159 // pred_check_branch
          %5434 = sbr.rel (%p5432) target = $region164
        $region163: #{cae_forward.1} parent=159 // pred_region
          %s5435 = sand.u32 %s411, 1
          %s5436 = scalar_lea.sflag [#allocation4], %s5435
          %s5437 = sand.u32 %s411, 1
          %s5438 = scalar_lea.vmem [#allocation28], %s5437
          %5440 = dma.done %s5436, 16
        $region164: #{cae_forward.1} parent=159 // pred_fallthru
          _
      $region160: #{cae_forward.1} parent=5 // pred_fallthru
        _
    $region6: #{cae_forward.1} parent=1 // loop_footer
      %s39 = sadd.s32 1, %s35
    $region7: #{cae_forward.1} parent=1 // loop_footer_branch
      %34 = sbr.rel target = $region3
    $region8: #{cae_forward.1} parent=1 // loop_exit
      _
    %5441 = vsyncpa [#allocation3], 1
    %s5442 = scalar_lea.sflag [#allocation3], 1
    %5443 = vsyncpa %s5442, 1
    %5444 = vsyncpa [#allocation6], 1
    %5445 = vsyncpa [#allocation9], 1
    %5446 = vsyncpa [#allocation12], 1
    %5447 = vsyncpa [#allocation15], 1
    %5448 = vsyncpa [#allocation18], 1
    %5449 = vsyncpa [#allocation21], 1
    %5450 = vsyncpa [#allocation24], 1
    %5451 = vsyncpa [#allocation27], 1
    %5452 = vsyncpa [#allocation4], 1
    %s5453 = scalar_lea.sflag [#allocation4], 1
    %5454 = vsyncpa %s5453, 1

</llo_original>
